<compile_context>
chip_gen: v5e
topology: v5e:2x2
jax: 0.10.0
libtpu: 0.0.40
codegen_flags: <defaults>
</compile_context>

<pallas_src>
import jax
import jax.numpy as jnp
from jax.experimental import pallas as pl
from jax.experimental.pallas import tpu as pltpu

# Model dimensions (from the module: fcblock1 input_dim=128 -> LSTM hidden=128;
# fcblock2 input_dim=256 -> concat of two 128-d vectors).
HID = 128   # LSTM hidden size / fcblock1 width
M2 = 256    # fcblock2 width
# Small runtime shapes for the demo.
B = 2       # batch
S = 8       # seq len
F = 4       # feature dim


# ---------------------------------------------------------------------------
# Single fused kernel: dual LSTM encoders + fcblock1 + (split-weight) fcblock2
# + final Linear + sigmoid.
# ---------------------------------------------------------------------------
def discriminator_kernel(
        xf_ref, yf_ref,                               # (S*B, F) flattened inputs
        wih_x_ref, whh_x_ref, bx_ref,                 # LSTM encoder_x params
        wih_y_ref, whh_y_ref, by_ref,                 # LSTM encoder_y params
        w1a_ref, b1a_ref, w1b_ref, b1b_ref, w1c_ref, b1c_ref,   # FC_Block 1
        w2ax_ref, w2ay_ref, b2a_ref,                  # FC_Block 2 layer 1 (split W)
        w2b_ref, b2b_ref, w2c_ref, b2c_ref,           # FC_Block 2 layers 2,3
        wfc_ref, bfc_ref,                             # final Linear(256,1)
        out_ref):                                     # (B, 1) score
    batch = out_ref.shape[0]
    seq = xf_ref.shape[0] // batch
    hid = whh_x_ref.shape[0]

    # --- Hoisted input projections: one matmul per encoder, bias folded once. ---
    gx_all = (jnp.dot(xf_ref[...], wih_x_ref[...],
                      preferred_element_type=jnp.float32) + bx_ref[...])  # (S*B, 4H)
    gy_all = (jnp.dot(yf_ref[...], wih_y_ref[...],
                      preferred_element_type=jnp.float32) + by_ref[...])  # (S*B, 4H)

    whh_x = whh_x_ref[...]
    whh_y = whh_y_ref[...]

    h_x = jnp.zeros((batch, hid), jnp.float32)
    c_x = jnp.zeros((batch, hid), jnp.float32)
    h_y = jnp.zeros((batch, hid), jnp.float32)
    c_y = jnp.zeros((batch, hid), jnp.float32)

    def lstm_cell(gates, c):
        # PyTorch nn.LSTM gate order [i, f, g, o]; slices are 128-lane aligned.
        i_g = jax.nn.sigmoid(gates[:, 0 * hid:1 * hid])
        f_g = jax.nn.sigmoid(gates[:, 1 * hid:2 * hid])
        g_g = jnp.tanh(gates[:, 2 * hid:3 * hid])
        o_g = jax.nn.sigmoid(gates[:, 3 * hid:4 * hid])
        c_new = f_g * c + i_g * g_g
        h_new = o_g * jnp.tanh(c_new)
        return h_new, c_new

    # --- Fully unrolled recurrence (seq is small & static). The two independent
    #     chains are interleaved so the MXU/EUP latency of one hides the other. ---
    for t in range(seq):
        gx_t = gx_all[t * batch:(t + 1) * batch, :]        # static slice
        gy_t = gy_all[t * batch:(t + 1) * batch, :]
        gates_x = gx_t + jnp.dot(h_x, whh_x, preferred_element_type=jnp.float32)
        gates_y = gy_t + jnp.dot(h_y, whh_y, preferred_element_type=jnp.float32)
        h_x, c_x = lstm_cell(gates_x, c_x)
        h_y, c_y = lstm_cell(gates_y, c_y)

    # --- MLP head ---
    def lin_relu(v, w_ref, b_ref):
        return jax.nn.relu(
            jnp.dot(v, w_ref[...], preferred_element_type=jnp.float32) + b_ref[...])

    # FC_Block 1 on the X-encoder output.
    x = lin_relu(h_x, w1a_ref, b1a_ref)
    x = lin_relu(x, w1b_ref, b1b_ref)
    x = lin_relu(x, w1c_ref, b1c_ref)

    # torch.concat((X, Y), dim=1) @ W2a  ==  X @ W2a[:128] + Y @ W2a[128:]
    # (split-weight matmul: avoids the lane-dim concat materialization).
    y = jax.nn.relu(
        jnp.dot(x, w2ax_ref[...], preferred_element_type=jnp.float32)
        + jnp.dot(h_y, w2ay_ref[...], preferred_element_type=jnp.float32)
        + b2a_ref[...])
    y = lin_relu(y, w2b_ref, b2b_ref)
    y = lin_relu(y, w2c_ref, b2c_ref)

    # Final Linear + sigmoid. (B,1) output lowers to a masked store; negligible
    # at this size.
    logit = jnp.dot(y, wfc_ref[...], preferred_element_type=jnp.float32) + bfc_ref[...]
    out_ref[...] = jax.nn.sigmoid(logit)


def discriminator_forward(X, Y, params):
    """X, Y: (batch, seq, feature) float32. Returns (batch, 1) scores in (0,1)."""
    bsz, seq, feat = X.shape
    # (B,S,F) -> (S,B,F) -> (S*B,F): row t*B+b corresponds to timestep t, batch b.
    xf = jnp.transpose(X, (1, 0, 2)).reshape(seq * bsz, feat)
    yf = jnp.transpose(Y, (1, 0, 2)).reshape(seq * bsz, feat)

    wih_x, whh_x, b_x = params['lstm_x']
    wih_y, whh_y, b_y = params['lstm_y']
    # Split fcblock2's first weight at trace time (replaces the concat).
    w2a_x = params['w2a'][:HID, :]
    w2a_y = params['w2a'][HID:, :]

    args = (xf, yf,
            wih_x, whh_x, b_x,
            wih_y, whh_y, b_y,
            params['w1a'], params['b1a'], params['w1b'], params['b1b'],
            params['w1c'], params['b1c'],
            w2a_x, w2a_y, params['b2a'],
            params['w2b'], params['b2b'], params['w2c'], params['b2c'],
            params['wfc'], params['bfc'])

    vmem = pl.BlockSpec(memory_space=pltpu.MemorySpace.VMEM)
    return pl.pallas_call(
        discriminator_kernel,
        out_shape=jax.ShapeDtypeStruct((bsz, 1), jnp.float32),
        in_specs=[vmem] * len(args),
        out_specs=vmem,
    )(*args)


# ---------------------------------------------------------------------------
# Parameter construction (deterministic, synthetic).
# ---------------------------------------------------------------------------
def init_linear(key, din, dout, scale=0.05):
    kw, kb = jax.random.split(key)
    w = scale * jax.random.normal(kw, (din, dout), jnp.float32)
    b = scale * jax.random.normal(kb, (1, dout), jnp.float32)
    return w, b


def init_lstm(key, feat, hid, scale=0.05):
    k1, k2, k3 = jax.random.split(key, 3)
    wih = scale * jax.random.normal(k1, (feat, 4 * hid), jnp.float32)
    whh = scale * jax.random.normal(k2, (hid, 4 * hid), jnp.float32)
    # combined bias (bias_ih + bias_hh in PyTorch) — equivalent for forward pass
    b = scale * jax.random.normal(k3, (1, 4 * hid), jnp.float32)
    return wih, whh, b


def make_params(key):
    keys = jax.random.split(key, 9)
    p = {}
    p['lstm_x'] = init_lstm(keys[0], F, HID)
    p['lstm_y'] = init_lstm(keys[1], F, HID)
    p['w1a'], p['b1a'] = init_linear(keys[2], HID, HID)
    p['w1b'], p['b1b'] = init_linear(keys[3], HID, HID)
    p['w1c'], p['b1c'] = init_linear(keys[4], HID, HID)
    p['w2a'], p['b2a'] = init_linear(keys[5], 2 * HID, M2)
    p['w2b'], p['b2b'] = init_linear(keys[6], M2, M2)
    p['w2c'], p['b2c'] = init_linear(keys[7], M2, M2)
    p['wfc'], p['bfc'] = init_linear(keys[8], M2, 1)
    return p


if __name__ == "__main__":
    key = jax.random.PRNGKey(0)
    k_params, k_x, k_y = jax.random.split(key, 3)
    params = make_params(k_params)

    X = jax.random.normal(k_x, (B, S, F), jnp.float32)
    Y = jax.random.normal(k_y, (B, S, F), jnp.float32)

    score = discriminator_forward(X, Y, params)
    score = jax.block_until_ready(score)

    assert score.shape == (B, 1)
    assert bool(jnp.all((score > 0.0) & (score < 1.0)))
    print("KERNEL_OK")
</pallas_src>

<mosaic_0001>
module attributes {stable_mosaic.version = 11 : i64} {
  func.func @discriminator_kernel(%arg0: memref<16x4xf32, #tpu.memory_space<vmem>>, %arg1: memref<16x4xf32, #tpu.memory_space<vmem>>, %arg2: memref<4x512xf32, #tpu.memory_space<vmem>>, %arg3: memref<128x512xf32, #tpu.memory_space<vmem>>, %arg4: memref<1x512xf32, #tpu.memory_space<vmem>>, %arg5: memref<4x512xf32, #tpu.memory_space<vmem>>, %arg6: memref<128x512xf32, #tpu.memory_space<vmem>>, %arg7: memref<1x512xf32, #tpu.memory_space<vmem>>, %arg8: memref<128x128xf32, #tpu.memory_space<vmem>>, %arg9: memref<1x128xf32, #tpu.memory_space<vmem>>, %arg10: memref<128x128xf32, #tpu.memory_space<vmem>>, %arg11: memref<1x128xf32, #tpu.memory_space<vmem>>, %arg12: memref<128x128xf32, #tpu.memory_space<vmem>>, %arg13: memref<1x128xf32, #tpu.memory_space<vmem>>, %arg14: memref<128x256xf32, #tpu.memory_space<vmem>>, %arg15: memref<128x256xf32, #tpu.memory_space<vmem>>, %arg16: memref<1x256xf32, #tpu.memory_space<vmem>>, %arg17: memref<256x256xf32, #tpu.memory_space<vmem>>, %arg18: memref<1x256xf32, #tpu.memory_space<vmem>>, %arg19: memref<256x256xf32, #tpu.memory_space<vmem>>, %arg20: memref<1x256xf32, #tpu.memory_space<vmem>>, %arg21: memref<256x1xf32, #tpu.memory_space<vmem>>, %arg22: memref<1x1xf32, #tpu.memory_space<vmem>>, %arg23: memref<2x1xf32, #tpu.memory_space<vmem>>) attributes {dimension_semantics = [], scalar_prefetch = 0 : i64, scratch_operands = 0 : i64, tpu.core_type = #tpu.core_type<tc>} {
    %c0 = arith.constant 0 : index
    %c0_0 = arith.constant 0 : index
    %0 = vector.load %arg0[%c0, %c0_0] : memref<16x4xf32, #tpu.memory_space<vmem>>, vector<16x4xf32>
    %c0_1 = arith.constant 0 : index
    %c0_2 = arith.constant 0 : index
    %1 = vector.load %arg2[%c0_1, %c0_2] : memref<4x512xf32, #tpu.memory_space<vmem>>, vector<4x512xf32>
    %cst = arith.constant dense<0.000000e+00> : vector<16x512xf32>
    %2 = tpu.matmul %0, %1, %cst {dimension_numbers = #tpu.dot_dimension_numbers<[1], [0], [0], [1], [0, 0, 1, 1], [], []>} : vector<16x4xf32>, vector<4x512xf32>, vector<16x512xf32> -> vector<16x512xf32>
    %c0_3 = arith.constant 0 : index
    %c0_4 = arith.constant 0 : index
    %3 = vector.load %arg4[%c0_3, %c0_4] : memref<1x512xf32, #tpu.memory_space<vmem>>, vector<1x512xf32>
    %4 = vector.broadcast %3 : vector<1x512xf32> to vector<16x512xf32>
    %5 = arith.addf %2, %4 : vector<16x512xf32>
    %c0_5 = arith.constant 0 : index
    %c0_6 = arith.constant 0 : index
    %6 = vector.load %arg1[%c0_5, %c0_6] : memref<16x4xf32, #tpu.memory_space<vmem>>, vector<16x4xf32>
    %c0_7 = arith.constant 0 : index
    %c0_8 = arith.constant 0 : index
    %7 = vector.load %arg5[%c0_7, %c0_8] : memref<4x512xf32, #tpu.memory_space<vmem>>, vector<4x512xf32>
    %cst_9 = arith.constant dense<0.000000e+00> : vector<16x512xf32>
    %8 = tpu.matmul %6, %7, %cst_9 {dimension_numbers = #tpu.dot_dimension_numbers<[1], [0], [0], [1], [0, 0, 1, 1], [], []>} : vector<16x4xf32>, vector<4x512xf32>, vector<16x512xf32> -> vector<16x512xf32>
    %c0_10 = arith.constant 0 : index
    %c0_11 = arith.constant 0 : index
    %9 = vector.load %arg7[%c0_10, %c0_11] : memref<1x512xf32, #tpu.memory_space<vmem>>, vector<1x512xf32>
    %10 = vector.broadcast %9 : vector<1x512xf32> to vector<16x512xf32>
    %11 = arith.addf %8, %10 : vector<16x512xf32>
    %c0_12 = arith.constant 0 : index
    %c0_13 = arith.constant 0 : index
    %12 = vector.load %arg3[%c0_12, %c0_13] : memref<128x512xf32, #tpu.memory_space<vmem>>, vector<128x512xf32>
    %c0_14 = arith.constant 0 : index
    %c0_15 = arith.constant 0 : index
    %13 = vector.load %arg6[%c0_14, %c0_15] : memref<128x512xf32, #tpu.memory_space<vmem>>, vector<128x512xf32>
    %cst_16 = arith.constant 0.000000e+00 : f32
    %14 = vector.broadcast %cst_16 : f32 to vector<2x128xf32>
    %cst_17 = arith.constant 0.000000e+00 : f32
    %15 = vector.broadcast %cst_17 : f32 to vector<2x128xf32>
    %cst_18 = arith.constant 0.000000e+00 : f32
    %16 = vector.broadcast %cst_18 : f32 to vector<2x128xf32>
    %cst_19 = arith.constant 0.000000e+00 : f32
    %17 = vector.broadcast %cst_19 : f32 to vector<2x128xf32>
    %18 = vector.extract_strided_slice %5 {offsets = [0, 0], sizes = [2, 512], strides = [1, 1]} : vector<16x512xf32> to vector<2x512xf32>
    %19 = vector.extract_strided_slice %11 {offsets = [0, 0], sizes = [2, 512], strides = [1, 1]} : vector<16x512xf32> to vector<2x512xf32>
    %cst_20 = arith.constant dense<0.000000e+00> : vector<2x512xf32>
    %20 = tpu.matmul %14, %12, %cst_20 {dimension_numbers = #tpu.dot_dimension_numbers<[1], [0], [0], [1], [0, 0, 1, 1], [], []>} : vector<2x128xf32>, vector<128x512xf32>, vector<2x512xf32> -> vector<2x512xf32>
    %21 = arith.addf %18, %20 : vector<2x512xf32>
    %cst_21 = arith.constant dense<0.000000e+00> : vector<2x512xf32>
    %22 = tpu.matmul %16, %13, %cst_21 {dimension_numbers = #tpu.dot_dimension_numbers<[1], [0], [0], [1], [0, 0, 1, 1], [], []>} : vector<2x128xf32>, vector<128x512xf32>, vector<2x512xf32> -> vector<2x512xf32>
    %23 = arith.addf %19, %22 : vector<2x512xf32>
    %24 = vector.extract_strided_slice %21 {offsets = [0, 0], sizes = [2, 128], strides = [1, 1]} : vector<2x512xf32> to vector<2x128xf32>
    %25 = arith.negf %24 : vector<2x128xf32>
    %26 = math.exp %25 : vector<2x128xf32>
    %cst_22 = arith.constant 1.000000e+00 : f32
    %27 = vector.broadcast %cst_22 : f32 to vector<2x128xf32>
    %28 = arith.addf %27, %26 : vector<2x128xf32>
    %29 = arith.divf %27, %28 : vector<2x128xf32>
    %30 = vector.extract_strided_slice %21 {offsets = [0, 128], sizes = [2, 128], strides = [1, 1]} : vector<2x512xf32> to vector<2x128xf32>
    %31 = arith.negf %30 : vector<2x128xf32>
    %32 = math.exp %31 : vector<2x128xf32>
    %cst_23 = arith.constant 1.000000e+00 : f32
    %33 = vector.broadcast %cst_23 : f32 to vector<2x128xf32>
    %34 = arith.addf %33, %32 : vector<2x128xf32>
    %35 = arith.divf %33, %34 : vector<2x128xf32>
    %36 = vector.extract_strided_slice %21 {offsets = [0, 256], sizes = [2, 128], strides = [1, 1]} : vector<2x512xf32> to vector<2x128xf32>
    %37 = math.tanh %36 : vector<2x128xf32>
    %38 = vector.extract_strided_slice %21 {offsets = [0, 384], sizes = [2, 128], strides = [1, 1]} : vector<2x512xf32> to vector<2x128xf32>
    %39 = arith.negf %38 : vector<2x128xf32>
    %40 = math.exp %39 : vector<2x128xf32>
    %cst_24 = arith.constant 1.000000e+00 : f32
    %41 = vector.broadcast %cst_24 : f32 to vector<2x128xf32>
    %42 = arith.addf %41, %40 : vector<2x128xf32>
    %43 = arith.divf %41, %42 : vector<2x128xf32>
    %44 = arith.mulf %35, %15 : vector<2x128xf32>
    %45 = arith.mulf %29, %37 : vector<2x128xf32>
    %46 = arith.addf %44, %45 : vector<2x128xf32>
    %47 = math.tanh %46 : vector<2x128xf32>
    %48 = arith.mulf %43, %47 : vector<2x128xf32>
    %49 = vector.extract_strided_slice %23 {offsets = [0, 0], sizes = [2, 128], strides = [1, 1]} : vector<2x512xf32> to vector<2x128xf32>
    %50 = arith.negf %49 : vector<2x128xf32>
    %51 = math.exp %50 : vector<2x128xf32>
    %cst_25 = arith.constant 1.000000e+00 : f32
    %52 = vector.broadcast %cst_25 : f32 to vector<2x128xf32>
    %53 = arith.addf %52, %51 : vector<2x128xf32>
    %54 = arith.divf %52, %53 : vector<2x128xf32>
    %55 = vector.extract_strided_slice %23 {offsets = [0, 128], sizes = [2, 128], strides = [1, 1]} : vector<2x512xf32> to vector<2x128xf32>
    %56 = arith.negf %55 : vector<2x128xf32>
    %57 = math.exp %56 : vector<2x128xf32>
    %cst_26 = arith.constant 1.000000e+00 : f32
    %58 = vector.broadcast %cst_26 : f32 to vector<2x128xf32>
    %59 = arith.addf %58, %57 : vector<2x128xf32>
    %60 = arith.divf %58, %59 : vector<2x128xf32>
    %61 = vector.extract_strided_slice %23 {offsets = [0, 256], sizes = [2, 128], strides = [1, 1]} : vector<2x512xf32> to vector<2x128xf32>
    %62 = math.tanh %61 : vector<2x128xf32>
    %63 = vector.extract_strided_slice %23 {offsets = [0, 384], sizes = [2, 128], strides = [1, 1]} : vector<2x512xf32> to vector<2x128xf32>
    %64 = arith.negf %63 : vector<2x128xf32>
    %65 = math.exp %64 : vector<2x128xf32>
    %cst_27 = arith.constant 1.000000e+00 : f32
    %66 = vector.broadcast %cst_27 : f32 to vector<2x128xf32>
    %67 = arith.addf %66, %65 : vector<2x128xf32>
    %68 = arith.divf %66, %67 : vector<2x128xf32>
    %69 = arith.mulf %60, %17 : vector<2x128xf32>
    %70 = arith.mulf %54, %62 : vector<2x128xf32>
    %71 = arith.addf %69, %70 : vector<2x128xf32>
    %72 = math.tanh %71 : vector<2x128xf32>
    %73 = arith.mulf %68, %72 : vector<2x128xf32>
    %74 = vector.extract_strided_slice %5 {offsets = [2, 0], sizes = [2, 512], strides = [1, 1]} : vector<16x512xf32> to vector<2x512xf32>
    %75 = vector.extract_strided_slice %11 {offsets = [2, 0], sizes = [2, 512], strides = [1, 1]} : vector<16x512xf32> to vector<2x512xf32>
    %cst_28 = arith.constant dense<0.000000e+00> : vector<2x512xf32>
    %76 = tpu.matmul %48, %12, %cst_28 {dimension_numbers = #tpu.dot_dimension_numbers<[1], [0], [0], [1], [0, 0, 1, 1], [], []>} : vector<2x128xf32>, vector<128x512xf32>, vector<2x512xf32> -> vector<2x512xf32>
    %77 = arith.addf %74, %76 : vector<2x512xf32>
    %cst_29 = arith.constant dense<0.000000e+00> : vector<2x512xf32>
    %78 = tpu.matmul %73, %13, %cst_29 {dimension_numbers = #tpu.dot_dimension_numbers<[1], [0], [0], [1], [0, 0, 1, 1], [], []>} : vector<2x128xf32>, vector<128x512xf32>, vector<2x512xf32> -> vector<2x512xf32>
    %79 = arith.addf %75, %78 : vector<2x512xf32>
    %80 = vector.extract_strided_slice %77 {offsets = [0, 0], sizes = [2, 128], strides = [1, 1]} : vector<2x512xf32> to vector<2x128xf32>
    %81 = arith.negf %80 : vector<2x128xf32>
    %82 = math.exp %81 : vector<2x128xf32>
    %cst_30 = arith.constant 1.000000e+00 : f32
    %83 = vector.broadcast %cst_30 : f32 to vector<2x128xf32>
    %84 = arith.addf %83, %82 : vector<2x128xf32>
    %85 = arith.divf %83, %84 : vector<2x128xf32>
    %86 = vector.extract_strided_slice %77 {offsets = [0, 128], sizes = [2, 128], strides = [1, 1]} : vector<2x512xf32> to vector<2x128xf32>
    %87 = arith.negf %86 : vector<2x128xf32>
    %88 = math.exp %87 : vector<2x128xf32>
    %cst_31 = arith.constant 1.000000e+00 : f32
    %89 = vector.broadcast %cst_31 : f32 to vector<2x128xf32>
    %90 = arith.addf %89, %88 : vector<2x128xf32>
    %91 = arith.divf %89, %90 : vector<2x128xf32>
    %92 = vector.extract_strided_slice %77 {offsets = [0, 256], sizes = [2, 128], strides = [1, 1]} : vector<2x512xf32> to vector<2x128xf32>
    %93 = math.tanh %92 : vector<2x128xf32>
    %94 = vector.extract_strided_slice %77 {offsets = [0, 384], sizes = [2, 128], strides = [1, 1]} : vector<2x512xf32> to vector<2x128xf32>
    %95 = arith.negf %94 : vector<2x128xf32>
    %96 = math.exp %95 : vector<2x128xf32>
    %cst_32 = arith.constant 1.000000e+00 : f32
    %97 = vector.broadcast %cst_32 : f32 to vector<2x128xf32>
    %98 = arith.addf %97, %96 : vector<2x128xf32>
    %99 = arith.divf %97, %98 : vector<2x128xf32>
    %100 = arith.mulf %91, %46 : vector<2x128xf32>
    %101 = arith.mulf %85, %93 : vector<2x128xf32>
    %102 = arith.addf %100, %101 : vector<2x128xf32>
    %103 = math.tanh %102 : vector<2x128xf32>
    %104 = arith.mulf %99, %103 : vector<2x128xf32>
    %105 = vector.extract_strided_slice %79 {offsets = [0, 0], sizes = [2, 128], strides = [1, 1]} : vector<2x512xf32> to vector<2x128xf32>
    %106 = arith.negf %105 : vector<2x128xf32>
    %107 = math.exp %106 : vector<2x128xf32>
    %cst_33 = arith.constant 1.000000e+00 : f32
    %108 = vector.broadcast %cst_33 : f32 to vector<2x128xf32>
    %109 = arith.addf %108, %107 : vector<2x128xf32>
    %110 = arith.divf %108, %109 : vector<2x128xf32>
    %111 = vector.extract_strided_slice %79 {offsets = [0, 128], sizes = [2, 128], strides = [1, 1]} : vector<2x512xf32> to vector<2x128xf32>
    %112 = arith.negf %111 : vector<2x128xf32>
    %113 = math.exp %112 : vector<2x128xf32>
    %cst_34 = arith.constant 1.000000e+00 : f32
    %114 = vector.broadcast %cst_34 : f32 to vector<2x128xf32>
    %115 = arith.addf %114, %113 : vector<2x128xf32>
    %116 = arith.divf %114, %115 : vector<2x128xf32>
    %117 = vector.extract_strided_slice %79 {offsets = [0, 256], sizes = [2, 128], strides = [1, 1]} : vector<2x512xf32> to vector<2x128xf32>
    %118 = math.tanh %117 : vector<2x128xf32>
    %119 = vector.extract_strided_slice %79 {offsets = [0, 384], sizes = [2, 128], strides = [1, 1]} : vector<2x512xf32> to vector<2x128xf32>
    %120 = arith.negf %119 : vector<2x128xf32>
    %121 = math.exp %120 : vector<2x128xf32>
    %cst_35 = arith.constant 1.000000e+00 : f32
    %122 = vector.broadcast %cst_35 : f32 to vector<2x128xf32>
    %123 = arith.addf %122, %121 : vector<2x128xf32>
    %124 = arith.divf %122, %123 : vector<2x128xf32>
    %125 = arith.mulf %116, %71 : vector<2x128xf32>
    %126 = arith.mulf %110, %118 : vector<2x128xf32>
    %127 = arith.addf %125, %126 : vector<2x128xf32>
    %128 = math.tanh %127 : vector<2x128xf32>
    %129 = arith.mulf %124, %128 : vector<2x128xf32>
    %130 = vector.extract_strided_slice %5 {offsets = [4, 0], sizes = [2, 512], strides = [1, 1]} : vector<16x512xf32> to vector<2x512xf32>
    %131 = vector.extract_strided_slice %11 {offsets = [4, 0], sizes = [2, 512], strides = [1, 1]} : vector<16x512xf32> to vector<2x512xf32>
    %cst_36 = arith.constant dense<0.000000e+00> : vector<2x512xf32>
    %132 = tpu.matmul %104, %12, %cst_36 {dimension_numbers = #tpu.dot_dimension_numbers<[1], [0], [0], [1], [0, 0, 1, 1], [], []>} : vector<2x128xf32>, vector<128x512xf32>, vector<2x512xf32> -> vector<2x512xf32>
    %133 = arith.addf %130, %132 : vector<2x512xf32>
    %cst_37 = arith.constant dense<0.000000e+00> : vector<2x512xf32>
    %134 = tpu.matmul %129, %13, %cst_37 {dimension_numbers = #tpu.dot_dimension_numbers<[1], [0], [0], [1], [0, 0, 1, 1], [], []>} : vector<2x128xf32>, vector<128x512xf32>, vector<2x512xf32> -> vector<2x512xf32>
    %135 = arith.addf %131, %134 : vector<2x512xf32>
    %136 = vector.extract_strided_slice %133 {offsets = [0, 0], sizes = [2, 128], strides = [1, 1]} : vector<2x512xf32> to vector<2x128xf32>
    %137 = arith.negf %136 : vector<2x128xf32>
    %138 = math.exp %137 : vector<2x128xf32>
    %cst_38 = arith.constant 1.000000e+00 : f32
    %139 = vector.broadcast %cst_38 : f32 to vector<2x128xf32>
    %140 = arith.addf %139, %138 : vector<2x128xf32>
    %141 = arith.divf %139, %140 : vector<2x128xf32>
    %142 = vector.extract_strided_slice %133 {offsets = [0, 128], sizes = [2, 128], strides = [1, 1]} : vector<2x512xf32> to vector<2x128xf32>
    %143 = arith.negf %142 : vector<2x128xf32>
    %144 = math.exp %143 : vector<2x128xf32>
    %cst_39 = arith.constant 1.000000e+00 : f32
    %145 = vector.broadcast %cst_39 : f32 to vector<2x128xf32>
    %146 = arith.addf %145, %144 : vector<2x128xf32>
    %147 = arith.divf %145, %146 : vector<2x128xf32>
    %148 = vector.extract_strided_slice %133 {offsets = [0, 256], sizes = [2, 128], strides = [1, 1]} : vector<2x512xf32> to vector<2x128xf32>
    %149 = math.tanh %148 : vector<2x128xf32>
    %150 = vector.extract_strided_slice %133 {offsets = [0, 384], sizes = [2, 128], strides = [1, 1]} : vector<2x512xf32> to vector<2x128xf32>
    %151 = arith.negf %150 : vector<2x128xf32>
    %152 = math.exp %151 : vector<2x128xf32>
    %cst_40 = arith.constant 1.000000e+00 : f32
    %153 = vector.broadcast %cst_40 : f32 to vector<2x128xf32>
    %154 = arith.addf %153, %152 : vector<2x128xf32>
    %155 = arith.divf %153, %154 : vector<2x128xf32>
    %156 = arith.mulf %147, %102 : vector<2x128xf32>
    %157 = arith.mulf %141, %149 : vector<2x128xf32>
    %158 = arith.addf %156, %157 : vector<2x128xf32>
    %159 = math.tanh %158 : vector<2x128xf32>
    %160 = arith.mulf %155, %159 : vector<2x128xf32>
    %161 = vector.extract_strided_slice %135 {offsets = [0, 0], sizes = [2, 128], strides = [1, 1]} : vector<2x512xf32> to vector<2x128xf32>
    %162 = arith.negf %161 : vector<2x128xf32>
    %163 = math.exp %162 : vector<2x128xf32>
    %cst_41 = arith.constant 1.000000e+00 : f32
    %164 = vector.broadcast %cst_41 : f32 to vector<2x128xf32>
    %165 = arith.addf %164, %163 : vector<2x128xf32>
    %166 = arith.divf %164, %165 : vector<2x128xf32>
    %167 = vector.extract_strided_slice %135 {offsets = [0, 128], sizes = [2, 128], strides = [1, 1]} : vector<2x512xf32> to vector<2x128xf32>
    %168 = arith.negf %167 : vector<2x128xf32>
    %169 = math.exp %168 : vector<2x128xf32>
    %cst_42 = arith.constant 1.000000e+00 : f32
    %170 = vector.broadcast %cst_42 : f32 to vector<2x128xf32>
    %171 = arith.addf %170, %169 : vector<2x128xf32>
    %172 = arith.divf %170, %171 : vector<2x128xf32>
    %173 = vector.extract_strided_slice %135 {offsets = [0, 256], sizes = [2, 128], strides = [1, 1]} : vector<2x512xf32> to vector<2x128xf32>
    %174 = math.tanh %173 : vector<2x128xf32>
    %175 = vector.extract_strided_slice %135 {offsets = [0, 384], sizes = [2, 128], strides = [1, 1]} : vector<2x512xf32> to vector<2x128xf32>
    %176 = arith.negf %175 : vector<2x128xf32>
    %177 = math.exp %176 : vector<2x128xf32>
    %cst_43 = arith.constant 1.000000e+00 : f32
    %178 = vector.broadcast %cst_43 : f32 to vector<2x128xf32>
    %179 = arith.addf %178, %177 : vector<2x128xf32>
    %180 = arith.divf %178, %179 : vector<2x128xf32>
    %181 = arith.mulf %172, %127 : vector<2x128xf32>
    %182 = arith.mulf %166, %174 : vector<2x128xf32>
    %183 = arith.addf %181, %182 : vector<2x128xf32>
    %184 = math.tanh %183 : vector<2x128xf32>
    %185 = arith.mulf %180, %184 : vector<2x128xf32>
    %186 = vector.extract_strided_slice %5 {offsets = [6, 0], sizes = [2, 512], strides = [1, 1]} : vector<16x512xf32> to vector<2x512xf32>
    %187 = vector.extract_strided_slice %11 {offsets = [6, 0], sizes = [2, 512], strides = [1, 1]} : vector<16x512xf32> to vector<2x512xf32>
    %cst_44 = arith.constant dense<0.000000e+00> : vector<2x512xf32>
    %188 = tpu.matmul %160, %12, %cst_44 {dimension_numbers = #tpu.dot_dimension_numbers<[1], [0], [0], [1], [0, 0, 1, 1], [], []>} : vector<2x128xf32>, vector<128x512xf32>, vector<2x512xf32> -> vector<2x512xf32>
    %189 = arith.addf %186, %188 : vector<2x512xf32>
    %cst_45 = arith.constant dense<0.000000e+00> : vector<2x512xf32>
    %190 = tpu.matmul %185, %13, %cst_45 {dimension_numbers = #tpu.dot_dimension_numbers<[1], [0], [0], [1], [0, 0, 1, 1], [], []>} : vector<2x128xf32>, vector<128x512xf32>, vector<2x512xf32> -> vector<2x512xf32>
    %191 = arith.addf %187, %190 : vector<2x512xf32>
    %192 = vector.extract_strided_slice %189 {offsets = [0, 0], sizes = [2, 128], strides = [1, 1]} : vector<2x512xf32> to vector<2x128xf32>
    %193 = arith.negf %192 : vector<2x128xf32>
    %194 = math.exp %193 : vector<2x128xf32>
    %cst_46 = arith.constant 1.000000e+00 : f32
    %195 = vector.broadcast %cst_46 : f32 to vector<2x128xf32>
    %196 = arith.addf %195, %194 : vector<2x128xf32>
    %197 = arith.divf %195, %196 : vector<2x128xf32>
    %198 = vector.extract_strided_slice %189 {offsets = [0, 128], sizes = [2, 128], strides = [1, 1]} : vector<2x512xf32> to vector<2x128xf32>
    %199 = arith.negf %198 : vector<2x128xf32>
    %200 = math.exp %199 : vector<2x128xf32>
    %cst_47 = arith.constant 1.000000e+00 : f32
    %201 = vector.broadcast %cst_47 : f32 to vector<2x128xf32>
    %202 = arith.addf %201, %200 : vector<2x128xf32>
    %203 = arith.divf %201, %202 : vector<2x128xf32>
    %204 = vector.extract_strided_slice %189 {offsets = [0, 256], sizes = [2, 128], strides = [1, 1]} : vector<2x512xf32> to vector<2x128xf32>
    %205 = math.tanh %204 : vector<2x128xf32>
    %206 = vector.extract_strided_slice %189 {offsets = [0, 384], sizes = [2, 128], strides = [1, 1]} : vector<2x512xf32> to vector<2x128xf32>
    %207 = arith.negf %206 : vector<2x128xf32>
    %208 = math.exp %207 : vector<2x128xf32>
    %cst_48 = arith.constant 1.000000e+00 : f32
    %209 = vector.broadcast %cst_48 : f32 to vector<2x128xf32>
    %210 = arith.addf %209, %208 : vector<2x128xf32>
    %211 = arith.divf %209, %210 : vector<2x128xf32>
    %212 = arith.mulf %203, %158 : vector<2x128xf32>
    %213 = arith.mulf %197, %205 : vector<2x128xf32>
    %214 = arith.addf %212, %213 : vector<2x128xf32>
    %215 = math.tanh %214 : vector<2x128xf32>
    %216 = arith.mulf %211, %215 : vector<2x128xf32>
    %217 = vector.extract_strided_slice %191 {offsets = [0, 0], sizes = [2, 128], strides = [1, 1]} : vector<2x512xf32> to vector<2x128xf32>
    %218 = arith.negf %217 : vector<2x128xf32>
    %219 = math.exp %218 : vector<2x128xf32>
    %cst_49 = arith.constant 1.000000e+00 : f32
    %220 = vector.broadcast %cst_49 : f32 to vector<2x128xf32>
    %221 = arith.addf %220, %219 : vector<2x128xf32>
    %222 = arith.divf %220, %221 : vector<2x128xf32>
    %223 = vector.extract_strided_slice %191 {offsets = [0, 128], sizes = [2, 128], strides = [1, 1]} : vector<2x512xf32> to vector<2x128xf32>
    %224 = arith.negf %223 : vector<2x128xf32>
    %225 = math.exp %224 : vector<2x128xf32>
    %cst_50 = arith.constant 1.000000e+00 : f32
    %226 = vector.broadcast %cst_50 : f32 to vector<2x128xf32>
    %227 = arith.addf %226, %225 : vector<2x128xf32>
    %228 = arith.divf %226, %227 : vector<2x128xf32>
    %229 = vector.extract_strided_slice %191 {offsets = [0, 256], sizes = [2, 128], strides = [1, 1]} : vector<2x512xf32> to vector<2x128xf32>
    %230 = math.tanh %229 : vector<2x128xf32>
    %231 = vector.extract_strided_slice %191 {offsets = [0, 384], sizes = [2, 128], strides = [1, 1]} : vector<2x512xf32> to vector<2x128xf32>
    %232 = arith.negf %231 : vector<2x128xf32>
    %233 = math.exp %232 : vector<2x128xf32>
    %cst_51 = arith.constant 1.000000e+00 : f32
    %234 = vector.broadcast %cst_51 : f32 to vector<2x128xf32>
    %235 = arith.addf %234, %233 : vector<2x128xf32>
    %236 = arith.divf %234, %235 : vector<2x128xf32>
    %237 = arith.mulf %228, %183 : vector<2x128xf32>
    %238 = arith.mulf %222, %230 : vector<2x128xf32>
    %239 = arith.addf %237, %238 : vector<2x128xf32>
    %240 = math.tanh %239 : vector<2x128xf32>
    %241 = arith.mulf %236, %240 : vector<2x128xf32>
    %242 = vector.extract_strided_slice %5 {offsets = [8, 0], sizes = [2, 512], strides = [1, 1]} : vector<16x512xf32> to vector<2x512xf32>
    %243 = vector.extract_strided_slice %11 {offsets = [8, 0], sizes = [2, 512], strides = [1, 1]} : vector<16x512xf32> to vector<2x512xf32>
    %cst_52 = arith.constant dense<0.000000e+00> : vector<2x512xf32>
    %244 = tpu.matmul %216, %12, %cst_52 {dimension_numbers = #tpu.dot_dimension_numbers<[1], [0], [0], [1], [0, 0, 1, 1], [], []>} : vector<2x128xf32>, vector<128x512xf32>, vector<2x512xf32> -> vector<2x512xf32>
    %245 = arith.addf %242, %244 : vector<2x512xf32>
    %cst_53 = arith.constant dense<0.000000e+00> : vector<2x512xf32>
    %246 = tpu.matmul %241, %13, %cst_53 {dimension_numbers = #tpu.dot_dimension_numbers<[1], [0], [0], [1], [0, 0, 1, 1], [], []>} : vector<2x128xf32>, vector<128x512xf32>, vector<2x512xf32> -> vector<2x512xf32>
    %247 = arith.addf %243, %246 : vector<2x512xf32>
    %248 = vector.extract_strided_slice %245 {offsets = [0, 0], sizes = [2, 128], strides = [1, 1]} : vector<2x512xf32> to vector<2x128xf32>
    %249 = arith.negf %248 : vector<2x128xf32>
    %250 = math.exp %249 : vector<2x128xf32>
    %cst_54 = arith.constant 1.000000e+00 : f32
    %251 = vector.broadcast %cst_54 : f32 to vector<2x128xf32>
    %252 = arith.addf %251, %250 : vector<2x128xf32>
    %253 = arith.divf %251, %252 : vector<2x128xf32>
    %254 = vector.extract_strided_slice %245 {offsets = [0, 128], sizes = [2, 128], strides = [1, 1]} : vector<2x512xf32> to vector<2x128xf32>
    %255 = arith.negf %254 : vector<2x128xf32>
    %256 = math.exp %255 : vector<2x128xf32>
    %cst_55 = arith.constant 1.000000e+00 : f32
    %257 = vector.broadcast %cst_55 : f32 to vector<2x128xf32>
    %258 = arith.addf %257, %256 : vector<2x128xf32>
    %259 = arith.divf %257, %258 : vector<2x128xf32>
    %260 = vector.extract_strided_slice %245 {offsets = [0, 256], sizes = [2, 128], strides = [1, 1]} : vector<2x512xf32> to vector<2x128xf32>
    %261 = math.tanh %260 : vector<2x128xf32>
    %262 = vector.extract_strided_slice %245 {offsets = [0, 384], sizes = [2, 128], strides = [1, 1]} : vector<2x512xf32> to vector<2x128xf32>
    %263 = arith.negf %262 : vector<2x128xf32>
    %264 = math.exp %263 : vector<2x128xf32>
    %cst_56 = arith.constant 1.000000e+00 : f32
    %265 = vector.broadcast %cst_56 : f32 to vector<2x128xf32>
    %266 = arith.addf %265, %264 : vector<2x128xf32>
    %267 = arith.divf %265, %266 : vector<2x128xf32>
    %268 = arith.mulf %259, %214 : vector<2x128xf32>
    %269 = arith.mulf %253, %261 : vector<2x128xf32>
    %270 = arith.addf %268, %269 : vector<2x128xf32>
    %271 = math.tanh %270 : vector<2x128xf32>
    %272 = arith.mulf %267, %271 : vector<2x128xf32>
    %273 = vector.extract_strided_slice %247 {offsets = [0, 0], sizes = [2, 128], strides = [1, 1]} : vector<2x512xf32> to vector<2x128xf32>
    %274 = arith.negf %273 : vector<2x128xf32>
    %275 = math.exp %274 : vector<2x128xf32>
    %cst_57 = arith.constant 1.000000e+00 : f32
    %276 = vector.broadcast %cst_57 : f32 to vector<2x128xf32>
    %277 = arith.addf %276, %275 : vector<2x128xf32>
    %278 = arith.divf %276, %277 : vector<2x128xf32>
    %279 = vector.extract_strided_slice %247 {offsets = [0, 128], sizes = [2, 128], strides = [1, 1]} : vector<2x512xf32> to vector<2x128xf32>
    %280 = arith.negf %279 : vector<2x128xf32>
    %281 = math.exp %280 : vector<2x128xf32>
    %cst_58 = arith.constant 1.000000e+00 : f32
    %282 = vector.broadcast %cst_58 : f32 to vector<2x128xf32>
    %283 = arith.addf %282, %281 : vector<2x128xf32>
    %284 = arith.divf %282, %283 : vector<2x128xf32>
    %285 = vector.extract_strided_slice %247 {offsets = [0, 256], sizes = [2, 128], strides = [1, 1]} : vector<2x512xf32> to vector<2x128xf32>
    %286 = math.tanh %285 : vector<2x128xf32>
    %287 = vector.extract_strided_slice %247 {offsets = [0, 384], sizes = [2, 128], strides = [1, 1]} : vector<2x512xf32> to vector<2x128xf32>
    %288 = arith.negf %287 : vector<2x128xf32>
    %289 = math.exp %288 : vector<2x128xf32>
    %cst_59 = arith.constant 1.000000e+00 : f32
    %290 = vector.broadcast %cst_59 : f32 to vector<2x128xf32>
    %291 = arith.addf %290, %289 : vector<2x128xf32>
    %292 = arith.divf %290, %291 : vector<2x128xf32>
    %293 = arith.mulf %284, %239 : vector<2x128xf32>
    %294 = arith.mulf %278, %286 : vector<2x128xf32>
    %295 = arith.addf %293, %294 : vector<2x128xf32>
    %296 = math.tanh %295 : vector<2x128xf32>
    %297 = arith.mulf %292, %296 : vector<2x128xf32>
    %298 = vector.extract_strided_slice %5 {offsets = [10, 0], sizes = [2, 512], strides = [1, 1]} : vector<16x512xf32> to vector<2x512xf32>
    %299 = vector.extract_strided_slice %11 {offsets = [10, 0], sizes = [2, 512], strides = [1, 1]} : vector<16x512xf32> to vector<2x512xf32>
    %cst_60 = arith.constant dense<0.000000e+00> : vector<2x512xf32>
    %300 = tpu.matmul %272, %12, %cst_60 {dimension_numbers = #tpu.dot_dimension_numbers<[1], [0], [0], [1], [0, 0, 1, 1], [], []>} : vector<2x128xf32>, vector<128x512xf32>, vector<2x512xf32> -> vector<2x512xf32>
    %301 = arith.addf %298, %300 : vector<2x512xf32>
    %cst_61 = arith.constant dense<0.000000e+00> : vector<2x512xf32>
    %302 = tpu.matmul %297, %13, %cst_61 {dimension_numbers = #tpu.dot_dimension_numbers<[1], [0], [0], [1], [0, 0, 1, 1], [], []>} : vector<2x128xf32>, vector<128x512xf32>, vector<2x512xf32> -> vector<2x512xf32>
    %303 = arith.addf %299, %302 : vector<2x512xf32>
    %304 = vector.extract_strided_slice %301 {offsets = [0, 0], sizes = [2, 128], strides = [1, 1]} : vector<2x512xf32> to vector<2x128xf32>
    %305 = arith.negf %304 : vector<2x128xf32>
    %306 = math.exp %305 : vector<2x128xf32>
    %cst_62 = arith.constant 1.000000e+00 : f32
    %307 = vector.broadcast %cst_62 : f32 to vector<2x128xf32>
    %308 = arith.addf %307, %306 : vector<2x128xf32>
    %309 = arith.divf %307, %308 : vector<2x128xf32>
    %310 = vector.extract_strided_slice %301 {offsets = [0, 128], sizes = [2, 128], strides = [1, 1]} : vector<2x512xf32> to vector<2x128xf32>
    %311 = arith.negf %310 : vector<2x128xf32>
    %312 = math.exp %311 : vector<2x128xf32>
    %cst_63 = arith.constant 1.000000e+00 : f32
    %313 = vector.broadcast %cst_63 : f32 to vector<2x128xf32>
    %314 = arith.addf %313, %312 : vector<2x128xf32>
    %315 = arith.divf %313, %314 : vector<2x128xf32>
    %316 = vector.extract_strided_slice %301 {offsets = [0, 256], sizes = [2, 128], strides = [1, 1]} : vector<2x512xf32> to vector<2x128xf32>
    %317 = math.tanh %316 : vector<2x128xf32>
    %318 = vector.extract_strided_slice %301 {offsets = [0, 384], sizes = [2, 128], strides = [1, 1]} : vector<2x512xf32> to vector<2x128xf32>
    %319 = arith.negf %318 : vector<2x128xf32>
    %320 = math.exp %319 : vector<2x128xf32>
    %cst_64 = arith.constant 1.000000e+00 : f32
    %321 = vector.broadcast %cst_64 : f32 to vector<2x128xf32>
    %322 = arith.addf %321, %320 : vector<2x128xf32>
    %323 = arith.divf %321, %322 : vector<2x128xf32>
    %324 = arith.mulf %315, %270 : vector<2x128xf32>
    %325 = arith.mulf %309, %317 : vector<2x128xf32>
    %326 = arith.addf %324, %325 : vector<2x128xf32>
    %327 = math.tanh %326 : vector<2x128xf32>
    %328 = arith.mulf %323, %327 : vector<2x128xf32>
    %329 = vector.extract_strided_slice %303 {offsets = [0, 0], sizes = [2, 128], strides = [1, 1]} : vector<2x512xf32> to vector<2x128xf32>
    %330 = arith.negf %329 : vector<2x128xf32>
    %331 = math.exp %330 : vector<2x128xf32>
    %cst_65 = arith.constant 1.000000e+00 : f32
    %332 = vector.broadcast %cst_65 : f32 to vector<2x128xf32>
    %333 = arith.addf %332, %331 : vector<2x128xf32>
    %334 = arith.divf %332, %333 : vector<2x128xf32>
    %335 = vector.extract_strided_slice %303 {offsets = [0, 128], sizes = [2, 128], strides = [1, 1]} : vector<2x512xf32> to vector<2x128xf32>
    %336 = arith.negf %335 : vector<2x128xf32>
    %337 = math.exp %336 : vector<2x128xf32>
    %cst_66 = arith.constant 1.000000e+00 : f32
    %338 = vector.broadcast %cst_66 : f32 to vector<2x128xf32>
    %339 = arith.addf %338, %337 : vector<2x128xf32>
    %340 = arith.divf %338, %339 : vector<2x128xf32>
    %341 = vector.extract_strided_slice %303 {offsets = [0, 256], sizes = [2, 128], strides = [1, 1]} : vector<2x512xf32> to vector<2x128xf32>
    %342 = math.tanh %341 : vector<2x128xf32>
    %343 = vector.extract_strided_slice %303 {offsets = [0, 384], sizes = [2, 128], strides = [1, 1]} : vector<2x512xf32> to vector<2x128xf32>
    %344 = arith.negf %343 : vector<2x128xf32>
    %345 = math.exp %344 : vector<2x128xf32>
    %cst_67 = arith.constant 1.000000e+00 : f32
    %346 = vector.broadcast %cst_67 : f32 to vector<2x128xf32>
    %347 = arith.addf %346, %345 : vector<2x128xf32>
    %348 = arith.divf %346, %347 : vector<2x128xf32>
    %349 = arith.mulf %340, %295 : vector<2x128xf32>
    %350 = arith.mulf %334, %342 : vector<2x128xf32>
    %351 = arith.addf %349, %350 : vector<2x128xf32>
    %352 = math.tanh %351 : vector<2x128xf32>
    %353 = arith.mulf %348, %352 : vector<2x128xf32>
    %354 = vector.extract_strided_slice %5 {offsets = [12, 0], sizes = [2, 512], strides = [1, 1]} : vector<16x512xf32> to vector<2x512xf32>
    %355 = vector.extract_strided_slice %11 {offsets = [12, 0], sizes = [2, 512], strides = [1, 1]} : vector<16x512xf32> to vector<2x512xf32>
    %cst_68 = arith.constant dense<0.000000e+00> : vector<2x512xf32>
    %356 = tpu.matmul %328, %12, %cst_68 {dimension_numbers = #tpu.dot_dimension_numbers<[1], [0], [0], [1], [0, 0, 1, 1], [], []>} : vector<2x128xf32>, vector<128x512xf32>, vector<2x512xf32> -> vector<2x512xf32>
    %357 = arith.addf %354, %356 : vector<2x512xf32>
    %cst_69 = arith.constant dense<0.000000e+00> : vector<2x512xf32>
    %358 = tpu.matmul %353, %13, %cst_69 {dimension_numbers = #tpu.dot_dimension_numbers<[1], [0], [0], [1], [0, 0, 1, 1], [], []>} : vector<2x128xf32>, vector<128x512xf32>, vector<2x512xf32> -> vector<2x512xf32>
    %359 = arith.addf %355, %358 : vector<2x512xf32>
    %360 = vector.extract_strided_slice %357 {offsets = [0, 0], sizes = [2, 128], strides = [1, 1]} : vector<2x512xf32> to vector<2x128xf32>
    %361 = arith.negf %360 : vector<2x128xf32>
    %362 = math.exp %361 : vector<2x128xf32>
    %cst_70 = arith.constant 1.000000e+00 : f32
    %363 = vector.broadcast %cst_70 : f32 to vector<2x128xf32>
    %364 = arith.addf %363, %362 : vector<2x128xf32>
    %365 = arith.divf %363, %364 : vector<2x128xf32>
    %366 = vector.extract_strided_slice %357 {offsets = [0, 128], sizes = [2, 128], strides = [1, 1]} : vector<2x512xf32> to vector<2x128xf32>
    %367 = arith.negf %366 : vector<2x128xf32>
    %368 = math.exp %367 : vector<2x128xf32>
    %cst_71 = arith.constant 1.000000e+00 : f32
    %369 = vector.broadcast %cst_71 : f32 to vector<2x128xf32>
    %370 = arith.addf %369, %368 : vector<2x128xf32>
    %371 = arith.divf %369, %370 : vector<2x128xf32>
    %372 = vector.extract_strided_slice %357 {offsets = [0, 256], sizes = [2, 128], strides = [1, 1]} : vector<2x512xf32> to vector<2x128xf32>
    %373 = math.tanh %372 : vector<2x128xf32>
    %374 = vector.extract_strided_slice %357 {offsets = [0, 384], sizes = [2, 128], strides = [1, 1]} : vector<2x512xf32> to vector<2x128xf32>
    %375 = arith.negf %374 : vector<2x128xf32>
    %376 = math.exp %375 : vector<2x128xf32>
    %cst_72 = arith.constant 1.000000e+00 : f32
    %377 = vector.broadcast %cst_72 : f32 to vector<2x128xf32>
    %378 = arith.addf %377, %376 : vector<2x128xf32>
    %379 = arith.divf %377, %378 : vector<2x128xf32>
    %380 = arith.mulf %371, %326 : vector<2x128xf32>
    %381 = arith.mulf %365, %373 : vector<2x128xf32>
    %382 = arith.addf %380, %381 : vector<2x128xf32>
    %383 = math.tanh %382 : vector<2x128xf32>
    %384 = arith.mulf %379, %383 : vector<2x128xf32>
    %385 = vector.extract_strided_slice %359 {offsets = [0, 0], sizes = [2, 128], strides = [1, 1]} : vector<2x512xf32> to vector<2x128xf32>
    %386 = arith.negf %385 : vector<2x128xf32>
    %387 = math.exp %386 : vector<2x128xf32>
    %cst_73 = arith.constant 1.000000e+00 : f32
    %388 = vector.broadcast %cst_73 : f32 to vector<2x128xf32>
    %389 = arith.addf %388, %387 : vector<2x128xf32>
    %390 = arith.divf %388, %389 : vector<2x128xf32>
    %391 = vector.extract_strided_slice %359 {offsets = [0, 128], sizes = [2, 128], strides = [1, 1]} : vector<2x512xf32> to vector<2x128xf32>
    %392 = arith.negf %391 : vector<2x128xf32>
    %393 = math.exp %392 : vector<2x128xf32>
    %cst_74 = arith.constant 1.000000e+00 : f32
    %394 = vector.broadcast %cst_74 : f32 to vector<2x128xf32>
    %395 = arith.addf %394, %393 : vector<2x128xf32>
    %396 = arith.divf %394, %395 : vector<2x128xf32>
    %397 = vector.extract_strided_slice %359 {offsets = [0, 256], sizes = [2, 128], strides = [1, 1]} : vector<2x512xf32> to vector<2x128xf32>
    %398 = math.tanh %397 : vector<2x128xf32>
    %399 = vector.extract_strided_slice %359 {offsets = [0, 384], sizes = [2, 128], strides = [1, 1]} : vector<2x512xf32> to vector<2x128xf32>
    %400 = arith.negf %399 : vector<2x128xf32>
    %401 = math.exp %400 : vector<2x128xf32>
    %cst_75 = arith.constant 1.000000e+00 : f32
    %402 = vector.broadcast %cst_75 : f32 to vector<2x128xf32>
    %403 = arith.addf %402, %401 : vector<2x128xf32>
    %404 = arith.divf %402, %403 : vector<2x128xf32>
    %405 = arith.mulf %396, %351 : vector<2x128xf32>
    %406 = arith.mulf %390, %398 : vector<2x128xf32>
    %407 = arith.addf %405, %406 : vector<2x128xf32>
    %408 = math.tanh %407 : vector<2x128xf32>
    %409 = arith.mulf %404, %408 : vector<2x128xf32>
    %410 = vector.extract_strided_slice %5 {offsets = [14, 0], sizes = [2, 512], strides = [1, 1]} : vector<16x512xf32> to vector<2x512xf32>
    %411 = vector.extract_strided_slice %11 {offsets = [14, 0], sizes = [2, 512], strides = [1, 1]} : vector<16x512xf32> to vector<2x512xf32>
    %cst_76 = arith.constant dense<0.000000e+00> : vector<2x512xf32>
    %412 = tpu.matmul %384, %12, %cst_76 {dimension_numbers = #tpu.dot_dimension_numbers<[1], [0], [0], [1], [0, 0, 1, 1], [], []>} : vector<2x128xf32>, vector<128x512xf32>, vector<2x512xf32> -> vector<2x512xf32>
    %413 = arith.addf %410, %412 : vector<2x512xf32>
    %cst_77 = arith.constant dense<0.000000e+00> : vector<2x512xf32>
    %414 = tpu.matmul %409, %13, %cst_77 {dimension_numbers = #tpu.dot_dimension_numbers<[1], [0], [0], [1], [0, 0, 1, 1], [], []>} : vector<2x128xf32>, vector<128x512xf32>, vector<2x512xf32> -> vector<2x512xf32>
    %415 = arith.addf %411, %414 : vector<2x512xf32>
    %416 = vector.extract_strided_slice %413 {offsets = [0, 0], sizes = [2, 128], strides = [1, 1]} : vector<2x512xf32> to vector<2x128xf32>
    %417 = arith.negf %416 : vector<2x128xf32>
    %418 = math.exp %417 : vector<2x128xf32>
    %cst_78 = arith.constant 1.000000e+00 : f32
    %419 = vector.broadcast %cst_78 : f32 to vector<2x128xf32>
    %420 = arith.addf %419, %418 : vector<2x128xf32>
    %421 = arith.divf %419, %420 : vector<2x128xf32>
    %422 = vector.extract_strided_slice %413 {offsets = [0, 128], sizes = [2, 128], strides = [1, 1]} : vector<2x512xf32> to vector<2x128xf32>
    %423 = arith.negf %422 : vector<2x128xf32>
    %424 = math.exp %423 : vector<2x128xf32>
    %cst_79 = arith.constant 1.000000e+00 : f32
    %425 = vector.broadcast %cst_79 : f32 to vector<2x128xf32>
    %426 = arith.addf %425, %424 : vector<2x128xf32>
    %427 = arith.divf %425, %426 : vector<2x128xf32>
    %428 = vector.extract_strided_slice %413 {offsets = [0, 256], sizes = [2, 128], strides = [1, 1]} : vector<2x512xf32> to vector<2x128xf32>
    %429 = math.tanh %428 : vector<2x128xf32>
    %430 = vector.extract_strided_slice %413 {offsets = [0, 384], sizes = [2, 128], strides = [1, 1]} : vector<2x512xf32> to vector<2x128xf32>
    %431 = arith.negf %430 : vector<2x128xf32>
    %432 = math.exp %431 : vector<2x128xf32>
    %cst_80 = arith.constant 1.000000e+00 : f32
    %433 = vector.broadcast %cst_80 : f32 to vector<2x128xf32>
    %434 = arith.addf %433, %432 : vector<2x128xf32>
    %435 = arith.divf %433, %434 : vector<2x128xf32>
    %436 = arith.mulf %427, %382 : vector<2x128xf32>
    %437 = arith.mulf %421, %429 : vector<2x128xf32>
    %438 = arith.addf %436, %437 : vector<2x128xf32>
    %439 = math.tanh %438 : vector<2x128xf32>
    %440 = arith.mulf %435, %439 : vector<2x128xf32>
    %441 = vector.extract_strided_slice %415 {offsets = [0, 0], sizes = [2, 128], strides = [1, 1]} : vector<2x512xf32> to vector<2x128xf32>
    %442 = arith.negf %441 : vector<2x128xf32>
    %443 = math.exp %442 : vector<2x128xf32>
    %cst_81 = arith.constant 1.000000e+00 : f32
    %444 = vector.broadcast %cst_81 : f32 to vector<2x128xf32>
    %445 = arith.addf %444, %443 : vector<2x128xf32>
    %446 = arith.divf %444, %445 : vector<2x128xf32>
    %447 = vector.extract_strided_slice %415 {offsets = [0, 128], sizes = [2, 128], strides = [1, 1]} : vector<2x512xf32> to vector<2x128xf32>
    %448 = arith.negf %447 : vector<2x128xf32>
    %449 = math.exp %448 : vector<2x128xf32>
    %cst_82 = arith.constant 1.000000e+00 : f32
    %450 = vector.broadcast %cst_82 : f32 to vector<2x128xf32>
    %451 = arith.addf %450, %449 : vector<2x128xf32>
    %452 = arith.divf %450, %451 : vector<2x128xf32>
    %453 = vector.extract_strided_slice %415 {offsets = [0, 256], sizes = [2, 128], strides = [1, 1]} : vector<2x512xf32> to vector<2x128xf32>
    %454 = math.tanh %453 : vector<2x128xf32>
    %455 = vector.extract_strided_slice %415 {offsets = [0, 384], sizes = [2, 128], strides = [1, 1]} : vector<2x512xf32> to vector<2x128xf32>
    %456 = arith.negf %455 : vector<2x128xf32>
    %457 = math.exp %456 : vector<2x128xf32>
    %cst_83 = arith.constant 1.000000e+00 : f32
    %458 = vector.broadcast %cst_83 : f32 to vector<2x128xf32>
    %459 = arith.addf %458, %457 : vector<2x128xf32>
    %460 = arith.divf %458, %459 : vector<2x128xf32>
    %461 = arith.mulf %452, %407 : vector<2x128xf32>
    %462 = arith.mulf %446, %454 : vector<2x128xf32>
    %463 = arith.addf %461, %462 : vector<2x128xf32>
    %464 = math.tanh %463 : vector<2x128xf32>
    %465 = arith.mulf %460, %464 : vector<2x128xf32>
    %c0_84 = arith.constant 0 : index
    %c0_85 = arith.constant 0 : index
    %466 = vector.load %arg8[%c0_84, %c0_85] : memref<128x128xf32, #tpu.memory_space<vmem>>, vector<128x128xf32>
    %cst_86 = arith.constant dense<0.000000e+00> : vector<2x128xf32>
    %467 = tpu.matmul %440, %466, %cst_86 {dimension_numbers = #tpu.dot_dimension_numbers<[1], [0], [0], [1], [0, 0, 1, 1], [], []>} : vector<2x128xf32>, vector<128x128xf32>, vector<2x128xf32> -> vector<2x128xf32>
    %c0_87 = arith.constant 0 : index
    %c0_88 = arith.constant 0 : index
    %468 = vector.load %arg9[%c0_87, %c0_88] : memref<1x128xf32, #tpu.memory_space<vmem>>, vector<1x128xf32>
    %469 = vector.broadcast %468 : vector<1x128xf32> to vector<2x128xf32>
    %470 = arith.addf %467, %469 : vector<2x128xf32>
    %cst_89 = arith.constant 0.000000e+00 : f32
    %471 = vector.broadcast %cst_89 : f32 to vector<2x128xf32>
    %472 = arith.maximumf %470, %471 : vector<2x128xf32>
    %c0_90 = arith.constant 0 : index
    %c0_91 = arith.constant 0 : index
    %473 = vector.load %arg10[%c0_90, %c0_91] : memref<128x128xf32, #tpu.memory_space<vmem>>, vector<128x128xf32>
    %cst_92 = arith.constant dense<0.000000e+00> : vector<2x128xf32>
    %474 = tpu.matmul %472, %473, %cst_92 {dimension_numbers = #tpu.dot_dimension_numbers<[1], [0], [0], [1], [0, 0, 1, 1], [], []>} : vector<2x128xf32>, vector<128x128xf32>, vector<2x128xf32> -> vector<2x128xf32>
    %c0_93 = arith.constant 0 : index
    %c0_94 = arith.constant 0 : index
    %475 = vector.load %arg11[%c0_93, %c0_94] : memref<1x128xf32, #tpu.memory_space<vmem>>, vector<1x128xf32>
    %476 = vector.broadcast %475 : vector<1x128xf32> to vector<2x128xf32>
    %477 = arith.addf %474, %476 : vector<2x128xf32>
    %cst_95 = arith.constant 0.000000e+00 : f32
    %478 = vector.broadcast %cst_95 : f32 to vector<2x128xf32>
    %479 = arith.maximumf %477, %478 : vector<2x128xf32>
    %c0_96 = arith.constant 0 : index
    %c0_97 = arith.constant 0 : index
    %480 = vector.load %arg12[%c0_96, %c0_97] : memref<128x128xf32, #tpu.memory_space<vmem>>, vector<128x128xf32>
    %cst_98 = arith.constant dense<0.000000e+00> : vector<2x128xf32>
    %481 = tpu.matmul %479, %480, %cst_98 {dimension_numbers = #tpu.dot_dimension_numbers<[1], [0], [0], [1], [0, 0, 1, 1], [], []>} : vector<2x128xf32>, vector<128x128xf32>, vector<2x128xf32> -> vector<2x128xf32>
    %c0_99 = arith.constant 0 : index
    %c0_100 = arith.constant 0 : index
    %482 = vector.load %arg13[%c0_99, %c0_100] : memref<1x128xf32, #tpu.memory_space<vmem>>, vector<1x128xf32>
    %483 = vector.broadcast %482 : vector<1x128xf32> to vector<2x128xf32>
    %484 = arith.addf %481, %483 : vector<2x128xf32>
    %cst_101 = arith.constant 0.000000e+00 : f32
    %485 = vector.broadcast %cst_101 : f32 to vector<2x128xf32>
    %486 = arith.maximumf %484, %485 : vector<2x128xf32>
    %c0_102 = arith.constant 0 : index
    %c0_103 = arith.constant 0 : index
    %487 = vector.load %arg14[%c0_102, %c0_103] : memref<128x256xf32, #tpu.memory_space<vmem>>, vector<128x256xf32>
    %cst_104 = arith.constant dense<0.000000e+00> : vector<2x256xf32>
    %488 = tpu.matmul %486, %487, %cst_104 {dimension_numbers = #tpu.dot_dimension_numbers<[1], [0], [0], [1], [0, 0, 1, 1], [], []>} : vector<2x128xf32>, vector<128x256xf32>, vector<2x256xf32> -> vector<2x256xf32>
    %c0_105 = arith.constant 0 : index
    %c0_106 = arith.constant 0 : index
    %489 = vector.load %arg15[%c0_105, %c0_106] : memref<128x256xf32, #tpu.memory_space<vmem>>, vector<128x256xf32>
    %cst_107 = arith.constant dense<0.000000e+00> : vector<2x256xf32>
    %490 = tpu.matmul %465, %489, %cst_107 {dimension_numbers = #tpu.dot_dimension_numbers<[1], [0], [0], [1], [0, 0, 1, 1], [], []>} : vector<2x128xf32>, vector<128x256xf32>, vector<2x256xf32> -> vector<2x256xf32>
    %491 = arith.addf %488, %490 : vector<2x256xf32>
    %c0_108 = arith.constant 0 : index
    %c0_109 = arith.constant 0 : index
    %492 = vector.load %arg16[%c0_108, %c0_109] : memref<1x256xf32, #tpu.memory_space<vmem>>, vector<1x256xf32>
    %493 = vector.broadcast %492 : vector<1x256xf32> to vector<2x256xf32>
    %494 = arith.addf %491, %493 : vector<2x256xf32>
    %cst_110 = arith.constant 0.000000e+00 : f32
    %495 = vector.broadcast %cst_110 : f32 to vector<2x256xf32>
    %496 = arith.maximumf %494, %495 : vector<2x256xf32>
    %c0_111 = arith.constant 0 : index
    %c0_112 = arith.constant 0 : index
    %497 = vector.load %arg17[%c0_111, %c0_112] : memref<256x256xf32, #tpu.memory_space<vmem>>, vector<256x256xf32>
    %cst_113 = arith.constant dense<0.000000e+00> : vector<2x256xf32>
    %498 = tpu.matmul %496, %497, %cst_113 {dimension_numbers = #tpu.dot_dimension_numbers<[1], [0], [0], [1], [0, 0, 1, 1], [], []>} : vector<2x256xf32>, vector<256x256xf32>, vector<2x256xf32> -> vector<2x256xf32>
    %c0_114 = arith.constant 0 : index
    %c0_115 = arith.constant 0 : index
    %499 = vector.load %arg18[%c0_114, %c0_115] : memref<1x256xf32, #tpu.memory_space<vmem>>, vector<1x256xf32>
    %500 = vector.broadcast %499 : vector<1x256xf32> to vector<2x256xf32>
    %501 = arith.addf %498, %500 : vector<2x256xf32>
    %cst_116 = arith.constant 0.000000e+00 : f32
    %502 = vector.broadcast %cst_116 : f32 to vector<2x256xf32>
    %503 = arith.maximumf %501, %502 : vector<2x256xf32>
    %c0_117 = arith.constant 0 : index
    %c0_118 = arith.constant 0 : index
    %504 = vector.load %arg19[%c0_117, %c0_118] : memref<256x256xf32, #tpu.memory_space<vmem>>, vector<256x256xf32>
    %cst_119 = arith.constant dense<0.000000e+00> : vector<2x256xf32>
    %505 = tpu.matmul %503, %504, %cst_119 {dimension_numbers = #tpu.dot_dimension_numbers<[1], [0], [0], [1], [0, 0, 1, 1], [], []>} : vector<2x256xf32>, vector<256x256xf32>, vector<2x256xf32> -> vector<2x256xf32>
    %c0_120 = arith.constant 0 : index
    %c0_121 = arith.constant 0 : index
    %506 = vector.load %arg20[%c0_120, %c0_121] : memref<1x256xf32, #tpu.memory_space<vmem>>, vector<1x256xf32>
    %507 = vector.broadcast %506 : vector<1x256xf32> to vector<2x256xf32>
    %508 = arith.addf %505, %507 : vector<2x256xf32>
    %cst_122 = arith.constant 0.000000e+00 : f32
    %509 = vector.broadcast %cst_122 : f32 to vector<2x256xf32>
    %510 = arith.maximumf %508, %509 : vector<2x256xf32>
    %c0_123 = arith.constant 0 : index
    %c0_124 = arith.constant 0 : index
    %511 = vector.load %arg21[%c0_123, %c0_124] : memref<256x1xf32, #tpu.memory_space<vmem>>, vector<256x1xf32>
    %cst_125 = arith.constant dense<0.000000e+00> : vector<2x1xf32>
    %512 = tpu.matmul %510, %511, %cst_125 {dimension_numbers = #tpu.dot_dimension_numbers<[1], [0], [0], [1], [0, 0, 1, 1], [], []>} : vector<2x256xf32>, vector<256x1xf32>, vector<2x1xf32> -> vector<2x1xf32>
    %c0_126 = arith.constant 0 : index
    %c0_127 = arith.constant 0 : index
    %513 = vector.load %arg22[%c0_126, %c0_127] : memref<1x1xf32, #tpu.memory_space<vmem>>, vector<1x1xf32>
    %514 = vector.broadcast %513 : vector<1x1xf32> to vector<2x1xf32>
    %515 = arith.addf %512, %514 : vector<2x1xf32>
    %516 = arith.negf %515 : vector<2x1xf32>
    %517 = math.exp %516 : vector<2x1xf32>
    %cst_128 = arith.constant 1.000000e+00 : f32
    %518 = vector.broadcast %cst_128 : f32 to vector<2x1xf32>
    %519 = arith.addf %518, %517 : vector<2x1xf32>
    %520 = arith.divf %518, %519 : vector<2x1xf32>
    %c0_129 = arith.constant 0 : index
    %c0_130 = arith.constant 0 : index
    %521 = vector.load %arg23[%c0_129, %c0_130] : memref<2x1xf32, #tpu.memory_space<vmem>>, vector<2x1xf32>
    tpu.vector_store %arg23[%c0_129, %c0_130], %520 {strides = array<i32>} : memref<2x1xf32, #tpu.memory_space<vmem>>, vector<2x1xf32>,
    return
  }
}

</mosaic_0001>

<llo_original>
// kernel: tpu_custom_call.1
$region0: #{tpu_custom_call.1}
  #allocation0 [shape = 'u32[]', space=smem, size = 0x4, offset = 0x4, fixed_abs, tag = 'smem constant byte address 0x4 - core index']
  #allocation1 [shape = 'u32[72,128]{1,0:T(1,128)}', space=vmem, size = 0x9000, scoped, tag = 'internal scratch']
  #allocation2 [shape = 'f32[1,1]{1,0:T(1,128)S(1)}', space=vmem, size = 0x200, scoped, tag = 'scoped memory for tpu_custom_call.1']
  %s0 = inlined_call_operand.vmem [shape: f32[16,4], index: 0, kind: input, shape index: {}]
  %s1 = inlined_call_operand.vmem [shape: f32[16,4], index: 1, kind: input, shape index: {}]
  %s2 = inlined_call_operand.vmem [shape: f32[4,512], index: 2, kind: input, shape index: {}]
  %s3 = inlined_call_operand.hbm [shape: f32[128,512], index: 3, kind: input, shape index: {}]
  %s4 = inlined_call_operand.vmem [shape: f32[1,512], index: 4, kind: input, shape index: {}]
  %s5 = inlined_call_operand.vmem [shape: f32[4,512], index: 5, kind: input, shape index: {}]
  %s6 = inlined_call_operand.hbm [shape: f32[128,512], index: 6, kind: input, shape index: {}]
  %s7 = inlined_call_operand.vmem [shape: f32[1,512], index: 7, kind: input, shape index: {}]
  %s8 = inlined_call_operand.hbm [shape: f32[128,128], index: 8, kind: input, shape index: {}]
  %s9 = inlined_call_operand.vmem [shape: f32[1,128], index: 9, kind: input, shape index: {}]
  %s10 = inlined_call_operand.hbm [shape: f32[128,128], index: 10, kind: input, shape index: {}]
  %s11 = inlined_call_operand.hbm [shape: f32[1,128], index: 11, kind: input, shape index: {}]
  %s12 = inlined_call_operand.hbm [shape: f32[128,128], index: 12, kind: input, shape index: {}]
  %s13 = inlined_call_operand.hbm [shape: f32[1,128], index: 13, kind: input, shape index: {}]
  %s14 = inlined_call_operand.vmem [shape: f32[128,256], index: 14, kind: input, shape index: {}]
  %s15 = inlined_call_operand.hbm [shape: f32[128,256], index: 15, kind: input, shape index: {}]
  %s16 = inlined_call_operand.vmem [shape: f32[1,256], index: 16, kind: input, shape index: {}]
  %s17 = inlined_call_operand.hbm [shape: f32[256,256], index: 17, kind: input, shape index: {}]
  %s18 = inlined_call_operand.vmem [shape: f32[1,256], index: 18, kind: input, shape index: {}]
  %s19 = inlined_call_operand.hbm [shape: f32[256,256], index: 19, kind: input, shape index: {}]
  %s20 = inlined_call_operand.vmem [shape: f32[1,256], index: 20, kind: input, shape index: {}]
  %s21 = inlined_call_operand.vmem [shape: f32[256,1], index: 21, kind: input, shape index: {}]
  %s22 = inlined_call_operand.<no memory space> [shape: f32[1,1], index: 22, kind: input, shape index: {}]
  %s23 = inlined_call_operand.vmem [shape: f32[2,1], index: 23, kind: output, shape index: {}]
  %s24 = sld [smem:[#allocation0]]
  $region142: #{tpu_custom_call.1} parent=0
    _
  %s26 = ssub.s32 1, %s24
  %s27 = scalar_select 0, %s26, %s24
  %v28 = vstv %s22
  %29 = vst [vmem:[#allocation2] sm:$0x1] %v28
  $region1: #{tpu_custom_call.1} parent=0
    #allocation3 [shape = 'u8[262144]{0}', space=vmem, size = 0x40000, scoped, tag = 'input window, operand 3, single buffered']
    #allocation4 [shape = 's32[1]{0}', space=sflag, size = 0x4, scoped, tag = 'scoped memory for tpu_custom_call.1']
    #allocation5 [shape = 'u8[262144]{0}', space=vmem, size = 0x40000, scoped, tag = 'input window, operand 6, single buffered']
    #allocation6 [shape = 's32[1]{0}', space=sflag, size = 0x4, scoped, tag = 'scoped memory for tpu_custom_call.1']
    #allocation7 [shape = 'u8[65536]{0}', space=vmem, size = 0x10000, scoped, tag = 'input window, operand 8, single buffered']
    #allocation8 [shape = 'u8[65536]{0}', space=vmem, size = 0x10000, scoped, tag = 'input window, operand 10, single buffered']
    #allocation9 [shape = 's32[1]{0}', space=sflag, size = 0x4, scoped, tag = 'scoped memory for tpu_custom_call.1']
    #allocation10 [shape = 'u8[512]{0}', space=vmem, size = 0x400, scoped, tag = 'input window, operand 11, single buffered']
    #allocation11 [shape = 'u8[65536]{0}', space=vmem, size = 0x10000, scoped, tag = 'input window, operand 12, single buffered']
    #allocation12 [shape = 's32[1]{0}', space=sflag, size = 0x4, scoped, tag = 'scoped memory for tpu_custom_call.1']
    #allocation13 [shape = 'u8[512]{0}', space=vmem, size = 0x400, scoped, tag = 'input window, operand 13, single buffered']
    #allocation14 [shape = 'u8[131072]{0}', space=vmem, size = 0x20000, scoped, tag = 'input window, operand 15, single buffered']
    #allocation15 [shape = 's32[1]{0}', space=sflag, size = 0x4, scoped, tag = 'scoped memory for tpu_custom_call.1']
    #allocation16 [shape = 'u8[262144]{0}', space=vmem, size = 0x40000, scoped, tag = 'input window, operand 17, single buffered']
    #allocation17 [shape = 'u8[262144]{0}', space=vmem, size = 0x40000, scoped, tag = 'input window, operand 19, single buffered']
    #allocation18 [shape = 's32[1]{0}', space=sflag, size = 0x4, scoped, tag = 'scoped memory for tpu_custom_call.1']
    %30 = vsyncpa [#allocation4], 0
    %31 = vsyncpa [#allocation6], 0
    %32 = vsyncpa [#allocation9], 0
    %33 = vsyncpa [#allocation12], 0
    %34 = vsyncpa [#allocation15], 0
    %35 = vsyncpa [#allocation18], 0
    // Predicated region
    $region2: #{tpu_custom_call.1} parent=1 // pred_check
      _
    $region3: #{tpu_custom_call.1} parent=1 // pred_check_branch
      %37 = sbr.rel (0) target = $region5
    $region4: #{tpu_custom_call.1} parent=1 // pred_region
      _
    $region5: #{tpu_custom_call.1} parent=1 // pred_fallthru
      _
    // Predicated region
    $region6: #{tpu_custom_call.1} parent=1 // pred_check
      _
    $region7: #{tpu_custom_call.1} parent=1 // pred_check_branch
      %39 = sbr.rel (0) target = $region9
    $region8: #{tpu_custom_call.1} parent=1 // pred_region
      _
    $region9: #{tpu_custom_call.1} parent=1 // pred_fallthru
      _
    // Predicated region
    $region10: #{tpu_custom_call.1} parent=1 // pred_check
      _
    $region11: #{tpu_custom_call.1} parent=1 // pred_check_branch
      %41 = sbr.rel (0) target = $region13
    $region12: #{tpu_custom_call.1} parent=1 // pred_region
      _
    $region13: #{tpu_custom_call.1} parent=1 // pred_fallthru
      _
    // Predicated region
    $region14: #{tpu_custom_call.1} parent=1 // pred_check
      _
    $region15: #{tpu_custom_call.1} parent=1 // pred_check_branch
      %43 = sbr.rel (0) target = $region17
    $region16: #{tpu_custom_call.1} parent=1 // pred_region
      %45 = vsyncadd [#allocation4], 0
      %s46 = sshll.u32 %s3, 4
      %s47 = int_to_ptr.hbm [resolvable:$true] %s46
      %s48 = sshll.u32 [#allocation3], 4
      %s49 = int_to_ptr.vmem [resolvable:$true] %s48
      %54 = dma.hbm_to_vmem [thread:$0]  %s47, 8192, %s49, [#allocation4], 512, 512, 32
    $region17: #{tpu_custom_call.1} parent=1 // pred_fallthru
      _
    // Predicated region
    $region18: #{tpu_custom_call.1} parent=1 // pred_check
      _
    $region19: #{tpu_custom_call.1} parent=1 // pred_check_branch
      %56 = sbr.rel (0) target = $region21
    $region20: #{tpu_custom_call.1} parent=1 // pred_region
      _
    $region21: #{tpu_custom_call.1} parent=1 // pred_fallthru
      _
    // Predicated region
    $region22: #{tpu_custom_call.1} parent=1 // pred_check
      _
    $region23: #{tpu_custom_call.1} parent=1 // pred_check_branch
      %58 = sbr.rel (0) target = $region25
    $region24: #{tpu_custom_call.1} parent=1 // pred_region
      _
    $region25: #{tpu_custom_call.1} parent=1 // pred_fallthru
      _
    // Predicated region
    $region26: #{tpu_custom_call.1} parent=1 // pred_check
      _
    $region27: #{tpu_custom_call.1} parent=1 // pred_check_branch
      %60 = sbr.rel (0) target = $region29
    $region28: #{tpu_custom_call.1} parent=1 // pred_region
      %62 = vsyncadd [#allocation6], 0
      %s63 = sshll.u32 %s6, 4
      %s64 = int_to_ptr.hbm [resolvable:$true] %s63
      %s65 = sshll.u32 [#allocation5], 4
      %s66 = int_to_ptr.vmem [resolvable:$true] %s65
      %71 = dma.hbm_to_vmem [thread:$0]  %s64, 8192, %s66, [#allocation6], 512, 512, 32
    $region29: #{tpu_custom_call.1} parent=1 // pred_fallthru
      _
    // Predicated region
    $region30: #{tpu_custom_call.1} parent=1 // pred_check
      _
    $region31: #{tpu_custom_call.1} parent=1 // pred_check_branch
      %73 = sbr.rel (0) target = $region33
    $region32: #{tpu_custom_call.1} parent=1 // pred_region
      _
    $region33: #{tpu_custom_call.1} parent=1 // pred_fallthru
      _
    // Predicated region
    $region34: #{tpu_custom_call.1} parent=1 // pred_check
      _
    $region35: #{tpu_custom_call.1} parent=1 // pred_check_branch
      %75 = sbr.rel (0) target = $region37
    $region36: #{tpu_custom_call.1} parent=1 // pred_region
      %77 = vsyncadd [#allocation6], 0
      %s78 = sshll.u32 %s8, 4
      %s79 = int_to_ptr.hbm [resolvable:$true] %s78
      %s80 = sshll.u32 [#allocation7], 4
      %s81 = int_to_ptr.vmem [resolvable:$true] %s80
      %86 = dma.hbm_to_vmem [thread:$0]  %s79, 2048, %s81, [#allocation6], 128, 128, 8
    $region37: #{tpu_custom_call.1} parent=1 // pred_fallthru
      _
    // Predicated region
    $region38: #{tpu_custom_call.1} parent=1 // pred_check
      _
    $region39: #{tpu_custom_call.1} parent=1 // pred_check_branch
      %88 = sbr.rel (0) target = $region41
    $region40: #{tpu_custom_call.1} parent=1 // pred_region
      _
    $region41: #{tpu_custom_call.1} parent=1 // pred_fallthru
      _
    // Predicated region
    $region42: #{tpu_custom_call.1} parent=1 // pred_check
      _
    $region43: #{tpu_custom_call.1} parent=1 // pred_check_branch
      %90 = sbr.rel (0) target = $region45
    $region44: #{tpu_custom_call.1} parent=1 // pred_region
      %92 = vsyncadd [#allocation9], 0
      %s93 = sshll.u32 %s10, 4
      %s94 = int_to_ptr.hbm [resolvable:$true] %s93
      %s95 = sshll.u32 [#allocation8], 4
      %s96 = int_to_ptr.vmem [resolvable:$true] %s95
      %101 = dma.hbm_to_vmem [thread:$0]  %s94, 2048, %s96, [#allocation9], 128, 128, 8
    $region45: #{tpu_custom_call.1} parent=1 // pred_fallthru
      _
    // Predicated region
    $region46: #{tpu_custom_call.1} parent=1 // pred_check
      _
    $region47: #{tpu_custom_call.1} parent=1 // pred_check_branch
      %103 = sbr.rel (0) target = $region49
    $region48: #{tpu_custom_call.1} parent=1 // pred_region
      %105 = vsyncadd [#allocation9], 0
      %s107 = sshll.u32 %s11, 4
      %s108 = int_to_ptr.hbm [resolvable:$true] %s107
      %s109 = sshll.u32 [#allocation10], 4
      %s110 = int_to_ptr.vmem [resolvable:$true] %s109
      %112 = dma.hbm_to_vmem [thread:$0]  %s108, 16, %s110, [#allocation9]
    $region49: #{tpu_custom_call.1} parent=1 // pred_fallthru
      _
    // Predicated region
    $region50: #{tpu_custom_call.1} parent=1 // pred_check
      _
    $region51: #{tpu_custom_call.1} parent=1 // pred_check_branch
      %114 = sbr.rel (0) target = $region53
    $region52: #{tpu_custom_call.1} parent=1 // pred_region
      %116 = vsyncadd [#allocation12], 0
      %s117 = sshll.u32 %s12, 4
      %s118 = int_to_ptr.hbm [resolvable:$true] %s117
      %s119 = sshll.u32 [#allocation11], 4
      %s120 = int_to_ptr.vmem [resolvable:$true] %s119
      %125 = dma.hbm_to_vmem [thread:$0]  %s118, 2048, %s120, [#allocation12], 128, 128, 8
    $region53: #{tpu_custom_call.1} parent=1 // pred_fallthru
      _
    // Predicated region
    $region54: #{tpu_custom_call.1} parent=1 // pred_check
      _
    $region55: #{tpu_custom_call.1} parent=1 // pred_check_branch
      %127 = sbr.rel (0) target = $region57
    $region56: #{tpu_custom_call.1} parent=1 // pred_region
      %129 = vsyncadd [#allocation12], 0
      %s131 = sshll.u32 %s13, 4
      %s132 = int_to_ptr.hbm [resolvable:$true] %s131
      %s133 = sshll.u32 [#allocation13], 4
      %s134 = int_to_ptr.vmem [resolvable:$true] %s133
      %136 = dma.hbm_to_vmem [thread:$0]  %s132, 16, %s134, [#allocation12]
    $region57: #{tpu_custom_call.1} parent=1 // pred_fallthru
      _
    // Predicated region
    $region58: #{tpu_custom_call.1} parent=1 // pred_check
      _
    $region59: #{tpu_custom_call.1} parent=1 // pred_check_branch
      %138 = sbr.rel (0) target = $region61
    $region60: #{tpu_custom_call.1} parent=1 // pred_region
      _
    $region61: #{tpu_custom_call.1} parent=1 // pred_fallthru
      _
    // Predicated region
    $region62: #{tpu_custom_call.1} parent=1 // pred_check
      _
    $region63: #{tpu_custom_call.1} parent=1 // pred_check_branch
      %140 = sbr.rel (0) target = $region65
    $region64: #{tpu_custom_call.1} parent=1 // pred_region
      %142 = vsyncadd [#allocation15], 0
      %s143 = sshll.u32 %s15, 4
      %s144 = int_to_ptr.hbm [resolvable:$true] %s143
      %s145 = sshll.u32 [#allocation14], 4
      %s146 = int_to_ptr.vmem [resolvable:$true] %s145
      %151 = dma.hbm_to_vmem [thread:$0]  %s144, 4096, %s146, [#allocation15], 256, 256, 16
    $region65: #{tpu_custom_call.1} parent=1 // pred_fallthru
      _
    // Predicated region
    $region66: #{tpu_custom_call.1} parent=1 // pred_check
      _
    $region67: #{tpu_custom_call.1} parent=1 // pred_check_branch
      %153 = sbr.rel (0) target = $region69
    $region68: #{tpu_custom_call.1} parent=1 // pred_region
      _
    $region69: #{tpu_custom_call.1} parent=1 // pred_fallthru
      _
    // Predicated region
    $region70: #{tpu_custom_call.1} parent=1 // pred_check
      _
    $region71: #{tpu_custom_call.1} parent=1 // pred_check_branch
      %155 = sbr.rel (0) target = $region73
    $region72: #{tpu_custom_call.1} parent=1 // pred_region
      %157 = vsyncadd [#allocation15], 0
      %s158 = sshll.u32 %s17, 4
      %s159 = int_to_ptr.hbm [resolvable:$true] %s158
      %s160 = sshll.u32 [#allocation16], 4
      %s161 = int_to_ptr.vmem [resolvable:$true] %s160
      %166 = dma.hbm_to_vmem [thread:$0]  %s159, 8192, %s161, [#allocation15], 256, 256, 16
    $region73: #{tpu_custom_call.1} parent=1 // pred_fallthru
      _
    // Predicated region
    $region74: #{tpu_custom_call.1} parent=1 // pred_check
      _
    $region75: #{tpu_custom_call.1} parent=1 // pred_check_branch
      %168 = sbr.rel (0) target = $region77
    $region76: #{tpu_custom_call.1} parent=1 // pred_region
      _
    $region77: #{tpu_custom_call.1} parent=1 // pred_fallthru
      _
    // Predicated region
    $region78: #{tpu_custom_call.1} parent=1 // pred_check
      _
    $region79: #{tpu_custom_call.1} parent=1 // pred_check_branch
      %170 = sbr.rel (0) target = $region81
    $region80: #{tpu_custom_call.1} parent=1 // pred_region
      %172 = vsyncadd [#allocation18], 0
      %s173 = sshll.u32 %s19, 4
      %s174 = int_to_ptr.hbm [resolvable:$true] %s173
      %s175 = sshll.u32 [#allocation17], 4
      %s176 = int_to_ptr.vmem [resolvable:$true] %s175
      %181 = dma.hbm_to_vmem [thread:$0]  %s174, 8192, %s176, [#allocation18], 256, 256, 16
    $region81: #{tpu_custom_call.1} parent=1 // pred_fallthru
      _
    // Predicated region
    $region82: #{tpu_custom_call.1} parent=1 // pred_check
      _
    $region83: #{tpu_custom_call.1} parent=1 // pred_check_branch
      %183 = sbr.rel (0) target = $region85
    $region84: #{tpu_custom_call.1} parent=1 // pred_region
      _
    $region85: #{tpu_custom_call.1} parent=1 // pred_fallthru
      _
    // Predicated region
    $region86: #{tpu_custom_call.1} parent=1 // pred_check
      _
    $region87: #{tpu_custom_call.1} parent=1 // pred_check_branch
      %185 = sbr.rel (0) target = $region89
    $region88: #{tpu_custom_call.1} parent=1 // pred_region
      _
    $region89: #{tpu_custom_call.1} parent=1 // pred_fallthru
      _
    // Predicated region
    $region90: #{tpu_custom_call.1} parent=1 // pred_check
      _
    $region91: #{tpu_custom_call.1} parent=1 // pred_check_branch
      %187 = sbr.rel (0) target = $region93
    $region92: #{tpu_custom_call.1} parent=1 // pred_region
      _
    $region93: #{tpu_custom_call.1} parent=1 // pred_fallthru
      _
    // Predicated region
    $region94: #{tpu_custom_call.1} parent=1 // pred_check
      _
    $region95: #{tpu_custom_call.1} parent=1 // pred_check_branch
      %189 = sbr.rel (0) target = $region97
    $region96: #{tpu_custom_call.1} parent=1 // pred_region
      %191 = dma.done [#allocation4], 8192
    $region97: #{tpu_custom_call.1} parent=1 // pred_fallthru
      _
    // Predicated region
    $region98: #{tpu_custom_call.1} parent=1 // pred_check
      _
    $region99: #{tpu_custom_call.1} parent=1 // pred_check_branch
      %193 = sbr.rel (0) target = $region101
    $region100: #{tpu_custom_call.1} parent=1 // pred_region
      %195 = dma.done [#allocation6], 8192
    $region101: #{tpu_custom_call.1} parent=1 // pred_fallthru
      _
    // Predicated region
    $region102: #{tpu_custom_call.1} parent=1 // pred_check
      _
    $region103: #{tpu_custom_call.1} parent=1 // pred_check_branch
      %197 = sbr.rel (0) target = $region105
    $region104: #{tpu_custom_call.1} parent=1 // pred_region
      %199 = dma.done [#allocation6], 2048
    $region105: #{tpu_custom_call.1} parent=1 // pred_fallthru
      _
    // Predicated region
    $region106: #{tpu_custom_call.1} parent=1 // pred_check
      _
    $region107: #{tpu_custom_call.1} parent=1 // pred_check_branch
      %201 = sbr.rel (0) target = $region109
    $region108: #{tpu_custom_call.1} parent=1 // pred_region
      %203 = dma.done [#allocation9], 2048
    $region109: #{tpu_custom_call.1} parent=1 // pred_fallthru
      _
    // Predicated region
    $region110: #{tpu_custom_call.1} parent=1 // pred_check
      _
    $region111: #{tpu_custom_call.1} parent=1 // pred_check_branch
      %205 = sbr.rel (0) target = $region113
    $region112: #{tpu_custom_call.1} parent=1 // pred_region
      %207 = dma.done [#allocation9], 16
    $region113: #{tpu_custom_call.1} parent=1 // pred_fallthru
      _
    // Predicated region
    $region114: #{tpu_custom_call.1} parent=1 // pred_check
      _
    $region115: #{tpu_custom_call.1} parent=1 // pred_check_branch
      %209 = sbr.rel (0) target = $region117
    $region116: #{tpu_custom_call.1} parent=1 // pred_region
      %211 = dma.done [#allocation12], 2048
    $region117: #{tpu_custom_call.1} parent=1 // pred_fallthru
      _
    // Predicated region
    $region118: #{tpu_custom_call.1} parent=1 // pred_check
      _
    $region119: #{tpu_custom_call.1} parent=1 // pred_check_branch
      %213 = sbr.rel (0) target = $region121
    $region120: #{tpu_custom_call.1} parent=1 // pred_region
      %215 = dma.done [#allocation12], 16
    $region121: #{tpu_custom_call.1} parent=1 // pred_fallthru
      _
    // Predicated region
    $region122: #{tpu_custom_call.1} parent=1 // pred_check
      _
    $region123: #{tpu_custom_call.1} parent=1 // pred_check_branch
      %217 = sbr.rel (0) target = $region125
    $region124: #{tpu_custom_call.1} parent=1 // pred_region
      %219 = dma.done [#allocation15], 4096
    $region125: #{tpu_custom_call.1} parent=1 // pred_fallthru
      _
    // Predicated region
    $region126: #{tpu_custom_call.1} parent=1 // pred_check
      _
    $region127: #{tpu_custom_call.1} parent=1 // pred_check_branch
      %221 = sbr.rel (0) target = $region129
    $region128: #{tpu_custom_call.1} parent=1 // pred_region
      %223 = dma.done [#allocation15], 8192
    $region129: #{tpu_custom_call.1} parent=1 // pred_fallthru
      _
    // Predicated region
    $region130: #{tpu_custom_call.1} parent=1 // pred_check
      _
    $region131: #{tpu_custom_call.1} parent=1 // pred_check_branch
      %225 = sbr.rel (0) target = $region133
    $region132: #{tpu_custom_call.1} parent=1 // pred_region
      %227 = dma.done [#allocation18], 8192
    $region133: #{tpu_custom_call.1} parent=1 // pred_fallthru
      _
    %v228 = vld [vmem:[%s0] sm:$0xff]
    %v229 = vld [vmem:[%s0 + $0x8] sm:$0xff]
    %v230 = vld [vmem:[%s2] sm:$0xff]
    %v231 = vld [vmem:[%s2 + $0x8] sm:$0xff]
    %v232 = vld [vmem:[%s4] sm:$0xf]
    %v234 = vperm.slane %v232, 0
    %v235 = vperm.slane %v232, 1
    %v236 = vperm.slane %v232, 2
    %v237 = vperm.slane %v232, 3
    %244 = vst [vmem:[#allocation1] ss:$2 sm:$0xff] %v230
    %s245 = scalar_lea.vmem [#allocation1], 16
    %246 = vst [vmem:[%s245] ss:$2 sm:$0xff] %v231
    %v247 = vld.sshfl [vmem:[#allocation1] sm:$0xff pattern:$0x75316420]
    %v248 = vld.sshfl [vmem:[#allocation1 + $0x8] sm:$0xff pattern:$0x75316420]
    %v249 = vld.sshfl [vmem:[#allocation1 + $0x10] sm:$0xff pattern:$0x75316420]
    %v250 = vld.sshfl [vmem:[#allocation1 + $0x18] sm:$0xff pattern:$0x75316420]
    %vm251 = vcmask 31744
    %v253 = vsel %vm251, %v228, 0
    %v256 = vsel %vm251, %v229, 0
    %vm258 = vcmask 1043456
    %v259 = vsel %vm258, %v247, 0
    %v261 = vsel %vm258, %v248, 0
    %v263 = vsel %vm258, %v249, 0
    %v265 = vsel %vm258, %v250, 0
    %267 = vmatpush.msra.mxu0 0.0
    %268 = vmatpush.msra.mxu0 0.0
    %269 = vmatpush.msra.mxu0 0.0
    %270 = vmatpush.msra.mxu0 0.0
    %271 = vmatpush.msra.mxu0 0.0
    %272 = vmatpush.msra.mxu0 0.0
    %273 = vmatpush.msra.mxu0 0.0
    %274 = vmatpush.msra.mxu0 0.0
    %275 = vmatpush.msra.mxu0 0.0
    %276 = vmatpush.msra.mxu0 0.0
    %277 = vmatpush.msra.mxu0 0.0
    %278 = vmatpush.msra.mxu0 0.0
    %279 = vmatpush.msra.mxu0 0.0
    %280 = vmatpush.msra.mxu0 0.0
    %281 = vmatpush.msra.mxu0 0.0
    %282 = vmatpush.msra.mxu0 %v259
    %283 = vmatmul.f32.gmra.mxu0 %v253
    %v284 = vpop.f32.mrf.mxu0
    %v285 = vadd.f32 %v234, %v284
    %286 = vmatmul.f32.gmra.mxu0 %v256
    %v287 = vpop.f32.mrf.mxu0
    %v288 = vadd.f32 %v234, %v287
    %289 = vdwg.mxu0
    %290 = vmatpush.msra.mxu0 0.0
    %291 = vmatpush.msra.mxu0 0.0
    %292 = vmatpush.msra.mxu0 0.0
    %293 = vmatpush.msra.mxu0 0.0
    %294 = vmatpush.msra.mxu0 0.0
    %295 = vmatpush.msra.mxu0 0.0
    %296 = vmatpush.msra.mxu0 0.0
    %297 = vmatpush.msra.mxu0 0.0
    %298 = vmatpush.msra.mxu0 0.0
    %299 = vmatpush.msra.mxu0 0.0
    %300 = vmatpush.msra.mxu0 0.0
    %301 = vmatpush.msra.mxu0 0.0
    %302 = vmatpush.msra.mxu0 0.0
    %303 = vmatpush.msra.mxu0 0.0
    %304 = vmatpush.msra.mxu0 0.0
    %305 = vmatpush.msra.mxu0 %v261
    %306 = vmatmul.f32.gmra.mxu0 %v253
    %v307 = vpop.f32.mrf.mxu0
    %v308 = vadd.f32 %v235, %v307
    %309 = vmatmul.f32.gmra.mxu0 %v256
    %v310 = vpop.f32.mrf.mxu0
    %v311 = vadd.f32 %v235, %v310
    %312 = vdwg.mxu0
    %313 = vmatpush.msra.mxu0 0.0
    %314 = vmatpush.msra.mxu0 0.0
    %315 = vmatpush.msra.mxu0 0.0
    %316 = vmatpush.msra.mxu0 0.0
    %317 = vmatpush.msra.mxu0 0.0
    %318 = vmatpush.msra.mxu0 0.0
    %319 = vmatpush.msra.mxu0 0.0
    %320 = vmatpush.msra.mxu0 0.0
    %321 = vmatpush.msra.mxu0 0.0
    %322 = vmatpush.msra.mxu0 0.0
    %323 = vmatpush.msra.mxu0 0.0
    %324 = vmatpush.msra.mxu0 0.0
    %325 = vmatpush.msra.mxu0 0.0
    %326 = vmatpush.msra.mxu0 0.0
    %327 = vmatpush.msra.mxu0 0.0
    %328 = vmatpush.msra.mxu0 %v263
    %329 = vmatmul.f32.gmra.mxu0 %v253
    %v330 = vpop.f32.mrf.mxu0
    %v331 = vadd.f32 %v236, %v330
    %332 = vmatmul.f32.gmra.mxu0 %v256
    %v333 = vpop.f32.mrf.mxu0
    %v334 = vadd.f32 %v236, %v333
    %335 = vdwg.mxu0
    %336 = vmatpush.msra.mxu0 0.0
    %337 = vmatpush.msra.mxu0 0.0
    %338 = vmatpush.msra.mxu0 0.0
    %339 = vmatpush.msra.mxu0 0.0
    %340 = vmatpush.msra.mxu0 0.0
    %341 = vmatpush.msra.mxu0 0.0
    %342 = vmatpush.msra.mxu0 0.0
    %343 = vmatpush.msra.mxu0 0.0
    %344 = vmatpush.msra.mxu0 0.0
    %345 = vmatpush.msra.mxu0 0.0
    %346 = vmatpush.msra.mxu0 0.0
    %347 = vmatpush.msra.mxu0 0.0
    %348 = vmatpush.msra.mxu0 0.0
    %349 = vmatpush.msra.mxu0 0.0
    %350 = vmatpush.msra.mxu0 0.0
    %351 = vmatpush.msra.mxu0 %v265
    %352 = vmatmul.f32.gmra.mxu0 %v253
    %v353 = vpop.f32.mrf.mxu0
    %v354 = vadd.f32 %v237, %v353
    %355 = vmatmul.f32.gmra.mxu0 %v256
    %v356 = vpop.f32.mrf.mxu0
    %v357 = vadd.f32 %v237, %v356
    %358 = vdwg.mxu0
    %v359 = vld [vmem:[%s1] sm:$0xff]
    %v360 = vld [vmem:[%s1 + $0x8] sm:$0xff]
    %v361 = vld [vmem:[%s5] sm:$0xff]
    %v362 = vld [vmem:[%s5 + $0x8] sm:$0xff]
    %v363 = vld [vmem:[%s7] sm:$0xf]
    %v365 = vperm.slane %v363, 0
    %v366 = vperm.slane %v363, 1
    %v367 = vperm.slane %v363, 2
    %v368 = vperm.slane %v363, 3
    %375 = vst [vmem:[#allocation1] ss:$2 sm:$0xff] %v361
    %s376 = scalar_lea.vmem [#allocation1], 16
    %377 = vst [vmem:[%s376] ss:$2 sm:$0xff] %v362
    %v378 = vld.sshfl [vmem:[#allocation1] sm:$0xff pattern:$0x75316420]
    %v379 = vld.sshfl [vmem:[#allocation1 + $0x8] sm:$0xff pattern:$0x75316420]
    %v380 = vld.sshfl [vmem:[#allocation1 + $0x10] sm:$0xff pattern:$0x75316420]
    %v381 = vld.sshfl [vmem:[#allocation1 + $0x18] sm:$0xff pattern:$0x75316420]
    %v383 = vsel %vm251, %v359, 0
    %v386 = vsel %vm251, %v360, 0
    %v388 = vsel %vm258, %v378, 0
    %v390 = vsel %vm258, %v379, 0
    %v392 = vsel %vm258, %v380, 0
    %v394 = vsel %vm258, %v381, 0
    %396 = vmatpush.msra.mxu0 0.0
    %397 = vmatpush.msra.mxu0 0.0
    %398 = vmatpush.msra.mxu0 0.0
    %399 = vmatpush.msra.mxu0 0.0
    %400 = vmatpush.msra.mxu0 0.0
    %401 = vmatpush.msra.mxu0 0.0
    %402 = vmatpush.msra.mxu0 0.0
    %403 = vmatpush.msra.mxu0 0.0
    %404 = vmatpush.msra.mxu0 0.0
    %405 = vmatpush.msra.mxu0 0.0
    %406 = vmatpush.msra.mxu0 0.0
    %407 = vmatpush.msra.mxu0 0.0
    %408 = vmatpush.msra.mxu0 0.0
    %409 = vmatpush.msra.mxu0 0.0
    %410 = vmatpush.msra.mxu0 0.0
    %411 = vmatpush.msra.mxu0 %v388
    %412 = vmatmul.f32.gmra.mxu0 %v383
    %v413 = vpop.f32.mrf.mxu0
    %v414 = vadd.f32 %v365, %v413
    %415 = vmatmul.f32.gmra.mxu0 %v386
    %v416 = vpop.f32.mrf.mxu0
    %v417 = vadd.f32 %v365, %v416
    %418 = vdwg.mxu0
    %419 = vmatpush.msra.mxu0 0.0
    %420 = vmatpush.msra.mxu0 0.0
    %421 = vmatpush.msra.mxu0 0.0
    %422 = vmatpush.msra.mxu0 0.0
    %423 = vmatpush.msra.mxu0 0.0
    %424 = vmatpush.msra.mxu0 0.0
    %425 = vmatpush.msra.mxu0 0.0
    %426 = vmatpush.msra.mxu0 0.0
    %427 = vmatpush.msra.mxu0 0.0
    %428 = vmatpush.msra.mxu0 0.0
    %429 = vmatpush.msra.mxu0 0.0
    %430 = vmatpush.msra.mxu0 0.0
    %431 = vmatpush.msra.mxu0 0.0
    %432 = vmatpush.msra.mxu0 0.0
    %433 = vmatpush.msra.mxu0 0.0
    %434 = vmatpush.msra.mxu0 %v390
    %435 = vmatmul.f32.gmra.mxu0 %v383
    %v436 = vpop.f32.mrf.mxu0
    %v437 = vadd.f32 %v366, %v436
    %438 = vmatmul.f32.gmra.mxu0 %v386
    %v439 = vpop.f32.mrf.mxu0
    %v440 = vadd.f32 %v366, %v439
    %441 = vdwg.mxu0
    %442 = vmatpush.msra.mxu0 0.0
    %443 = vmatpush.msra.mxu0 0.0
    %444 = vmatpush.msra.mxu0 0.0
    %445 = vmatpush.msra.mxu0 0.0
    %446 = vmatpush.msra.mxu0 0.0
    %447 = vmatpush.msra.mxu0 0.0
    %448 = vmatpush.msra.mxu0 0.0
    %449 = vmatpush.msra.mxu0 0.0
    %450 = vmatpush.msra.mxu0 0.0
    %451 = vmatpush.msra.mxu0 0.0
    %452 = vmatpush.msra.mxu0 0.0
    %453 = vmatpush.msra.mxu0 0.0
    %454 = vmatpush.msra.mxu0 0.0
    %455 = vmatpush.msra.mxu0 0.0
    %456 = vmatpush.msra.mxu0 0.0
    %457 = vmatpush.msra.mxu0 %v392
    %458 = vmatmul.f32.gmra.mxu0 %v383
    %v459 = vpop.f32.mrf.mxu0
    %v460 = vadd.f32 %v367, %v459
    %461 = vmatmul.f32.gmra.mxu0 %v386
    %v462 = vpop.f32.mrf.mxu0
    %v463 = vadd.f32 %v367, %v462
    %464 = vdwg.mxu0
    %465 = vmatpush.msra.mxu0 0.0
    %466 = vmatpush.msra.mxu0 0.0
    %467 = vmatpush.msra.mxu0 0.0
    %468 = vmatpush.msra.mxu0 0.0
    %469 = vmatpush.msra.mxu0 0.0
    %470 = vmatpush.msra.mxu0 0.0
    %471 = vmatpush.msra.mxu0 0.0
    %472 = vmatpush.msra.mxu0 0.0
    %473 = vmatpush.msra.mxu0 0.0
    %474 = vmatpush.msra.mxu0 0.0
    %475 = vmatpush.msra.mxu0 0.0
    %476 = vmatpush.msra.mxu0 0.0
    %477 = vmatpush.msra.mxu0 0.0
    %478 = vmatpush.msra.mxu0 0.0
    %479 = vmatpush.msra.mxu0 0.0
    %480 = vmatpush.msra.mxu0 %v394
    %481 = vmatmul.f32.gmra.mxu0 %v383
    %v482 = vpop.f32.mrf.mxu0
    %v483 = vadd.f32 %v368, %v482
    %484 = vmatmul.f32.gmra.mxu0 %v386
    %v485 = vpop.f32.mrf.mxu0
    %v486 = vadd.f32 %v368, %v485
    %487 = vdwg.mxu0
    %v488 = vld [vmem:[#allocation3] sm:$0xff]
    %v489 = vld [vmem:[#allocation3 + $0x8] sm:$0xff]
    %v490 = vld [vmem:[#allocation3 + $0x10] sm:$0xff]
    %v491 = vld [vmem:[#allocation3 + $0x18] sm:$0xff]
    %v492 = vld [vmem:[#allocation3 + $0x20] sm:$0xff]
    %v493 = vld [vmem:[#allocation3 + $0x28] sm:$0xff]
    %v494 = vld [vmem:[#allocation3 + $0x30] sm:$0xff]
    %v495 = vld [vmem:[#allocation3 + $0x38] sm:$0xff]
    %v496 = vld [vmem:[#allocation3 + $0x40] sm:$0xff]
    %v497 = vld [vmem:[#allocation3 + $0x48] sm:$0xff]
    %v498 = vld [vmem:[#allocation3 + $0x50] sm:$0xff]
    %v499 = vld [vmem:[#allocation3 + $0x58] sm:$0xff]
    %v500 = vld [vmem:[#allocation3 + $0x60] sm:$0xff]
    %v501 = vld [vmem:[#allocation3 + $0x68] sm:$0xff]
    %v502 = vld [vmem:[#allocation3 + $0x70] sm:$0xff]
    %v503 = vld [vmem:[#allocation3 + $0x78] sm:$0xff]
    %v504 = vld [vmem:[#allocation3 + $0x80] sm:$0xff]
    %v505 = vld [vmem:[#allocation3 + $0x88] sm:$0xff]
    %v506 = vld [vmem:[#allocation3 + $0x90] sm:$0xff]
    %v507 = vld [vmem:[#allocation3 + $0x98] sm:$0xff]
    %v508 = vld [vmem:[#allocation3 + $0xa0] sm:$0xff]
    %v509 = vld [vmem:[#allocation3 + $0xa8] sm:$0xff]
    %v510 = vld [vmem:[#allocation3 + $0xb0] sm:$0xff]
    %v511 = vld [vmem:[#allocation3 + $0xb8] sm:$0xff]
    %v512 = vld [vmem:[#allocation3 + $0xc0] sm:$0xff]
    %v513 = vld [vmem:[#allocation3 + $0xc8] sm:$0xff]
    %v514 = vld [vmem:[#allocation3 + $0xd0] sm:$0xff]
    %v515 = vld [vmem:[#allocation3 + $0xd8] sm:$0xff]
    %v516 = vld [vmem:[#allocation3 + $0xe0] sm:$0xff]
    %v517 = vld [vmem:[#allocation3 + $0xe8] sm:$0xff]
    %v518 = vld [vmem:[#allocation3 + $0xf0] sm:$0xff]
    %v519 = vld [vmem:[#allocation3 + $0xf8] sm:$0xff]
    %v520 = vld [vmem:[#allocation3 + $0x100] sm:$0xff]
    %v521 = vld [vmem:[#allocation3 + $0x108] sm:$0xff]
    %v522 = vld [vmem:[#allocation3 + $0x110] sm:$0xff]
    %v523 = vld [vmem:[#allocation3 + $0x118] sm:$0xff]
    %v524 = vld [vmem:[#allocation3 + $0x120] sm:$0xff]
    %v525 = vld [vmem:[#allocation3 + $0x128] sm:$0xff]
    %v526 = vld [vmem:[#allocation3 + $0x130] sm:$0xff]
    %v527 = vld [vmem:[#allocation3 + $0x138] sm:$0xff]
    %v528 = vld [vmem:[#allocation3 + $0x140] sm:$0xff]
    %v529 = vld [vmem:[#allocation3 + $0x148] sm:$0xff]
    %v530 = vld [vmem:[#allocation3 + $0x150] sm:$0xff]
    %v531 = vld [vmem:[#allocation3 + $0x158] sm:$0xff]
    %v532 = vld [vmem:[#allocation3 + $0x160] sm:$0xff]
    %v533 = vld [vmem:[#allocation3 + $0x168] sm:$0xff]
    %v534 = vld [vmem:[#allocation3 + $0x170] sm:$0xff]
    %v535 = vld [vmem:[#allocation3 + $0x178] sm:$0xff]
    %v536 = vld [vmem:[#allocation3 + $0x180] sm:$0xff]
    %v537 = vld [vmem:[#allocation3 + $0x188] sm:$0xff]
    %v538 = vld [vmem:[#allocation3 + $0x190] sm:$0xff]
    %v539 = vld [vmem:[#allocation3 + $0x198] sm:$0xff]
    %v540 = vld [vmem:[#allocation3 + $0x1a0] sm:$0xff]
    %v541 = vld [vmem:[#allocation3 + $0x1a8] sm:$0xff]
    %v542 = vld [vmem:[#allocation3 + $0x1b0] sm:$0xff]
    %v543 = vld [vmem:[#allocation3 + $0x1b8] sm:$0xff]
    %v544 = vld [vmem:[#allocation3 + $0x1c0] sm:$0xff]
    %v545 = vld [vmem:[#allocation3 + $0x1c8] sm:$0xff]
    %v546 = vld [vmem:[#allocation3 + $0x1d0] sm:$0xff]
    %v547 = vld [vmem:[#allocation3 + $0x1d8] sm:$0xff]
    %v548 = vld [vmem:[#allocation3 + $0x1e0] sm:$0xff]
    %v549 = vld [vmem:[#allocation3 + $0x1e8] sm:$0xff]
    %v550 = vld [vmem:[#allocation3 + $0x1f0] sm:$0xff]
    %v551 = vld [vmem:[#allocation3 + $0x1f8] sm:$0xff]
    %v552 = vld [vmem:[#allocation5] sm:$0xff]
    %v553 = vld [vmem:[#allocation5 + $0x8] sm:$0xff]
    %v554 = vld [vmem:[#allocation5 + $0x10] sm:$0xff]
    %v555 = vld [vmem:[#allocation5 + $0x18] sm:$0xff]
    %v556 = vld [vmem:[#allocation5 + $0x20] sm:$0xff]
    %v557 = vld [vmem:[#allocation5 + $0x28] sm:$0xff]
    %v558 = vld [vmem:[#allocation5 + $0x30] sm:$0xff]
    %v559 = vld [vmem:[#allocation5 + $0x38] sm:$0xff]
    %v560 = vld [vmem:[#allocation5 + $0x40] sm:$0xff]
    %v561 = vld [vmem:[#allocation5 + $0x48] sm:$0xff]
    %v562 = vld [vmem:[#allocation5 + $0x50] sm:$0xff]
    %v563 = vld [vmem:[#allocation5 + $0x58] sm:$0xff]
    %v564 = vld [vmem:[#allocation5 + $0x60] sm:$0xff]
    %v565 = vld [vmem:[#allocation5 + $0x68] sm:$0xff]
    %v566 = vld [vmem:[#allocation5 + $0x70] sm:$0xff]
    %v567 = vld [vmem:[#allocation5 + $0x78] sm:$0xff]
    %v568 = vld [vmem:[#allocation5 + $0x80] sm:$0xff]
    %v569 = vld [vmem:[#allocation5 + $0x88] sm:$0xff]
    %v570 = vld [vmem:[#allocation5 + $0x90] sm:$0xff]
    %v571 = vld [vmem:[#allocation5 + $0x98] sm:$0xff]
    %v572 = vld [vmem:[#allocation5 + $0xa0] sm:$0xff]
    %v573 = vld [vmem:[#allocation5 + $0xa8] sm:$0xff]
    %v574 = vld [vmem:[#allocation5 + $0xb0] sm:$0xff]
    %v575 = vld [vmem:[#allocation5 + $0xb8] sm:$0xff]
    %v576 = vld [vmem:[#allocation5 + $0xc0] sm:$0xff]
    %v577 = vld [vmem:[#allocation5 + $0xc8] sm:$0xff]
    %v578 = vld [vmem:[#allocation5 + $0xd0] sm:$0xff]
    %v579 = vld [vmem:[#allocation5 + $0xd8] sm:$0xff]
    %v580 = vld [vmem:[#allocation5 + $0xe0] sm:$0xff]
    %v581 = vld [vmem:[#allocation5 + $0xe8] sm:$0xff]
    %v582 = vld [vmem:[#allocation5 + $0xf0] sm:$0xff]
    %v583 = vld [vmem:[#allocation5 + $0xf8] sm:$0xff]
    %v584 = vld [vmem:[#allocation5 + $0x100] sm:$0xff]
    %v585 = vld [vmem:[#allocation5 + $0x108] sm:$0xff]
    %v586 = vld [vmem:[#allocation5 + $0x110] sm:$0xff]
    %v587 = vld [vmem:[#allocation5 + $0x118] sm:$0xff]
    %v588 = vld [vmem:[#allocation5 + $0x120] sm:$0xff]
    %v589 = vld [vmem:[#allocation5 + $0x128] sm:$0xff]
    %v590 = vld [vmem:[#allocation5 + $0x130] sm:$0xff]
    %v591 = vld [vmem:[#allocation5 + $0x138] sm:$0xff]
    %v592 = vld [vmem:[#allocation5 + $0x140] sm:$0xff]
    %v593 = vld [vmem:[#allocation5 + $0x148] sm:$0xff]
    %v594 = vld [vmem:[#allocation5 + $0x150] sm:$0xff]
    %v595 = vld [vmem:[#allocation5 + $0x158] sm:$0xff]
    %v596 = vld [vmem:[#allocation5 + $0x160] sm:$0xff]
    %v597 = vld [vmem:[#allocation5 + $0x168] sm:$0xff]
    %v598 = vld [vmem:[#allocation5 + $0x170] sm:$0xff]
    %v599 = vld [vmem:[#allocation5 + $0x178] sm:$0xff]
    %v600 = vld [vmem:[#allocation5 + $0x180] sm:$0xff]
    %v601 = vld [vmem:[#allocation5 + $0x188] sm:$0xff]
    %v602 = vld [vmem:[#allocation5 + $0x190] sm:$0xff]
    %v603 = vld [vmem:[#allocation5 + $0x198] sm:$0xff]
    %v604 = vld [vmem:[#allocation5 + $0x1a0] sm:$0xff]
    %v605 = vld [vmem:[#allocation5 + $0x1a8] sm:$0xff]
    %v606 = vld [vmem:[#allocation5 + $0x1b0] sm:$0xff]
    %v607 = vld [vmem:[#allocation5 + $0x1b8] sm:$0xff]
    %v608 = vld [vmem:[#allocation5 + $0x1c0] sm:$0xff]
    %v609 = vld [vmem:[#allocation5 + $0x1c8] sm:$0xff]
    %v610 = vld [vmem:[#allocation5 + $0x1d0] sm:$0xff]
    %v611 = vld [vmem:[#allocation5 + $0x1d8] sm:$0xff]
    %v612 = vld [vmem:[#allocation5 + $0x1e0] sm:$0xff]
    %v613 = vld [vmem:[#allocation5 + $0x1e8] sm:$0xff]
    %v614 = vld [vmem:[#allocation5 + $0x1f0] sm:$0xff]
    %v615 = vld [vmem:[#allocation5 + $0x1f8] sm:$0xff]
    %616 = vmatpush.msra.mxu0 %v548
    %617 = vmatpush.msra.mxu0 %v544
    %618 = vmatpush.msra.mxu0 %v540
    %619 = vmatpush.msra.mxu0 %v536
    %620 = vmatpush.msra.mxu0 %v532
    %621 = vmatpush.msra.mxu0 %v528
    %622 = vmatpush.msra.mxu0 %v524
    %623 = vmatpush.msra.mxu0 %v520
    %624 = vmatpush.msra.mxu0 %v516
    %625 = vmatpush.msra.mxu0 %v512
    %626 = vmatpush.msra.mxu0 %v508
    %627 = vmatpush.msra.mxu0 %v504
    %628 = vmatpush.msra.mxu0 %v500
    %629 = vmatpush.msra.mxu0 %v496
    %630 = vmatpush.msra.mxu0 %v492
    %631 = vmatpush.msra.mxu0 %v488
    %632 = vmatmul.f32.gmra.mxu0 0.0
    %v633 = vpop.f32.mrf.mxu0
    %v634 = vadd.f32 0.0, %v633
    %635 = vdwg.mxu0
    %636 = vmatpush.msra.mxu0 %v549
    %637 = vmatpush.msra.mxu0 %v545
    %638 = vmatpush.msra.mxu0 %v541
    %639 = vmatpush.msra.mxu0 %v537
    %640 = vmatpush.msra.mxu0 %v533
    %641 = vmatpush.msra.mxu0 %v529
    %642 = vmatpush.msra.mxu0 %v525
    %643 = vmatpush.msra.mxu0 %v521
    %644 = vmatpush.msra.mxu0 %v517
    %645 = vmatpush.msra.mxu0 %v513
    %646 = vmatpush.msra.mxu0 %v509
    %647 = vmatpush.msra.mxu0 %v505
    %648 = vmatpush.msra.mxu0 %v501
    %649 = vmatpush.msra.mxu0 %v497
    %650 = vmatpush.msra.mxu0 %v493
    %651 = vmatpush.msra.mxu0 %v489
    %652 = vmatmul.f32.gmra.mxu0 0.0
    %v653 = vpop.f32.mrf.mxu0
    %v654 = vadd.f32 0.0, %v653
    %655 = vdwg.mxu0
    %656 = vmatpush.msra.mxu0 %v550
    %657 = vmatpush.msra.mxu0 %v546
    %658 = vmatpush.msra.mxu0 %v542
    %659 = vmatpush.msra.mxu0 %v538
    %660 = vmatpush.msra.mxu0 %v534
    %661 = vmatpush.msra.mxu0 %v530
    %662 = vmatpush.msra.mxu0 %v526
    %663 = vmatpush.msra.mxu0 %v522
    %664 = vmatpush.msra.mxu0 %v518
    %665 = vmatpush.msra.mxu0 %v514
    %666 = vmatpush.msra.mxu0 %v510
    %667 = vmatpush.msra.mxu0 %v506
    %668 = vmatpush.msra.mxu0 %v502
    %669 = vmatpush.msra.mxu0 %v498
    %670 = vmatpush.msra.mxu0 %v494
    %671 = vmatpush.msra.mxu0 %v490
    %672 = vmatmul.f32.gmra.mxu0 0.0
    %v673 = vpop.f32.mrf.mxu0
    %v674 = vadd.f32 0.0, %v673
    %675 = vdwg.mxu0
    %676 = vmatpush.msra.mxu0 %v551
    %677 = vmatpush.msra.mxu0 %v547
    %678 = vmatpush.msra.mxu0 %v543
    %679 = vmatpush.msra.mxu0 %v539
    %680 = vmatpush.msra.mxu0 %v535
    %681 = vmatpush.msra.mxu0 %v531
    %682 = vmatpush.msra.mxu0 %v527
    %683 = vmatpush.msra.mxu0 %v523
    %684 = vmatpush.msra.mxu0 %v519
    %685 = vmatpush.msra.mxu0 %v515
    %686 = vmatpush.msra.mxu0 %v511
    %687 = vmatpush.msra.mxu0 %v507
    %688 = vmatpush.msra.mxu0 %v503
    %689 = vmatpush.msra.mxu0 %v499
    %690 = vmatpush.msra.mxu0 %v495
    %691 = vmatpush.msra.mxu0 %v491
    %692 = vmatmul.f32.gmra.mxu0 0.0
    %v693 = vpop.f32.mrf.mxu0
    %v694 = vadd.f32 0.0, %v693
    %695 = vdwg.mxu0
    %v696 = vadd.f32 %v285, %v634
    %v697 = vadd.f32 %v308, %v654
    %v698 = vadd.f32 %v331, %v674
    %v699 = vadd.f32 %v354, %v694
    %700 = vmatpush.msra.mxu0 %v612
    %701 = vmatpush.msra.mxu0 %v608
    %702 = vmatpush.msra.mxu0 %v604
    %703 = vmatpush.msra.mxu0 %v600
    %704 = vmatpush.msra.mxu0 %v596
    %705 = vmatpush.msra.mxu0 %v592
    %706 = vmatpush.msra.mxu0 %v588
    %707 = vmatpush.msra.mxu0 %v584
    %708 = vmatpush.msra.mxu0 %v580
    %709 = vmatpush.msra.mxu0 %v576
    %710 = vmatpush.msra.mxu0 %v572
    %711 = vmatpush.msra.mxu0 %v568
    %712 = vmatpush.msra.mxu0 %v564
    %713 = vmatpush.msra.mxu0 %v560
    %714 = vmatpush.msra.mxu0 %v556
    %715 = vmatpush.msra.mxu0 %v552
    %716 = vmatmul.f32.gmra.mxu0 0.0
    %v717 = vpop.f32.mrf.mxu0
    %v718 = vadd.f32 0.0, %v717
    %719 = vdwg.mxu0
    %720 = vmatpush.msra.mxu0 %v613
    %721 = vmatpush.msra.mxu0 %v609
    %722 = vmatpush.msra.mxu0 %v605
    %723 = vmatpush.msra.mxu0 %v601
    %724 = vmatpush.msra.mxu0 %v597
    %725 = vmatpush.msra.mxu0 %v593
    %726 = vmatpush.msra.mxu0 %v589
    %727 = vmatpush.msra.mxu0 %v585
    %728 = vmatpush.msra.mxu0 %v581
    %729 = vmatpush.msra.mxu0 %v577
    %730 = vmatpush.msra.mxu0 %v573
    %731 = vmatpush.msra.mxu0 %v569
    %732 = vmatpush.msra.mxu0 %v565
    %733 = vmatpush.msra.mxu0 %v561
    %734 = vmatpush.msra.mxu0 %v557
    %735 = vmatpush.msra.mxu0 %v553
    %736 = vmatmul.f32.gmra.mxu0 0.0
    %v737 = vpop.f32.mrf.mxu0
    %v738 = vadd.f32 0.0, %v737
    %739 = vdwg.mxu0
    %740 = vmatpush.msra.mxu0 %v614
    %741 = vmatpush.msra.mxu0 %v610
    %742 = vmatpush.msra.mxu0 %v606
    %743 = vmatpush.msra.mxu0 %v602
    %744 = vmatpush.msra.mxu0 %v598
    %745 = vmatpush.msra.mxu0 %v594
    %746 = vmatpush.msra.mxu0 %v590
    %747 = vmatpush.msra.mxu0 %v586
    %748 = vmatpush.msra.mxu0 %v582
    %749 = vmatpush.msra.mxu0 %v578
    %750 = vmatpush.msra.mxu0 %v574
    %751 = vmatpush.msra.mxu0 %v570
    %752 = vmatpush.msra.mxu0 %v566
    %753 = vmatpush.msra.mxu0 %v562
    %754 = vmatpush.msra.mxu0 %v558
    %755 = vmatpush.msra.mxu0 %v554
    %756 = vmatmul.f32.gmra.mxu0 0.0
    %v757 = vpop.f32.mrf.mxu0
    %v758 = vadd.f32 0.0, %v757
    %759 = vdwg.mxu0
    %760 = vmatpush.msra.mxu0 %v615
    %761 = vmatpush.msra.mxu0 %v611
    %762 = vmatpush.msra.mxu0 %v607
    %763 = vmatpush.msra.mxu0 %v603
    %764 = vmatpush.msra.mxu0 %v599
    %765 = vmatpush.msra.mxu0 %v595
    %766 = vmatpush.msra.mxu0 %v591
    %767 = vmatpush.msra.mxu0 %v587
    %768 = vmatpush.msra.mxu0 %v583
    %769 = vmatpush.msra.mxu0 %v579
    %770 = vmatpush.msra.mxu0 %v575
    %771 = vmatpush.msra.mxu0 %v571
    %772 = vmatpush.msra.mxu0 %v567
    %773 = vmatpush.msra.mxu0 %v563
    %774 = vmatpush.msra.mxu0 %v559
    %775 = vmatpush.msra.mxu0 %v555
    %776 = vmatmul.f32.gmra.mxu0 0.0
    %v777 = vpop.f32.mrf.mxu0
    %v778 = vadd.f32 0.0, %v777
    %779 = vdwg.mxu0
    %v780 = vadd.f32 %v414, %v718
    %v781 = vadd.f32 %v437, %v738
    %v782 = vadd.f32 %v460, %v758
    %v783 = vadd.f32 %v483, %v778
    %v784 = vxor.u32 %v696, 2147483648
    %v785 = vmul.f32 %v784, 1.442695
    %v786 = vpow.pop %v785
    %v787 = vadd.f32 %v786, 1.0
    %v788 = vrcp.pop %v787
    %v789 = vmul.f32 %v787, %v788
    %v790 = vsub.f32 1.0, %v789
    %v791 = vmul.f32 %v788, %v790
    %v792 = vadd.f32 %v788, %v791
    %vm793 = vweird.f32 %v787
    %vm794 = vweird.f32 %v788
    %vm795 = vmor %vm793, %vm794
    %v796 = vsel %vm795, %v788, %v792
    %v797 = vand.u32 2147483647, %v787
    %vm798 = vcmp.eq.f32.partialorder %v797, 8.507059e+37
    %v799 = vand.u32 %v787, 2147483648
    %v800 = vor.u32 1.1754944e-38, %v799
    %v801 = vsel %vm798, %v800, %v796
    %v802 = vmul.f32 1.0, %v801
    %v803 = vxor.u32 %v697, 2147483648
    %v804 = vmul.f32 %v803, 1.442695
    %v805 = vpow.pop %v804
    %v806 = vadd.f32 %v805, 1.0
    %v807 = vrcp.pop %v806
    %v808 = vmul.f32 %v806, %v807
    %v809 = vsub.f32 1.0, %v808
    %v810 = vmul.f32 %v807, %v809
    %v811 = vadd.f32 %v807, %v810
    %vm812 = vweird.f32 %v806
    %vm813 = vweird.f32 %v807
    %vm814 = vmor %vm812, %vm813
    %v815 = vsel %vm814, %v807, %v811
    %v816 = vand.u32 2147483647, %v806
    %vm817 = vcmp.eq.f32.partialorder %v816, 8.507059e+37
    %v818 = vand.u32 %v806, 2147483648
    %v819 = vor.u32 1.1754944e-38, %v818
    %v820 = vsel %vm817, %v819, %v815
    %v821 = vmul.f32 1.0, %v820
    %v822 = vtanh.pop %v698
    %v823 = vxor.u32 %v699, 2147483648
    %v824 = vmul.f32 %v823, 1.442695
    %v825 = vpow.pop %v824
    %v826 = vadd.f32 %v825, 1.0
    %v827 = vrcp.pop %v826
    %v828 = vmul.f32 %v826, %v827
    %v829 = vsub.f32 1.0, %v828
    %v830 = vmul.f32 %v827, %v829
    %v831 = vadd.f32 %v827, %v830
    %vm832 = vweird.f32 %v826
    %vm833 = vweird.f32 %v827
    %vm834 = vmor %vm832, %vm833
    %v835 = vsel %vm834, %v827, %v831
    %v836 = vand.u32 2147483647, %v826
    %vm837 = vcmp.eq.f32.partialorder %v836, 8.507059e+37
    %v838 = vand.u32 %v826, 2147483648
    %v839 = vor.u32 1.1754944e-38, %v838
    %v840 = vsel %vm837, %v839, %v835
    %v841 = vmul.f32 1.0, %v840
    %v842 = vmul.f32 %v821, 0.0
    %v843 = vmul.f32 %v802, %v822
    %v844 = vadd.f32 %v842, %v843
    %v845 = vtanh.pop %v844
    %v846 = vmul.f32 %v841, %v845
    %v847 = vxor.u32 %v780, 2147483648
    %v848 = vmul.f32 %v847, 1.442695
    %v849 = vpow.pop %v848
    %v850 = vadd.f32 %v849, 1.0
    %v851 = vrcp.pop %v850
    %v852 = vmul.f32 %v850, %v851
    %v853 = vsub.f32 1.0, %v852
    %v854 = vmul.f32 %v851, %v853
    %v855 = vadd.f32 %v851, %v854
    %vm856 = vweird.f32 %v850
    %vm857 = vweird.f32 %v851
    %vm858 = vmor %vm856, %vm857
    %v859 = vsel %vm858, %v851, %v855
    %v860 = vand.u32 2147483647, %v850
    %vm861 = vcmp.eq.f32.partialorder %v860, 8.507059e+37
    %v862 = vand.u32 %v850, 2147483648
    %v863 = vor.u32 1.1754944e-38, %v862
    %v864 = vsel %vm861, %v863, %v859
    %v865 = vmul.f32 1.0, %v864
    %v866 = vxor.u32 %v781, 2147483648
    %v867 = vmul.f32 %v866, 1.442695
    %v868 = vpow.pop %v867
    %v869 = vadd.f32 %v868, 1.0
    %v870 = vrcp.pop %v869
    %v871 = vmul.f32 %v869, %v870
    %v872 = vsub.f32 1.0, %v871
    %v873 = vmul.f32 %v870, %v872
    %v874 = vadd.f32 %v870, %v873
    %vm875 = vweird.f32 %v869
    %vm876 = vweird.f32 %v870
    %vm877 = vmor %vm875, %vm876
    %v878 = vsel %vm877, %v870, %v874
    %v879 = vand.u32 2147483647, %v869
    %vm880 = vcmp.eq.f32.partialorder %v879, 8.507059e+37
    %v881 = vand.u32 %v869, 2147483648
    %v882 = vor.u32 1.1754944e-38, %v881
    %v883 = vsel %vm880, %v882, %v878
    %v884 = vmul.f32 1.0, %v883
    %v885 = vtanh.pop %v782
    %v886 = vxor.u32 %v783, 2147483648
    %v887 = vmul.f32 %v886, 1.442695
    %v888 = vpow.pop %v887
    %v889 = vadd.f32 %v888, 1.0
    %v890 = vrcp.pop %v889
    %v891 = vmul.f32 %v889, %v890
    %v892 = vsub.f32 1.0, %v891
    %v893 = vmul.f32 %v890, %v892
    %v894 = vadd.f32 %v890, %v893
    %vm895 = vweird.f32 %v889
    %vm896 = vweird.f32 %v890
    %vm897 = vmor %vm895, %vm896
    %v898 = vsel %vm897, %v890, %v894
    %v899 = vand.u32 2147483647, %v889
    %vm900 = vcmp.eq.f32.partialorder %v899, 8.507059e+37
    %v901 = vand.u32 %v889, 2147483648
    %v902 = vor.u32 1.1754944e-38, %v901
    %v903 = vsel %vm900, %v902, %v898
    %v904 = vmul.f32 1.0, %v903
    %v905 = vmul.f32 %v884, 0.0
    %v906 = vmul.f32 %v865, %v885
    %v907 = vadd.f32 %v905, %v906
    %v908 = vtanh.pop %v907
    %v909 = vmul.f32 %v904, %v908
    %910 = vmatpush.msra.mxu0 %v548
    %911 = vmatpush.msra.mxu0 %v544
    %912 = vmatpush.msra.mxu0 %v540
    %913 = vmatpush.msra.mxu0 %v536
    %914 = vmatpush.msra.mxu0 %v532
    %915 = vmatpush.msra.mxu0 %v528
    %916 = vmatpush.msra.mxu0 %v524
    %917 = vmatpush.msra.mxu0 %v520
    %918 = vmatpush.msra.mxu0 %v516
    %919 = vmatpush.msra.mxu0 %v512
    %920 = vmatpush.msra.mxu0 %v508
    %921 = vmatpush.msra.mxu0 %v504
    %922 = vmatpush.msra.mxu0 %v500
    %923 = vmatpush.msra.mxu0 %v496
    %924 = vmatpush.msra.mxu0 %v492
    %925 = vmatpush.msra.mxu0 %v488
    %926 = vmatmul.f32.gmra.mxu0 %v846
    %v927 = vpop.f32.mrf.mxu0
    %v928 = vadd.f32 0.0, %v927
    %929 = vdwg.mxu0
    %930 = vmatpush.msra.mxu0 %v549
    %931 = vmatpush.msra.mxu0 %v545
    %932 = vmatpush.msra.mxu0 %v541
    %933 = vmatpush.msra.mxu0 %v537
    %934 = vmatpush.msra.mxu0 %v533
    %935 = vmatpush.msra.mxu0 %v529
    %936 = vmatpush.msra.mxu0 %v525
    %937 = vmatpush.msra.mxu0 %v521
    %938 = vmatpush.msra.mxu0 %v517
    %939 = vmatpush.msra.mxu0 %v513
    %940 = vmatpush.msra.mxu0 %v509
    %941 = vmatpush.msra.mxu0 %v505
    %942 = vmatpush.msra.mxu0 %v501
    %943 = vmatpush.msra.mxu0 %v497
    %944 = vmatpush.msra.mxu0 %v493
    %945 = vmatpush.msra.mxu0 %v489
    %946 = vmatmul.f32.gmra.mxu0 %v846
    %v947 = vpop.f32.mrf.mxu0
    %v948 = vadd.f32 0.0, %v947
    %949 = vdwg.mxu0
    %950 = vmatpush.msra.mxu0 %v550
    %951 = vmatpush.msra.mxu0 %v546
    %952 = vmatpush.msra.mxu0 %v542
    %953 = vmatpush.msra.mxu0 %v538
    %954 = vmatpush.msra.mxu0 %v534
    %955 = vmatpush.msra.mxu0 %v530
    %956 = vmatpush.msra.mxu0 %v526
    %957 = vmatpush.msra.mxu0 %v522
    %958 = vmatpush.msra.mxu0 %v518
    %959 = vmatpush.msra.mxu0 %v514
    %960 = vmatpush.msra.mxu0 %v510
    %961 = vmatpush.msra.mxu0 %v506
    %962 = vmatpush.msra.mxu0 %v502
    %963 = vmatpush.msra.mxu0 %v498
    %964 = vmatpush.msra.mxu0 %v494
    %965 = vmatpush.msra.mxu0 %v490
    %966 = vmatmul.f32.gmra.mxu0 %v846
    %v967 = vpop.f32.mrf.mxu0
    %v968 = vadd.f32 0.0, %v967
    %969 = vdwg.mxu0
    %970 = vmatpush.msra.mxu0 %v551
    %971 = vmatpush.msra.mxu0 %v547
    %972 = vmatpush.msra.mxu0 %v543
    %973 = vmatpush.msra.mxu0 %v539
    %974 = vmatpush.msra.mxu0 %v535
    %975 = vmatpush.msra.mxu0 %v531
    %976 = vmatpush.msra.mxu0 %v527
    %977 = vmatpush.msra.mxu0 %v523
    %978 = vmatpush.msra.mxu0 %v519
    %979 = vmatpush.msra.mxu0 %v515
    %980 = vmatpush.msra.mxu0 %v511
    %981 = vmatpush.msra.mxu0 %v507
    %982 = vmatpush.msra.mxu0 %v503
    %983 = vmatpush.msra.mxu0 %v499
    %984 = vmatpush.msra.mxu0 %v495
    %985 = vmatpush.msra.mxu0 %v491
    %986 = vmatmul.f32.gmra.mxu0 %v846
    %v987 = vpop.f32.mrf.mxu0
    %v988 = vadd.f32 0.0, %v987
    %989 = vdwg.mxu0
    %v994 = vrot.slane %v928, 6
    %v995 = vrot.slane %v948, 6
    %v996 = vrot.slane %v968, 6
    %v997 = vrot.slane %v988, 6
    %v1002 = vadd.f32 %v285, %v994
    %v1003 = vadd.f32 %v308, %v995
    %v1004 = vadd.f32 %v331, %v996
    %v1005 = vadd.f32 %v354, %v997
    %1006 = vmatpush.msra.mxu0 %v612
    %1007 = vmatpush.msra.mxu0 %v608
    %1008 = vmatpush.msra.mxu0 %v604
    %1009 = vmatpush.msra.mxu0 %v600
    %1010 = vmatpush.msra.mxu0 %v596
    %1011 = vmatpush.msra.mxu0 %v592
    %1012 = vmatpush.msra.mxu0 %v588
    %1013 = vmatpush.msra.mxu0 %v584
    %1014 = vmatpush.msra.mxu0 %v580
    %1015 = vmatpush.msra.mxu0 %v576
    %1016 = vmatpush.msra.mxu0 %v572
    %1017 = vmatpush.msra.mxu0 %v568
    %1018 = vmatpush.msra.mxu0 %v564
    %1019 = vmatpush.msra.mxu0 %v560
    %1020 = vmatpush.msra.mxu0 %v556
    %1021 = vmatpush.msra.mxu0 %v552
    %1022 = vmatmul.f32.gmra.mxu0 %v909
    %v1023 = vpop.f32.mrf.mxu0
    %v1024 = vadd.f32 0.0, %v1023
    %1025 = vdwg.mxu0
    %1026 = vmatpush.msra.mxu0 %v613
    %1027 = vmatpush.msra.mxu0 %v609
    %1028 = vmatpush.msra.mxu0 %v605
    %1029 = vmatpush.msra.mxu0 %v601
    %1030 = vmatpush.msra.mxu0 %v597
    %1031 = vmatpush.msra.mxu0 %v593
    %1032 = vmatpush.msra.mxu0 %v589
    %1033 = vmatpush.msra.mxu0 %v585
    %1034 = vmatpush.msra.mxu0 %v581
    %1035 = vmatpush.msra.mxu0 %v577
    %1036 = vmatpush.msra.mxu0 %v573
    %1037 = vmatpush.msra.mxu0 %v569
    %1038 = vmatpush.msra.mxu0 %v565
    %1039 = vmatpush.msra.mxu0 %v561
    %1040 = vmatpush.msra.mxu0 %v557
    %1041 = vmatpush.msra.mxu0 %v553
    %1042 = vmatmul.f32.gmra.mxu0 %v909
    %v1043 = vpop.f32.mrf.mxu0
    %v1044 = vadd.f32 0.0, %v1043
    %1045 = vdwg.mxu0
    %1046 = vmatpush.msra.mxu0 %v614
    %1047 = vmatpush.msra.mxu0 %v610
    %1048 = vmatpush.msra.mxu0 %v606
    %1049 = vmatpush.msra.mxu0 %v602
    %1050 = vmatpush.msra.mxu0 %v598
    %1051 = vmatpush.msra.mxu0 %v594
    %1052 = vmatpush.msra.mxu0 %v590
    %1053 = vmatpush.msra.mxu0 %v586
    %1054 = vmatpush.msra.mxu0 %v582
    %1055 = vmatpush.msra.mxu0 %v578
    %1056 = vmatpush.msra.mxu0 %v574
    %1057 = vmatpush.msra.mxu0 %v570
    %1058 = vmatpush.msra.mxu0 %v566
    %1059 = vmatpush.msra.mxu0 %v562
    %1060 = vmatpush.msra.mxu0 %v558
    %1061 = vmatpush.msra.mxu0 %v554
    %1062 = vmatmul.f32.gmra.mxu0 %v909
    %v1063 = vpop.f32.mrf.mxu0
    %v1064 = vadd.f32 0.0, %v1063
    %1065 = vdwg.mxu0
    %1066 = vmatpush.msra.mxu0 %v615
    %1067 = vmatpush.msra.mxu0 %v611
    %1068 = vmatpush.msra.mxu0 %v607
    %1069 = vmatpush.msra.mxu0 %v603
    %1070 = vmatpush.msra.mxu0 %v599
    %1071 = vmatpush.msra.mxu0 %v595
    %1072 = vmatpush.msra.mxu0 %v591
    %1073 = vmatpush.msra.mxu0 %v587
    %1074 = vmatpush.msra.mxu0 %v583
    %1075 = vmatpush.msra.mxu0 %v579
    %1076 = vmatpush.msra.mxu0 %v575
    %1077 = vmatpush.msra.mxu0 %v571
    %1078 = vmatpush.msra.mxu0 %v567
    %1079 = vmatpush.msra.mxu0 %v563
    %1080 = vmatpush.msra.mxu0 %v559
    %1081 = vmatpush.msra.mxu0 %v555
    %1082 = vmatmul.f32.gmra.mxu0 %v909
    %v1083 = vpop.f32.mrf.mxu0
    %v1084 = vadd.f32 0.0, %v1083
    %1085 = vdwg.mxu0
    %v1090 = vrot.slane %v1024, 6
    %v1091 = vrot.slane %v1044, 6
    %v1092 = vrot.slane %v1064, 6
    %v1093 = vrot.slane %v1084, 6
    %v1098 = vadd.f32 %v414, %v1090
    %v1099 = vadd.f32 %v437, %v1091
    %v1100 = vadd.f32 %v460, %v1092
    %v1101 = vadd.f32 %v483, %v1093
    %v1102 = vxor.u32 %v1002, 2147483648
    %v1103 = vmul.f32 %v1102, 1.442695
    %v1104 = vpow.pop %v1103
    %v1105 = vadd.f32 %v1104, 1.0
    %v1106 = vrcp.pop %v1105
    %v1107 = vmul.f32 %v1105, %v1106
    %v1108 = vsub.f32 1.0, %v1107
    %v1109 = vmul.f32 %v1106, %v1108
    %v1110 = vadd.f32 %v1106, %v1109
    %vm1111 = vweird.f32 %v1105
    %vm1112 = vweird.f32 %v1106
    %vm1113 = vmor %vm1111, %vm1112
    %v1114 = vsel %vm1113, %v1106, %v1110
    %v1115 = vand.u32 2147483647, %v1105
    %vm1116 = vcmp.eq.f32.partialorder %v1115, 8.507059e+37
    %v1117 = vand.u32 %v1105, 2147483648
    %v1118 = vor.u32 1.1754944e-38, %v1117
    %v1119 = vsel %vm1116, %v1118, %v1114
    %v1120 = vmul.f32 1.0, %v1119
    %v1121 = vxor.u32 %v1003, 2147483648
    %v1122 = vmul.f32 %v1121, 1.442695
    %v1123 = vpow.pop %v1122
    %v1124 = vadd.f32 %v1123, 1.0
    %v1125 = vrcp.pop %v1124
    %v1126 = vmul.f32 %v1124, %v1125
    %v1127 = vsub.f32 1.0, %v1126
    %v1128 = vmul.f32 %v1125, %v1127
    %v1129 = vadd.f32 %v1125, %v1128
    %vm1130 = vweird.f32 %v1124
    %vm1131 = vweird.f32 %v1125
    %vm1132 = vmor %vm1130, %vm1131
    %v1133 = vsel %vm1132, %v1125, %v1129
    %v1134 = vand.u32 2147483647, %v1124
    %vm1135 = vcmp.eq.f32.partialorder %v1134, 8.507059e+37
    %v1136 = vand.u32 %v1124, 2147483648
    %v1137 = vor.u32 1.1754944e-38, %v1136
    %v1138 = vsel %vm1135, %v1137, %v1133
    %v1139 = vmul.f32 1.0, %v1138
    %v1140 = vtanh.pop %v1004
    %v1141 = vxor.u32 %v1005, 2147483648
    %v1142 = vmul.f32 %v1141, 1.442695
    %v1143 = vpow.pop %v1142
    %v1144 = vadd.f32 %v1143, 1.0
    %v1145 = vrcp.pop %v1144
    %v1146 = vmul.f32 %v1144, %v1145
    %v1147 = vsub.f32 1.0, %v1146
    %v1148 = vmul.f32 %v1145, %v1147
    %v1149 = vadd.f32 %v1145, %v1148
    %vm1150 = vweird.f32 %v1144
    %vm1151 = vweird.f32 %v1145
    %vm1152 = vmor %vm1150, %vm1151
    %v1153 = vsel %vm1152, %v1145, %v1149
    %v1154 = vand.u32 2147483647, %v1144
    %vm1155 = vcmp.eq.f32.partialorder %v1154, 8.507059e+37
    %v1156 = vand.u32 %v1144, 2147483648
    %v1157 = vor.u32 1.1754944e-38, %v1156
    %v1158 = vsel %vm1155, %v1157, %v1153
    %v1159 = vmul.f32 1.0, %v1158
    %v1161 = vrot.slane %v844, 6
    %v1163 = vmul.f32 %v1139, %v1161
    %v1164 = vmul.f32 %v1120, %v1140
    %v1165 = vadd.f32 %v1163, %v1164
    %v1166 = vtanh.pop %v1165
    %v1167 = vmul.f32 %v1159, %v1166
    %v1168 = vxor.u32 %v1098, 2147483648
    %v1169 = vmul.f32 %v1168, 1.442695
    %v1170 = vpow.pop %v1169
    %v1171 = vadd.f32 %v1170, 1.0
    %v1172 = vrcp.pop %v1171
    %v1173 = vmul.f32 %v1171, %v1172
    %v1174 = vsub.f32 1.0, %v1173
    %v1175 = vmul.f32 %v1172, %v1174
    %v1176 = vadd.f32 %v1172, %v1175
    %vm1177 = vweird.f32 %v1171
    %vm1178 = vweird.f32 %v1172
    %vm1179 = vmor %vm1177, %vm1178
    %v1180 = vsel %vm1179, %v1172, %v1176
    %v1181 = vand.u32 2147483647, %v1171
    %vm1182 = vcmp.eq.f32.partialorder %v1181, 8.507059e+37
    %v1183 = vand.u32 %v1171, 2147483648
    %v1184 = vor.u32 1.1754944e-38, %v1183
    %v1185 = vsel %vm1182, %v1184, %v1180
    %v1186 = vmul.f32 1.0, %v1185
    %v1187 = vxor.u32 %v1099, 2147483648
    %v1188 = vmul.f32 %v1187, 1.442695
    %v1189 = vpow.pop %v1188
    %v1190 = vadd.f32 %v1189, 1.0
    %v1191 = vrcp.pop %v1190
    %v1192 = vmul.f32 %v1190, %v1191
    %v1193 = vsub.f32 1.0, %v1192
    %v1194 = vmul.f32 %v1191, %v1193
    %v1195 = vadd.f32 %v1191, %v1194
    %vm1196 = vweird.f32 %v1190
    %vm1197 = vweird.f32 %v1191
    %vm1198 = vmor %vm1196, %vm1197
    %v1199 = vsel %vm1198, %v1191, %v1195
    %v1200 = vand.u32 2147483647, %v1190
    %vm1201 = vcmp.eq.f32.partialorder %v1200, 8.507059e+37
    %v1202 = vand.u32 %v1190, 2147483648
    %v1203 = vor.u32 1.1754944e-38, %v1202
    %v1204 = vsel %vm1201, %v1203, %v1199
    %v1205 = vmul.f32 1.0, %v1204
    %v1206 = vtanh.pop %v1100
    %v1207 = vxor.u32 %v1101, 2147483648
    %v1208 = vmul.f32 %v1207, 1.442695
    %v1209 = vpow.pop %v1208
    %v1210 = vadd.f32 %v1209, 1.0
    %v1211 = vrcp.pop %v1210
    %v1212 = vmul.f32 %v1210, %v1211
    %v1213 = vsub.f32 1.0, %v1212
    %v1214 = vmul.f32 %v1211, %v1213
    %v1215 = vadd.f32 %v1211, %v1214
    %vm1216 = vweird.f32 %v1210
    %vm1217 = vweird.f32 %v1211
    %vm1218 = vmor %vm1216, %vm1217
    %v1219 = vsel %vm1218, %v1211, %v1215
    %v1220 = vand.u32 2147483647, %v1210
    %vm1221 = vcmp.eq.f32.partialorder %v1220, 8.507059e+37
    %v1222 = vand.u32 %v1210, 2147483648
    %v1223 = vor.u32 1.1754944e-38, %v1222
    %v1224 = vsel %vm1221, %v1223, %v1219
    %v1225 = vmul.f32 1.0, %v1224
    %v1227 = vrot.slane %v907, 6
    %v1229 = vmul.f32 %v1205, %v1227
    %v1230 = vmul.f32 %v1186, %v1206
    %v1231 = vadd.f32 %v1229, %v1230
    %v1232 = vtanh.pop %v1231
    %v1233 = vmul.f32 %v1225, %v1232
    %v1235 = vrot.slane %v1167, 2
    %1237 = vmatpush.msra.mxu0 %v548
    %1238 = vmatpush.msra.mxu0 %v544
    %1239 = vmatpush.msra.mxu0 %v540
    %1240 = vmatpush.msra.mxu0 %v536
    %1241 = vmatpush.msra.mxu0 %v532
    %1242 = vmatpush.msra.mxu0 %v528
    %1243 = vmatpush.msra.mxu0 %v524
    %1244 = vmatpush.msra.mxu0 %v520
    %1245 = vmatpush.msra.mxu0 %v516
    %1246 = vmatpush.msra.mxu0 %v512
    %1247 = vmatpush.msra.mxu0 %v508
    %1248 = vmatpush.msra.mxu0 %v504
    %1249 = vmatpush.msra.mxu0 %v500
    %1250 = vmatpush.msra.mxu0 %v496
    %1251 = vmatpush.msra.mxu0 %v492
    %1252 = vmatpush.msra.mxu0 %v488
    %1253 = vmatmul.f32.gmra.mxu0 %v1235
    %v1254 = vpop.f32.mrf.mxu0
    %v1255 = vadd.f32 0.0, %v1254
    %1256 = vdwg.mxu0
    %1257 = vmatpush.msra.mxu0 %v549
    %1258 = vmatpush.msra.mxu0 %v545
    %1259 = vmatpush.msra.mxu0 %v541
    %1260 = vmatpush.msra.mxu0 %v537
    %1261 = vmatpush.msra.mxu0 %v533
    %1262 = vmatpush.msra.mxu0 %v529
    %1263 = vmatpush.msra.mxu0 %v525
    %1264 = vmatpush.msra.mxu0 %v521
    %1265 = vmatpush.msra.mxu0 %v517
    %1266 = vmatpush.msra.mxu0 %v513
    %1267 = vmatpush.msra.mxu0 %v509
    %1268 = vmatpush.msra.mxu0 %v505
    %1269 = vmatpush.msra.mxu0 %v501
    %1270 = vmatpush.msra.mxu0 %v497
    %1271 = vmatpush.msra.mxu0 %v493
    %1272 = vmatpush.msra.mxu0 %v489
    %1273 = vmatmul.f32.gmra.mxu0 %v1235
    %v1274 = vpop.f32.mrf.mxu0
    %v1275 = vadd.f32 0.0, %v1274
    %1276 = vdwg.mxu0
    %1277 = vmatpush.msra.mxu0 %v550
    %1278 = vmatpush.msra.mxu0 %v546
    %1279 = vmatpush.msra.mxu0 %v542
    %1280 = vmatpush.msra.mxu0 %v538
    %1281 = vmatpush.msra.mxu0 %v534
    %1282 = vmatpush.msra.mxu0 %v530
    %1283 = vmatpush.msra.mxu0 %v526
    %1284 = vmatpush.msra.mxu0 %v522
    %1285 = vmatpush.msra.mxu0 %v518
    %1286 = vmatpush.msra.mxu0 %v514
    %1287 = vmatpush.msra.mxu0 %v510
    %1288 = vmatpush.msra.mxu0 %v506
    %1289 = vmatpush.msra.mxu0 %v502
    %1290 = vmatpush.msra.mxu0 %v498
    %1291 = vmatpush.msra.mxu0 %v494
    %1292 = vmatpush.msra.mxu0 %v490
    %1293 = vmatmul.f32.gmra.mxu0 %v1235
    %v1294 = vpop.f32.mrf.mxu0
    %v1295 = vadd.f32 0.0, %v1294
    %1296 = vdwg.mxu0
    %1297 = vmatpush.msra.mxu0 %v551
    %1298 = vmatpush.msra.mxu0 %v547
    %1299 = vmatpush.msra.mxu0 %v543
    %1300 = vmatpush.msra.mxu0 %v539
    %1301 = vmatpush.msra.mxu0 %v535
    %1302 = vmatpush.msra.mxu0 %v531
    %1303 = vmatpush.msra.mxu0 %v527
    %1304 = vmatpush.msra.mxu0 %v523
    %1305 = vmatpush.msra.mxu0 %v519
    %1306 = vmatpush.msra.mxu0 %v515
    %1307 = vmatpush.msra.mxu0 %v511
    %1308 = vmatpush.msra.mxu0 %v507
    %1309 = vmatpush.msra.mxu0 %v503
    %1310 = vmatpush.msra.mxu0 %v499
    %1311 = vmatpush.msra.mxu0 %v495
    %1312 = vmatpush.msra.mxu0 %v491
    %1313 = vmatmul.f32.gmra.mxu0 %v1235
    %v1314 = vpop.f32.mrf.mxu0
    %v1315 = vadd.f32 0.0, %v1314
    %1316 = vdwg.mxu0
    %v1321 = vrot.slane %v1255, 4
    %v1322 = vrot.slane %v1275, 4
    %v1323 = vrot.slane %v1295, 4
    %v1324 = vrot.slane %v1315, 4
    %v1329 = vadd.f32 %v285, %v1321
    %v1330 = vadd.f32 %v308, %v1322
    %v1331 = vadd.f32 %v331, %v1323
    %v1332 = vadd.f32 %v354, %v1324
    %v1334 = vrot.slane %v1233, 2
    %1336 = vmatpush.msra.mxu0 %v612
    %1337 = vmatpush.msra.mxu0 %v608
    %1338 = vmatpush.msra.mxu0 %v604
    %1339 = vmatpush.msra.mxu0 %v600
    %1340 = vmatpush.msra.mxu0 %v596
    %1341 = vmatpush.msra.mxu0 %v592
    %1342 = vmatpush.msra.mxu0 %v588
    %1343 = vmatpush.msra.mxu0 %v584
    %1344 = vmatpush.msra.mxu0 %v580
    %1345 = vmatpush.msra.mxu0 %v576
    %1346 = vmatpush.msra.mxu0 %v572
    %1347 = vmatpush.msra.mxu0 %v568
    %1348 = vmatpush.msra.mxu0 %v564
    %1349 = vmatpush.msra.mxu0 %v560
    %1350 = vmatpush.msra.mxu0 %v556
    %1351 = vmatpush.msra.mxu0 %v552
    %1352 = vmatmul.f32.gmra.mxu0 %v1334
    %v1353 = vpop.f32.mrf.mxu0
    %v1354 = vadd.f32 0.0, %v1353
    %1355 = vdwg.mxu0
    %1356 = vmatpush.msra.mxu0 %v613
    %1357 = vmatpush.msra.mxu0 %v609
    %1358 = vmatpush.msra.mxu0 %v605
    %1359 = vmatpush.msra.mxu0 %v601
    %1360 = vmatpush.msra.mxu0 %v597
    %1361 = vmatpush.msra.mxu0 %v593
    %1362 = vmatpush.msra.mxu0 %v589
    %1363 = vmatpush.msra.mxu0 %v585
    %1364 = vmatpush.msra.mxu0 %v581
    %1365 = vmatpush.msra.mxu0 %v577
    %1366 = vmatpush.msra.mxu0 %v573
    %1367 = vmatpush.msra.mxu0 %v569
    %1368 = vmatpush.msra.mxu0 %v565
    %1369 = vmatpush.msra.mxu0 %v561
    %1370 = vmatpush.msra.mxu0 %v557
    %1371 = vmatpush.msra.mxu0 %v553
    %1372 = vmatmul.f32.gmra.mxu0 %v1334
    %v1373 = vpop.f32.mrf.mxu0
    %v1374 = vadd.f32 0.0, %v1373
    %1375 = vdwg.mxu0
    %1376 = vmatpush.msra.mxu0 %v614
    %1377 = vmatpush.msra.mxu0 %v610
    %1378 = vmatpush.msra.mxu0 %v606
    %1379 = vmatpush.msra.mxu0 %v602
    %1380 = vmatpush.msra.mxu0 %v598
    %1381 = vmatpush.msra.mxu0 %v594
    %1382 = vmatpush.msra.mxu0 %v590
    %1383 = vmatpush.msra.mxu0 %v586
    %1384 = vmatpush.msra.mxu0 %v582
    %1385 = vmatpush.msra.mxu0 %v578
    %1386 = vmatpush.msra.mxu0 %v574
    %1387 = vmatpush.msra.mxu0 %v570
    %1388 = vmatpush.msra.mxu0 %v566
    %1389 = vmatpush.msra.mxu0 %v562
    %1390 = vmatpush.msra.mxu0 %v558
    %1391 = vmatpush.msra.mxu0 %v554
    %1392 = vmatmul.f32.gmra.mxu0 %v1334
    %v1393 = vpop.f32.mrf.mxu0
    %v1394 = vadd.f32 0.0, %v1393
    %1395 = vdwg.mxu0
    %1396 = vmatpush.msra.mxu0 %v615
    %1397 = vmatpush.msra.mxu0 %v611
    %1398 = vmatpush.msra.mxu0 %v607
    %1399 = vmatpush.msra.mxu0 %v603
    %1400 = vmatpush.msra.mxu0 %v599
    %1401 = vmatpush.msra.mxu0 %v595
    %1402 = vmatpush.msra.mxu0 %v591
    %1403 = vmatpush.msra.mxu0 %v587
    %1404 = vmatpush.msra.mxu0 %v583
    %1405 = vmatpush.msra.mxu0 %v579
    %1406 = vmatpush.msra.mxu0 %v575
    %1407 = vmatpush.msra.mxu0 %v571
    %1408 = vmatpush.msra.mxu0 %v567
    %1409 = vmatpush.msra.mxu0 %v563
    %1410 = vmatpush.msra.mxu0 %v559
    %1411 = vmatpush.msra.mxu0 %v555
    %1412 = vmatmul.f32.gmra.mxu0 %v1334
    %v1413 = vpop.f32.mrf.mxu0
    %v1414 = vadd.f32 0.0, %v1413
    %1415 = vdwg.mxu0
    %v1420 = vrot.slane %v1354, 4
    %v1421 = vrot.slane %v1374, 4
    %v1422 = vrot.slane %v1394, 4
    %v1423 = vrot.slane %v1414, 4
    %v1428 = vadd.f32 %v414, %v1420
    %v1429 = vadd.f32 %v437, %v1421
    %v1430 = vadd.f32 %v460, %v1422
    %v1431 = vadd.f32 %v483, %v1423
    %v1432 = vxor.u32 %v1329, 2147483648
    %v1433 = vmul.f32 %v1432, 1.442695
    %v1434 = vpow.pop %v1433
    %v1435 = vadd.f32 %v1434, 1.0
    %v1436 = vrcp.pop %v1435
    %v1437 = vmul.f32 %v1435, %v1436
    %v1438 = vsub.f32 1.0, %v1437
    %v1439 = vmul.f32 %v1436, %v1438
    %v1440 = vadd.f32 %v1436, %v1439
    %vm1441 = vweird.f32 %v1435
    %vm1442 = vweird.f32 %v1436
    %vm1443 = vmor %vm1441, %vm1442
    %v1444 = vsel %vm1443, %v1436, %v1440
    %v1445 = vand.u32 2147483647, %v1435
    %vm1446 = vcmp.eq.f32.partialorder %v1445, 8.507059e+37
    %v1447 = vand.u32 %v1435, 2147483648
    %v1448 = vor.u32 1.1754944e-38, %v1447
    %v1449 = vsel %vm1446, %v1448, %v1444
    %v1450 = vmul.f32 1.0, %v1449
    %v1451 = vxor.u32 %v1330, 2147483648
    %v1452 = vmul.f32 %v1451, 1.442695
    %v1453 = vpow.pop %v1452
    %v1454 = vadd.f32 %v1453, 1.0
    %v1455 = vrcp.pop %v1454
    %v1456 = vmul.f32 %v1454, %v1455
    %v1457 = vsub.f32 1.0, %v1456
    %v1458 = vmul.f32 %v1455, %v1457
    %v1459 = vadd.f32 %v1455, %v1458
    %vm1460 = vweird.f32 %v1454
    %vm1461 = vweird.f32 %v1455
    %vm1462 = vmor %vm1460, %vm1461
    %v1463 = vsel %vm1462, %v1455, %v1459
    %v1464 = vand.u32 2147483647, %v1454
    %vm1465 = vcmp.eq.f32.partialorder %v1464, 8.507059e+37
    %v1466 = vand.u32 %v1454, 2147483648
    %v1467 = vor.u32 1.1754944e-38, %v1466
    %v1468 = vsel %vm1465, %v1467, %v1463
    %v1469 = vmul.f32 1.0, %v1468
    %v1470 = vtanh.pop %v1331
    %v1471 = vxor.u32 %v1332, 2147483648
    %v1472 = vmul.f32 %v1471, 1.442695
    %v1473 = vpow.pop %v1472
    %v1474 = vadd.f32 %v1473, 1.0
    %v1475 = vrcp.pop %v1474
    %v1476 = vmul.f32 %v1474, %v1475
    %v1477 = vsub.f32 1.0, %v1476
    %v1478 = vmul.f32 %v1475, %v1477
    %v1479 = vadd.f32 %v1475, %v1478
    %vm1480 = vweird.f32 %v1474
    %vm1481 = vweird.f32 %v1475
    %vm1482 = vmor %vm1480, %vm1481
    %v1483 = vsel %vm1482, %v1475, %v1479
    %v1484 = vand.u32 2147483647, %v1474
    %vm1485 = vcmp.eq.f32.partialorder %v1484, 8.507059e+37
    %v1486 = vand.u32 %v1474, 2147483648
    %v1487 = vor.u32 1.1754944e-38, %v1486
    %v1488 = vsel %vm1485, %v1487, %v1483
    %v1489 = vmul.f32 1.0, %v1488
    %v1491 = vrot.slane %v1165, 6
    %v1493 = vmul.f32 %v1469, %v1491
    %v1494 = vmul.f32 %v1450, %v1470
    %v1495 = vadd.f32 %v1493, %v1494
    %v1496 = vtanh.pop %v1495
    %v1497 = vmul.f32 %v1489, %v1496
    %v1498 = vxor.u32 %v1428, 2147483648
    %v1499 = vmul.f32 %v1498, 1.442695
    %v1500 = vpow.pop %v1499
    %v1501 = vadd.f32 %v1500, 1.0
    %v1502 = vrcp.pop %v1501
    %v1503 = vmul.f32 %v1501, %v1502
    %v1504 = vsub.f32 1.0, %v1503
    %v1505 = vmul.f32 %v1502, %v1504
    %v1506 = vadd.f32 %v1502, %v1505
    %vm1507 = vweird.f32 %v1501
    %vm1508 = vweird.f32 %v1502
    %vm1509 = vmor %vm1507, %vm1508
    %v1510 = vsel %vm1509, %v1502, %v1506
    %v1511 = vand.u32 2147483647, %v1501
    %vm1512 = vcmp.eq.f32.partialorder %v1511, 8.507059e+37
    %v1513 = vand.u32 %v1501, 2147483648
    %v1514 = vor.u32 1.1754944e-38, %v1513
    %v1515 = vsel %vm1512, %v1514, %v1510
    %v1516 = vmul.f32 1.0, %v1515
    %v1517 = vxor.u32 %v1429, 2147483648
    %v1518 = vmul.f32 %v1517, 1.442695
    %v1519 = vpow.pop %v1518
    %v1520 = vadd.f32 %v1519, 1.0
    %v1521 = vrcp.pop %v1520
    %v1522 = vmul.f32 %v1520, %v1521
    %v1523 = vsub.f32 1.0, %v1522
    %v1524 = vmul.f32 %v1521, %v1523
    %v1525 = vadd.f32 %v1521, %v1524
    %vm1526 = vweird.f32 %v1520
    %vm1527 = vweird.f32 %v1521
    %vm1528 = vmor %vm1526, %vm1527
    %v1529 = vsel %vm1528, %v1521, %v1525
    %v1530 = vand.u32 2147483647, %v1520
    %vm1531 = vcmp.eq.f32.partialorder %v1530, 8.507059e+37
    %v1532 = vand.u32 %v1520, 2147483648
    %v1533 = vor.u32 1.1754944e-38, %v1532
    %v1534 = vsel %vm1531, %v1533, %v1529
    %v1535 = vmul.f32 1.0, %v1534
    %v1536 = vtanh.pop %v1430
    %v1537 = vxor.u32 %v1431, 2147483648
    %v1538 = vmul.f32 %v1537, 1.442695
    %v1539 = vpow.pop %v1538
    %v1540 = vadd.f32 %v1539, 1.0
    %v1541 = vrcp.pop %v1540
    %v1542 = vmul.f32 %v1540, %v1541
    %v1543 = vsub.f32 1.0, %v1542
    %v1544 = vmul.f32 %v1541, %v1543
    %v1545 = vadd.f32 %v1541, %v1544
    %vm1546 = vweird.f32 %v1540
    %vm1547 = vweird.f32 %v1541
    %vm1548 = vmor %vm1546, %vm1547
    %v1549 = vsel %vm1548, %v1541, %v1545
    %v1550 = vand.u32 2147483647, %v1540
    %vm1551 = vcmp.eq.f32.partialorder %v1550, 8.507059e+37
    %v1552 = vand.u32 %v1540, 2147483648
    %v1553 = vor.u32 1.1754944e-38, %v1552
    %v1554 = vsel %vm1551, %v1553, %v1549
    %v1555 = vmul.f32 1.0, %v1554
    %v1557 = vrot.slane %v1231, 6
    %v1559 = vmul.f32 %v1535, %v1557
    %v1560 = vmul.f32 %v1516, %v1536
    %v1561 = vadd.f32 %v1559, %v1560
    %v1562 = vtanh.pop %v1561
    %v1563 = vmul.f32 %v1555, %v1562
    %v1565 = vrot.slane %v1497, 4
    %1567 = vmatpush.msra.mxu0 %v548
    %1568 = vmatpush.msra.mxu0 %v544
    %1569 = vmatpush.msra.mxu0 %v540
    %1570 = vmatpush.msra.mxu0 %v536
    %1571 = vmatpush.msra.mxu0 %v532
    %1572 = vmatpush.msra.mxu0 %v528
    %1573 = vmatpush.msra.mxu0 %v524
    %1574 = vmatpush.msra.mxu0 %v520
    %1575 = vmatpush.msra.mxu0 %v516
    %1576 = vmatpush.msra.mxu0 %v512
    %1577 = vmatpush.msra.mxu0 %v508
    %1578 = vmatpush.msra.mxu0 %v504
    %1579 = vmatpush.msra.mxu0 %v500
    %1580 = vmatpush.msra.mxu0 %v496
    %1581 = vmatpush.msra.mxu0 %v492
    %1582 = vmatpush.msra.mxu0 %v488
    %1583 = vmatmul.f32.gmra.mxu0 %v1565
    %v1584 = vpop.f32.mrf.mxu0
    %v1585 = vadd.f32 0.0, %v1584
    %1586 = vdwg.mxu0
    %1587 = vmatpush.msra.mxu0 %v549
    %1588 = vmatpush.msra.mxu0 %v545
    %1589 = vmatpush.msra.mxu0 %v541
    %1590 = vmatpush.msra.mxu0 %v537
    %1591 = vmatpush.msra.mxu0 %v533
    %1592 = vmatpush.msra.mxu0 %v529
    %1593 = vmatpush.msra.mxu0 %v525
    %1594 = vmatpush.msra.mxu0 %v521
    %1595 = vmatpush.msra.mxu0 %v517
    %1596 = vmatpush.msra.mxu0 %v513
    %1597 = vmatpush.msra.mxu0 %v509
    %1598 = vmatpush.msra.mxu0 %v505
    %1599 = vmatpush.msra.mxu0 %v501
    %1600 = vmatpush.msra.mxu0 %v497
    %1601 = vmatpush.msra.mxu0 %v493
    %1602 = vmatpush.msra.mxu0 %v489
    %1603 = vmatmul.f32.gmra.mxu0 %v1565
    %v1604 = vpop.f32.mrf.mxu0
    %v1605 = vadd.f32 0.0, %v1604
    %1606 = vdwg.mxu0
    %1607 = vmatpush.msra.mxu0 %v550
    %1608 = vmatpush.msra.mxu0 %v546
    %1609 = vmatpush.msra.mxu0 %v542
    %1610 = vmatpush.msra.mxu0 %v538
    %1611 = vmatpush.msra.mxu0 %v534
    %1612 = vmatpush.msra.mxu0 %v530
    %1613 = vmatpush.msra.mxu0 %v526
    %1614 = vmatpush.msra.mxu0 %v522
    %1615 = vmatpush.msra.mxu0 %v518
    %1616 = vmatpush.msra.mxu0 %v514
    %1617 = vmatpush.msra.mxu0 %v510
    %1618 = vmatpush.msra.mxu0 %v506
    %1619 = vmatpush.msra.mxu0 %v502
    %1620 = vmatpush.msra.mxu0 %v498
    %1621 = vmatpush.msra.mxu0 %v494
    %1622 = vmatpush.msra.mxu0 %v490
    %1623 = vmatmul.f32.gmra.mxu0 %v1565
    %v1624 = vpop.f32.mrf.mxu0
    %v1625 = vadd.f32 0.0, %v1624
    %1626 = vdwg.mxu0
    %1627 = vmatpush.msra.mxu0 %v551
    %1628 = vmatpush.msra.mxu0 %v547
    %1629 = vmatpush.msra.mxu0 %v543
    %1630 = vmatpush.msra.mxu0 %v539
    %1631 = vmatpush.msra.mxu0 %v535
    %1632 = vmatpush.msra.mxu0 %v531
    %1633 = vmatpush.msra.mxu0 %v527
    %1634 = vmatpush.msra.mxu0 %v523
    %1635 = vmatpush.msra.mxu0 %v519
    %1636 = vmatpush.msra.mxu0 %v515
    %1637 = vmatpush.msra.mxu0 %v511
    %1638 = vmatpush.msra.mxu0 %v507
    %1639 = vmatpush.msra.mxu0 %v503
    %1640 = vmatpush.msra.mxu0 %v499
    %1641 = vmatpush.msra.mxu0 %v495
    %1642 = vmatpush.msra.mxu0 %v491
    %1643 = vmatmul.f32.gmra.mxu0 %v1565
    %v1644 = vpop.f32.mrf.mxu0
    %v1645 = vadd.f32 0.0, %v1644
    %1646 = vdwg.mxu0
    %v1651 = vrot.slane %v1585, 2
    %v1652 = vrot.slane %v1605, 2
    %v1653 = vrot.slane %v1625, 2
    %v1654 = vrot.slane %v1645, 2
    %v1659 = vadd.f32 %v285, %v1651
    %v1660 = vadd.f32 %v308, %v1652
    %v1661 = vadd.f32 %v331, %v1653
    %v1662 = vadd.f32 %v354, %v1654
    %v1664 = vrot.slane %v1563, 4
    %1666 = vmatpush.msra.mxu0 %v612
    %1667 = vmatpush.msra.mxu0 %v608
    %1668 = vmatpush.msra.mxu0 %v604
    %1669 = vmatpush.msra.mxu0 %v600
    %1670 = vmatpush.msra.mxu0 %v596
    %1671 = vmatpush.msra.mxu0 %v592
    %1672 = vmatpush.msra.mxu0 %v588
    %1673 = vmatpush.msra.mxu0 %v584
    %1674 = vmatpush.msra.mxu0 %v580
    %1675 = vmatpush.msra.mxu0 %v576
    %1676 = vmatpush.msra.mxu0 %v572
    %1677 = vmatpush.msra.mxu0 %v568
    %1678 = vmatpush.msra.mxu0 %v564
    %1679 = vmatpush.msra.mxu0 %v560
    %1680 = vmatpush.msra.mxu0 %v556
    %1681 = vmatpush.msra.mxu0 %v552
    %1682 = vmatmul.f32.gmra.mxu0 %v1664
    %v1683 = vpop.f32.mrf.mxu0
    %v1684 = vadd.f32 0.0, %v1683
    %1685 = vdwg.mxu0
    %1686 = vmatpush.msra.mxu0 %v613
    %1687 = vmatpush.msra.mxu0 %v609
    %1688 = vmatpush.msra.mxu0 %v605
    %1689 = vmatpush.msra.mxu0 %v601
    %1690 = vmatpush.msra.mxu0 %v597
    %1691 = vmatpush.msra.mxu0 %v593
    %1692 = vmatpush.msra.mxu0 %v589
    %1693 = vmatpush.msra.mxu0 %v585
    %1694 = vmatpush.msra.mxu0 %v581
    %1695 = vmatpush.msra.mxu0 %v577
    %1696 = vmatpush.msra.mxu0 %v573
    %1697 = vmatpush.msra.mxu0 %v569
    %1698 = vmatpush.msra.mxu0 %v565
    %1699 = vmatpush.msra.mxu0 %v561
    %1700 = vmatpush.msra.mxu0 %v557
    %1701 = vmatpush.msra.mxu0 %v553
    %1702 = vmatmul.f32.gmra.mxu0 %v1664
    %v1703 = vpop.f32.mrf.mxu0
    %v1704 = vadd.f32 0.0, %v1703
    %1705 = vdwg.mxu0
    %1706 = vmatpush.msra.mxu0 %v614
    %1707 = vmatpush.msra.mxu0 %v610
    %1708 = vmatpush.msra.mxu0 %v606
    %1709 = vmatpush.msra.mxu0 %v602
    %1710 = vmatpush.msra.mxu0 %v598
    %1711 = vmatpush.msra.mxu0 %v594
    %1712 = vmatpush.msra.mxu0 %v590
    %1713 = vmatpush.msra.mxu0 %v586
    %1714 = vmatpush.msra.mxu0 %v582
    %1715 = vmatpush.msra.mxu0 %v578
    %1716 = vmatpush.msra.mxu0 %v574
    %1717 = vmatpush.msra.mxu0 %v570
    %1718 = vmatpush.msra.mxu0 %v566
    %1719 = vmatpush.msra.mxu0 %v562
    %1720 = vmatpush.msra.mxu0 %v558
    %1721 = vmatpush.msra.mxu0 %v554
    %1722 = vmatmul.f32.gmra.mxu0 %v1664
    %v1723 = vpop.f32.mrf.mxu0
    %v1724 = vadd.f32 0.0, %v1723
    %1725 = vdwg.mxu0
    %1726 = vmatpush.msra.mxu0 %v615
    %1727 = vmatpush.msra.mxu0 %v611
    %1728 = vmatpush.msra.mxu0 %v607
    %1729 = vmatpush.msra.mxu0 %v603
    %1730 = vmatpush.msra.mxu0 %v599
    %1731 = vmatpush.msra.mxu0 %v595
    %1732 = vmatpush.msra.mxu0 %v591
    %1733 = vmatpush.msra.mxu0 %v587
    %1734 = vmatpush.msra.mxu0 %v583
    %1735 = vmatpush.msra.mxu0 %v579
    %1736 = vmatpush.msra.mxu0 %v575
    %1737 = vmatpush.msra.mxu0 %v571
    %1738 = vmatpush.msra.mxu0 %v567
    %1739 = vmatpush.msra.mxu0 %v563
    %1740 = vmatpush.msra.mxu0 %v559
    %1741 = vmatpush.msra.mxu0 %v555
    %1742 = vmatmul.f32.gmra.mxu0 %v1664
    %v1743 = vpop.f32.mrf.mxu0
    %v1744 = vadd.f32 0.0, %v1743
    %1745 = vdwg.mxu0
    %v1750 = vrot.slane %v1684, 2
    %v1751 = vrot.slane %v1704, 2
    %v1752 = vrot.slane %v1724, 2
    %v1753 = vrot.slane %v1744, 2
    %v1758 = vadd.f32 %v414, %v1750
    %v1759 = vadd.f32 %v437, %v1751
    %v1760 = vadd.f32 %v460, %v1752
    %v1761 = vadd.f32 %v483, %v1753
    %v1762 = vxor.u32 %v1659, 2147483648
    %v1763 = vmul.f32 %v1762, 1.442695
    %v1764 = vpow.pop %v1763
    %v1765 = vadd.f32 %v1764, 1.0
    %v1766 = vrcp.pop %v1765
    %v1767 = vmul.f32 %v1765, %v1766
    %v1768 = vsub.f32 1.0, %v1767
    %v1769 = vmul.f32 %v1766, %v1768
    %v1770 = vadd.f32 %v1766, %v1769
    %vm1771 = vweird.f32 %v1765
    %vm1772 = vweird.f32 %v1766
    %vm1773 = vmor %vm1771, %vm1772
    %v1774 = vsel %vm1773, %v1766, %v1770
    %v1775 = vand.u32 2147483647, %v1765
    %vm1776 = vcmp.eq.f32.partialorder %v1775, 8.507059e+37
    %v1777 = vand.u32 %v1765, 2147483648
    %v1778 = vor.u32 1.1754944e-38, %v1777
    %v1779 = vsel %vm1776, %v1778, %v1774
    %v1780 = vmul.f32 1.0, %v1779
    %v1781 = vxor.u32 %v1660, 2147483648
    %v1782 = vmul.f32 %v1781, 1.442695
    %v1783 = vpow.pop %v1782
    %v1784 = vadd.f32 %v1783, 1.0
    %v1785 = vrcp.pop %v1784
    %v1786 = vmul.f32 %v1784, %v1785
    %v1787 = vsub.f32 1.0, %v1786
    %v1788 = vmul.f32 %v1785, %v1787
    %v1789 = vadd.f32 %v1785, %v1788
    %vm1790 = vweird.f32 %v1784
    %vm1791 = vweird.f32 %v1785
    %vm1792 = vmor %vm1790, %vm1791
    %v1793 = vsel %vm1792, %v1785, %v1789
    %v1794 = vand.u32 2147483647, %v1784
    %vm1795 = vcmp.eq.f32.partialorder %v1794, 8.507059e+37
    %v1796 = vand.u32 %v1784, 2147483648
    %v1797 = vor.u32 1.1754944e-38, %v1796
    %v1798 = vsel %vm1795, %v1797, %v1793
    %v1799 = vmul.f32 1.0, %v1798
    %v1800 = vtanh.pop %v1661
    %v1801 = vxor.u32 %v1662, 2147483648
    %v1802 = vmul.f32 %v1801, 1.442695
    %v1803 = vpow.pop %v1802
    %v1804 = vadd.f32 %v1803, 1.0
    %v1805 = vrcp.pop %v1804
    %v1806 = vmul.f32 %v1804, %v1805
    %v1807 = vsub.f32 1.0, %v1806
    %v1808 = vmul.f32 %v1805, %v1807
    %v1809 = vadd.f32 %v1805, %v1808
    %vm1810 = vweird.f32 %v1804
    %vm1811 = vweird.f32 %v1805
    %vm1812 = vmor %vm1810, %vm1811
    %v1813 = vsel %vm1812, %v1805, %v1809
    %v1814 = vand.u32 2147483647, %v1804
    %vm1815 = vcmp.eq.f32.partialorder %v1814, 8.507059e+37
    %v1816 = vand.u32 %v1804, 2147483648
    %v1817 = vor.u32 1.1754944e-38, %v1816
    %v1818 = vsel %vm1815, %v1817, %v1813
    %v1819 = vmul.f32 1.0, %v1818
    %v1821 = vrot.slane %v1495, 6
    %v1823 = vmul.f32 %v1799, %v1821
    %v1824 = vmul.f32 %v1780, %v1800
    %v1825 = vadd.f32 %v1823, %v1824
    %v1826 = vtanh.pop %v1825
    %v1827 = vmul.f32 %v1819, %v1826
    %v1828 = vxor.u32 %v1758, 2147483648
    %v1829 = vmul.f32 %v1828, 1.442695
    %v1830 = vpow.pop %v1829
    %v1831 = vadd.f32 %v1830, 1.0
    %v1832 = vrcp.pop %v1831
    %v1833 = vmul.f32 %v1831, %v1832
    %v1834 = vsub.f32 1.0, %v1833
    %v1835 = vmul.f32 %v1832, %v1834
    %v1836 = vadd.f32 %v1832, %v1835
    %vm1837 = vweird.f32 %v1831
    %vm1838 = vweird.f32 %v1832
    %vm1839 = vmor %vm1837, %vm1838
    %v1840 = vsel %vm1839, %v1832, %v1836
    %v1841 = vand.u32 2147483647, %v1831
    %vm1842 = vcmp.eq.f32.partialorder %v1841, 8.507059e+37
    %v1843 = vand.u32 %v1831, 2147483648
    %v1844 = vor.u32 1.1754944e-38, %v1843
    %v1845 = vsel %vm1842, %v1844, %v1840
    %v1846 = vmul.f32 1.0, %v1845
    %v1847 = vxor.u32 %v1759, 2147483648
    %v1848 = vmul.f32 %v1847, 1.442695
    %v1849 = vpow.pop %v1848
    %v1850 = vadd.f32 %v1849, 1.0
    %v1851 = vrcp.pop %v1850
    %v1852 = vmul.f32 %v1850, %v1851
    %v1853 = vsub.f32 1.0, %v1852
    %v1854 = vmul.f32 %v1851, %v1853
    %v1855 = vadd.f32 %v1851, %v1854
    %vm1856 = vweird.f32 %v1850
    %vm1857 = vweird.f32 %v1851
    %vm1858 = vmor %vm1856, %vm1857
    %v1859 = vsel %vm1858, %v1851, %v1855
    %v1860 = vand.u32 2147483647, %v1850
    %vm1861 = vcmp.eq.f32.partialorder %v1860, 8.507059e+37
    %v1862 = vand.u32 %v1850, 2147483648
    %v1863 = vor.u32 1.1754944e-38, %v1862
    %v1864 = vsel %vm1861, %v1863, %v1859
    %v1865 = vmul.f32 1.0, %v1864
    %v1866 = vtanh.pop %v1760
    %v1867 = vxor.u32 %v1761, 2147483648
    %v1868 = vmul.f32 %v1867, 1.442695
    %v1869 = vpow.pop %v1868
    %v1870 = vadd.f32 %v1869, 1.0
    %v1871 = vrcp.pop %v1870
    %v1872 = vmul.f32 %v1870, %v1871
    %v1873 = vsub.f32 1.0, %v1872
    %v1874 = vmul.f32 %v1871, %v1873
    %v1875 = vadd.f32 %v1871, %v1874
    %vm1876 = vweird.f32 %v1870
    %vm1877 = vweird.f32 %v1871
    %vm1878 = vmor %vm1876, %vm1877
    %v1879 = vsel %vm1878, %v1871, %v1875
    %v1880 = vand.u32 2147483647, %v1870
    %vm1881 = vcmp.eq.f32.partialorder %v1880, 8.507059e+37
    %v1882 = vand.u32 %v1870, 2147483648
    %v1883 = vor.u32 1.1754944e-38, %v1882
    %v1884 = vsel %vm1881, %v1883, %v1879
    %v1885 = vmul.f32 1.0, %v1884
    %v1887 = vrot.slane %v1561, 6
    %v1889 = vmul.f32 %v1865, %v1887
    %v1890 = vmul.f32 %v1846, %v1866
    %v1891 = vadd.f32 %v1889, %v1890
    %v1892 = vtanh.pop %v1891
    %v1893 = vmul.f32 %v1885, %v1892
    %v1895 = vrot.slane %v1827, 6
    %1897 = vmatpush.msra.mxu0 %v548
    %1898 = vmatpush.msra.mxu0 %v544
    %1899 = vmatpush.msra.mxu0 %v540
    %1900 = vmatpush.msra.mxu0 %v536
    %1901 = vmatpush.msra.mxu0 %v532
    %1902 = vmatpush.msra.mxu0 %v528
    %1903 = vmatpush.msra.mxu0 %v524
    %1904 = vmatpush.msra.mxu0 %v520
    %1905 = vmatpush.msra.mxu0 %v516
    %1906 = vmatpush.msra.mxu0 %v512
    %1907 = vmatpush.msra.mxu0 %v508
    %1908 = vmatpush.msra.mxu0 %v504
    %1909 = vmatpush.msra.mxu0 %v500
    %1910 = vmatpush.msra.mxu0 %v496
    %1911 = vmatpush.msra.mxu0 %v492
    %1912 = vmatpush.msra.mxu0 %v488
    %1913 = vmatmul.f32.gmra.mxu0 %v1895
    %v1914 = vpop.f32.mrf.mxu0
    %v1915 = vadd.f32 0.0, %v1914
    %1916 = vdwg.mxu0
    %1917 = vmatpush.msra.mxu0 %v549
    %1918 = vmatpush.msra.mxu0 %v545
    %1919 = vmatpush.msra.mxu0 %v541
    %1920 = vmatpush.msra.mxu0 %v537
    %1921 = vmatpush.msra.mxu0 %v533
    %1922 = vmatpush.msra.mxu0 %v529
    %1923 = vmatpush.msra.mxu0 %v525
    %1924 = vmatpush.msra.mxu0 %v521
    %1925 = vmatpush.msra.mxu0 %v517
    %1926 = vmatpush.msra.mxu0 %v513
    %1927 = vmatpush.msra.mxu0 %v509
    %1928 = vmatpush.msra.mxu0 %v505
    %1929 = vmatpush.msra.mxu0 %v501
    %1930 = vmatpush.msra.mxu0 %v497
    %1931 = vmatpush.msra.mxu0 %v493
    %1932 = vmatpush.msra.mxu0 %v489
    %1933 = vmatmul.f32.gmra.mxu0 %v1895
    %v1934 = vpop.f32.mrf.mxu0
    %v1935 = vadd.f32 0.0, %v1934
    %1936 = vdwg.mxu0
    %1937 = vmatpush.msra.mxu0 %v550
    %1938 = vmatpush.msra.mxu0 %v546
    %1939 = vmatpush.msra.mxu0 %v542
    %1940 = vmatpush.msra.mxu0 %v538
    %1941 = vmatpush.msra.mxu0 %v534
    %1942 = vmatpush.msra.mxu0 %v530
    %1943 = vmatpush.msra.mxu0 %v526
    %1944 = vmatpush.msra.mxu0 %v522
    %1945 = vmatpush.msra.mxu0 %v518
    %1946 = vmatpush.msra.mxu0 %v514
    %1947 = vmatpush.msra.mxu0 %v510
    %1948 = vmatpush.msra.mxu0 %v506
    %1949 = vmatpush.msra.mxu0 %v502
    %1950 = vmatpush.msra.mxu0 %v498
    %1951 = vmatpush.msra.mxu0 %v494
    %1952 = vmatpush.msra.mxu0 %v490
    %1953 = vmatmul.f32.gmra.mxu0 %v1895
    %v1954 = vpop.f32.mrf.mxu0
    %v1955 = vadd.f32 0.0, %v1954
    %1956 = vdwg.mxu0
    %1957 = vmatpush.msra.mxu0 %v551
    %1958 = vmatpush.msra.mxu0 %v547
    %1959 = vmatpush.msra.mxu0 %v543
    %1960 = vmatpush.msra.mxu0 %v539
    %1961 = vmatpush.msra.mxu0 %v535
    %1962 = vmatpush.msra.mxu0 %v531
    %1963 = vmatpush.msra.mxu0 %v527
    %1964 = vmatpush.msra.mxu0 %v523
    %1965 = vmatpush.msra.mxu0 %v519
    %1966 = vmatpush.msra.mxu0 %v515
    %1967 = vmatpush.msra.mxu0 %v511
    %1968 = vmatpush.msra.mxu0 %v507
    %1969 = vmatpush.msra.mxu0 %v503
    %1970 = vmatpush.msra.mxu0 %v499
    %1971 = vmatpush.msra.mxu0 %v495
    %1972 = vmatpush.msra.mxu0 %v491
    %1973 = vmatmul.f32.gmra.mxu0 %v1895
    %v1974 = vpop.f32.mrf.mxu0
    %v1975 = vadd.f32 0.0, %v1974
    %1976 = vdwg.mxu0
    %v1977 = vadd.f32 %v288, %v1915
    %v1978 = vadd.f32 %v311, %v1935
    %v1979 = vadd.f32 %v334, %v1955
    %v1980 = vadd.f32 %v357, %v1975
    %v1982 = vrot.slane %v1893, 6
    %1984 = vmatpush.msra.mxu0 %v612
    %1985 = vmatpush.msra.mxu0 %v608
    %1986 = vmatpush.msra.mxu0 %v604
    %1987 = vmatpush.msra.mxu0 %v600
    %1988 = vmatpush.msra.mxu0 %v596
    %1989 = vmatpush.msra.mxu0 %v592
    %1990 = vmatpush.msra.mxu0 %v588
    %1991 = vmatpush.msra.mxu0 %v584
    %1992 = vmatpush.msra.mxu0 %v580
    %1993 = vmatpush.msra.mxu0 %v576
    %1994 = vmatpush.msra.mxu0 %v572
    %1995 = vmatpush.msra.mxu0 %v568
    %1996 = vmatpush.msra.mxu0 %v564
    %1997 = vmatpush.msra.mxu0 %v560
    %1998 = vmatpush.msra.mxu0 %v556
    %1999 = vmatpush.msra.mxu0 %v552
    %2000 = vmatmul.f32.gmra.mxu0 %v1982
    %v2001 = vpop.f32.mrf.mxu0
    %v2002 = vadd.f32 0.0, %v2001
    %2003 = vdwg.mxu0
    %2004 = vmatpush.msra.mxu0 %v613
    %2005 = vmatpush.msra.mxu0 %v609
    %2006 = vmatpush.msra.mxu0 %v605
    %2007 = vmatpush.msra.mxu0 %v601
    %2008 = vmatpush.msra.mxu0 %v597
    %2009 = vmatpush.msra.mxu0 %v593
    %2010 = vmatpush.msra.mxu0 %v589
    %2011 = vmatpush.msra.mxu0 %v585
    %2012 = vmatpush.msra.mxu0 %v581
    %2013 = vmatpush.msra.mxu0 %v577
    %2014 = vmatpush.msra.mxu0 %v573
    %2015 = vmatpush.msra.mxu0 %v569
    %2016 = vmatpush.msra.mxu0 %v565
    %2017 = vmatpush.msra.mxu0 %v561
    %2018 = vmatpush.msra.mxu0 %v557
    %2019 = vmatpush.msra.mxu0 %v553
    %2020 = vmatmul.f32.gmra.mxu0 %v1982
    %v2021 = vpop.f32.mrf.mxu0
    %v2022 = vadd.f32 0.0, %v2021
    %2023 = vdwg.mxu0
    %2024 = vmatpush.msra.mxu0 %v614
    %2025 = vmatpush.msra.mxu0 %v610
    %2026 = vmatpush.msra.mxu0 %v606
    %2027 = vmatpush.msra.mxu0 %v602
    %2028 = vmatpush.msra.mxu0 %v598
    %2029 = vmatpush.msra.mxu0 %v594
    %2030 = vmatpush.msra.mxu0 %v590
    %2031 = vmatpush.msra.mxu0 %v586
    %2032 = vmatpush.msra.mxu0 %v582
    %2033 = vmatpush.msra.mxu0 %v578
    %2034 = vmatpush.msra.mxu0 %v574
    %2035 = vmatpush.msra.mxu0 %v570
    %2036 = vmatpush.msra.mxu0 %v566
    %2037 = vmatpush.msra.mxu0 %v562
    %2038 = vmatpush.msra.mxu0 %v558
    %2039 = vmatpush.msra.mxu0 %v554
    %2040 = vmatmul.f32.gmra.mxu0 %v1982
    %v2041 = vpop.f32.mrf.mxu0
    %v2042 = vadd.f32 0.0, %v2041
    %2043 = vdwg.mxu0
    %2044 = vmatpush.msra.mxu0 %v615
    %2045 = vmatpush.msra.mxu0 %v611
    %2046 = vmatpush.msra.mxu0 %v607
    %2047 = vmatpush.msra.mxu0 %v603
    %2048 = vmatpush.msra.mxu0 %v599
    %2049 = vmatpush.msra.mxu0 %v595
    %2050 = vmatpush.msra.mxu0 %v591
    %2051 = vmatpush.msra.mxu0 %v587
    %2052 = vmatpush.msra.mxu0 %v583
    %2053 = vmatpush.msra.mxu0 %v579
    %2054 = vmatpush.msra.mxu0 %v575
    %2055 = vmatpush.msra.mxu0 %v571
    %2056 = vmatpush.msra.mxu0 %v567
    %2057 = vmatpush.msra.mxu0 %v563
    %2058 = vmatpush.msra.mxu0 %v559
    %2059 = vmatpush.msra.mxu0 %v555
    %2060 = vmatmul.f32.gmra.mxu0 %v1982
    %v2061 = vpop.f32.mrf.mxu0
    %v2062 = vadd.f32 0.0, %v2061
    %2063 = vdwg.mxu0
    %v2064 = vadd.f32 %v417, %v2002
    %v2065 = vadd.f32 %v440, %v2022
    %v2066 = vadd.f32 %v463, %v2042
    %v2067 = vadd.f32 %v486, %v2062
    %v2068 = vxor.u32 %v1977, 2147483648
    %v2069 = vmul.f32 %v2068, 1.442695
    %v2070 = vpow.pop %v2069
    %v2071 = vadd.f32 %v2070, 1.0
    %v2072 = vrcp.pop %v2071
    %v2073 = vmul.f32 %v2071, %v2072
    %v2074 = vsub.f32 1.0, %v2073
    %v2075 = vmul.f32 %v2072, %v2074
    %v2076 = vadd.f32 %v2072, %v2075
    %vm2077 = vweird.f32 %v2071
    %vm2078 = vweird.f32 %v2072
    %vm2079 = vmor %vm2077, %vm2078
    %v2080 = vsel %vm2079, %v2072, %v2076
    %v2081 = vand.u32 2147483647, %v2071
    %vm2082 = vcmp.eq.f32.partialorder %v2081, 8.507059e+37
    %v2083 = vand.u32 %v2071, 2147483648
    %v2084 = vor.u32 1.1754944e-38, %v2083
    %v2085 = vsel %vm2082, %v2084, %v2080
    %v2086 = vmul.f32 1.0, %v2085
    %v2087 = vxor.u32 %v1978, 2147483648
    %v2088 = vmul.f32 %v2087, 1.442695
    %v2089 = vpow.pop %v2088
    %v2090 = vadd.f32 %v2089, 1.0
    %v2091 = vrcp.pop %v2090
    %v2092 = vmul.f32 %v2090, %v2091
    %v2093 = vsub.f32 1.0, %v2092
    %v2094 = vmul.f32 %v2091, %v2093
    %v2095 = vadd.f32 %v2091, %v2094
    %vm2096 = vweird.f32 %v2090
    %vm2097 = vweird.f32 %v2091
    %vm2098 = vmor %vm2096, %vm2097
    %v2099 = vsel %vm2098, %v2091, %v2095
    %v2100 = vand.u32 2147483647, %v2090
    %vm2101 = vcmp.eq.f32.partialorder %v2100, 8.507059e+37
    %v2102 = vand.u32 %v2090, 2147483648
    %v2103 = vor.u32 1.1754944e-38, %v2102
    %v2104 = vsel %vm2101, %v2103, %v2099
    %v2105 = vmul.f32 1.0, %v2104
    %v2106 = vtanh.pop %v1979
    %v2107 = vxor.u32 %v1980, 2147483648
    %v2108 = vmul.f32 %v2107, 1.442695
    %v2109 = vpow.pop %v2108
    %v2110 = vadd.f32 %v2109, 1.0
    %v2111 = vrcp.pop %v2110
    %v2112 = vmul.f32 %v2110, %v2111
    %v2113 = vsub.f32 1.0, %v2112
    %v2114 = vmul.f32 %v2111, %v2113
    %v2115 = vadd.f32 %v2111, %v2114
    %vm2116 = vweird.f32 %v2110
    %vm2117 = vweird.f32 %v2111
    %vm2118 = vmor %vm2116, %vm2117
    %v2119 = vsel %vm2118, %v2111, %v2115
    %v2120 = vand.u32 2147483647, %v2110
    %vm2121 = vcmp.eq.f32.partialorder %v2120, 8.507059e+37
    %v2122 = vand.u32 %v2110, 2147483648
    %v2123 = vor.u32 1.1754944e-38, %v2122
    %v2124 = vsel %vm2121, %v2123, %v2119
    %v2125 = vmul.f32 1.0, %v2124
    %v2127 = vrot.slane %v1825, 6
    %v2129 = vmul.f32 %v2105, %v2127
    %v2130 = vmul.f32 %v2086, %v2106
    %v2131 = vadd.f32 %v2129, %v2130
    %v2132 = vtanh.pop %v2131
    %v2133 = vmul.f32 %v2125, %v2132
    %v2134 = vxor.u32 %v2064, 2147483648
    %v2135 = vmul.f32 %v2134, 1.442695
    %v2136 = vpow.pop %v2135
    %v2137 = vadd.f32 %v2136, 1.0
    %v2138 = vrcp.pop %v2137
    %v2139 = vmul.f32 %v2137, %v2138
    %v2140 = vsub.f32 1.0, %v2139
    %v2141 = vmul.f32 %v2138, %v2140
    %v2142 = vadd.f32 %v2138, %v2141
    %vm2143 = vweird.f32 %v2137
    %vm2144 = vweird.f32 %v2138
    %vm2145 = vmor %vm2143, %vm2144
    %v2146 = vsel %vm2145, %v2138, %v2142
    %v2147 = vand.u32 2147483647, %v2137
    %vm2148 = vcmp.eq.f32.partialorder %v2147, 8.507059e+37
    %v2149 = vand.u32 %v2137, 2147483648
    %v2150 = vor.u32 1.1754944e-38, %v2149
    %v2151 = vsel %vm2148, %v2150, %v2146
    %v2152 = vmul.f32 1.0, %v2151
    %v2153 = vxor.u32 %v2065, 2147483648
    %v2154 = vmul.f32 %v2153, 1.442695
    %v2155 = vpow.pop %v2154
    %v2156 = vadd.f32 %v2155, 1.0
    %v2157 = vrcp.pop %v2156
    %v2158 = vmul.f32 %v2156, %v2157
    %v2159 = vsub.f32 1.0, %v2158
    %v2160 = vmul.f32 %v2157, %v2159
    %v2161 = vadd.f32 %v2157, %v2160
    %vm2162 = vweird.f32 %v2156
    %vm2163 = vweird.f32 %v2157
    %vm2164 = vmor %vm2162, %vm2163
    %v2165 = vsel %vm2164, %v2157, %v2161
    %v2166 = vand.u32 2147483647, %v2156
    %vm2167 = vcmp.eq.f32.partialorder %v2166, 8.507059e+37
    %v2168 = vand.u32 %v2156, 2147483648
    %v2169 = vor.u32 1.1754944e-38, %v2168
    %v2170 = vsel %vm2167, %v2169, %v2165
    %v2171 = vmul.f32 1.0, %v2170
    %v2172 = vtanh.pop %v2066
    %v2173 = vxor.u32 %v2067, 2147483648
    %v2174 = vmul.f32 %v2173, 1.442695
    %v2175 = vpow.pop %v2174
    %v2176 = vadd.f32 %v2175, 1.0
    %v2177 = vrcp.pop %v2176
    %v2178 = vmul.f32 %v2176, %v2177
    %v2179 = vsub.f32 1.0, %v2178
    %v2180 = vmul.f32 %v2177, %v2179
    %v2181 = vadd.f32 %v2177, %v2180
    %vm2182 = vweird.f32 %v2176
    %vm2183 = vweird.f32 %v2177
    %vm2184 = vmor %vm2182, %vm2183
    %v2185 = vsel %vm2184, %v2177, %v2181
    %v2186 = vand.u32 2147483647, %v2176
    %vm2187 = vcmp.eq.f32.partialorder %v2186, 8.507059e+37
    %v2188 = vand.u32 %v2176, 2147483648
    %v2189 = vor.u32 1.1754944e-38, %v2188
    %v2190 = vsel %vm2187, %v2189, %v2185
    %v2191 = vmul.f32 1.0, %v2190
    %v2193 = vrot.slane %v1891, 6
    %v2195 = vmul.f32 %v2171, %v2193
    %v2196 = vmul.f32 %v2152, %v2172
    %v2197 = vadd.f32 %v2195, %v2196
    %v2198 = vtanh.pop %v2197
    %v2199 = vmul.f32 %v2191, %v2198
    %2200 = vmatpush.msra.mxu0 %v548
    %2201 = vmatpush.msra.mxu0 %v544
    %2202 = vmatpush.msra.mxu0 %v540
    %2203 = vmatpush.msra.mxu0 %v536
    %2204 = vmatpush.msra.mxu0 %v532
    %2205 = vmatpush.msra.mxu0 %v528
    %2206 = vmatpush.msra.mxu0 %v524
    %2207 = vmatpush.msra.mxu0 %v520
    %2208 = vmatpush.msra.mxu0 %v516
    %2209 = vmatpush.msra.mxu0 %v512
    %2210 = vmatpush.msra.mxu0 %v508
    %2211 = vmatpush.msra.mxu0 %v504
    %2212 = vmatpush.msra.mxu0 %v500
    %2213 = vmatpush.msra.mxu0 %v496
    %2214 = vmatpush.msra.mxu0 %v492
    %2215 = vmatpush.msra.mxu0 %v488
    %2216 = vmatmul.f32.gmra.mxu0 %v2133
    %v2217 = vpop.f32.mrf.mxu0
    %v2218 = vadd.f32 0.0, %v2217
    %2219 = vdwg.mxu0
    %2220 = vmatpush.msra.mxu0 %v549
    %2221 = vmatpush.msra.mxu0 %v545
    %2222 = vmatpush.msra.mxu0 %v541
    %2223 = vmatpush.msra.mxu0 %v537
    %2224 = vmatpush.msra.mxu0 %v533
    %2225 = vmatpush.msra.mxu0 %v529
    %2226 = vmatpush.msra.mxu0 %v525
    %2227 = vmatpush.msra.mxu0 %v521
    %2228 = vmatpush.msra.mxu0 %v517
    %2229 = vmatpush.msra.mxu0 %v513
    %2230 = vmatpush.msra.mxu0 %v509
    %2231 = vmatpush.msra.mxu0 %v505
    %2232 = vmatpush.msra.mxu0 %v501
    %2233 = vmatpush.msra.mxu0 %v497
    %2234 = vmatpush.msra.mxu0 %v493
    %2235 = vmatpush.msra.mxu0 %v489
    %2236 = vmatmul.f32.gmra.mxu0 %v2133
    %v2237 = vpop.f32.mrf.mxu0
    %v2238 = vadd.f32 0.0, %v2237
    %2239 = vdwg.mxu0
    %2240 = vmatpush.msra.mxu0 %v550
    %2241 = vmatpush.msra.mxu0 %v546
    %2242 = vmatpush.msra.mxu0 %v542
    %2243 = vmatpush.msra.mxu0 %v538
    %2244 = vmatpush.msra.mxu0 %v534
    %2245 = vmatpush.msra.mxu0 %v530
    %2246 = vmatpush.msra.mxu0 %v526
    %2247 = vmatpush.msra.mxu0 %v522
    %2248 = vmatpush.msra.mxu0 %v518
    %2249 = vmatpush.msra.mxu0 %v514
    %2250 = vmatpush.msra.mxu0 %v510
    %2251 = vmatpush.msra.mxu0 %v506
    %2252 = vmatpush.msra.mxu0 %v502
    %2253 = vmatpush.msra.mxu0 %v498
    %2254 = vmatpush.msra.mxu0 %v494
    %2255 = vmatpush.msra.mxu0 %v490
    %2256 = vmatmul.f32.gmra.mxu0 %v2133
    %v2257 = vpop.f32.mrf.mxu0
    %v2258 = vadd.f32 0.0, %v2257
    %2259 = vdwg.mxu0
    %2260 = vmatpush.msra.mxu0 %v551
    %2261 = vmatpush.msra.mxu0 %v547
    %2262 = vmatpush.msra.mxu0 %v543
    %2263 = vmatpush.msra.mxu0 %v539
    %2264 = vmatpush.msra.mxu0 %v535
    %2265 = vmatpush.msra.mxu0 %v531
    %2266 = vmatpush.msra.mxu0 %v527
    %2267 = vmatpush.msra.mxu0 %v523
    %2268 = vmatpush.msra.mxu0 %v519
    %2269 = vmatpush.msra.mxu0 %v515
    %2270 = vmatpush.msra.mxu0 %v511
    %2271 = vmatpush.msra.mxu0 %v507
    %2272 = vmatpush.msra.mxu0 %v503
    %2273 = vmatpush.msra.mxu0 %v499
    %2274 = vmatpush.msra.mxu0 %v495
    %2275 = vmatpush.msra.mxu0 %v491
    %2276 = vmatmul.f32.gmra.mxu0 %v2133
    %v2277 = vpop.f32.mrf.mxu0
    %v2278 = vadd.f32 0.0, %v2277
    %2279 = vdwg.mxu0
    %v2284 = vrot.slane %v2218, 6
    %v2285 = vrot.slane %v2238, 6
    %v2286 = vrot.slane %v2258, 6
    %v2287 = vrot.slane %v2278, 6
    %v2292 = vadd.f32 %v288, %v2284
    %v2293 = vadd.f32 %v311, %v2285
    %v2294 = vadd.f32 %v334, %v2286
    %v2295 = vadd.f32 %v357, %v2287
    %2296 = vmatpush.msra.mxu0 %v612
    %2297 = vmatpush.msra.mxu0 %v608
    %2298 = vmatpush.msra.mxu0 %v604
    %2299 = vmatpush.msra.mxu0 %v600
    %2300 = vmatpush.msra.mxu0 %v596
    %2301 = vmatpush.msra.mxu0 %v592
    %2302 = vmatpush.msra.mxu0 %v588
    %2303 = vmatpush.msra.mxu0 %v584
    %2304 = vmatpush.msra.mxu0 %v580
    %2305 = vmatpush.msra.mxu0 %v576
    %2306 = vmatpush.msra.mxu0 %v572
    %2307 = vmatpush.msra.mxu0 %v568
    %2308 = vmatpush.msra.mxu0 %v564
    %2309 = vmatpush.msra.mxu0 %v560
    %2310 = vmatpush.msra.mxu0 %v556
    %2311 = vmatpush.msra.mxu0 %v552
    %2312 = vmatmul.f32.gmra.mxu0 %v2199
    %v2313 = vpop.f32.mrf.mxu0
    %v2314 = vadd.f32 0.0, %v2313
    %2315 = vdwg.mxu0
    %2316 = vmatpush.msra.mxu0 %v613
    %2317 = vmatpush.msra.mxu0 %v609
    %2318 = vmatpush.msra.mxu0 %v605
    %2319 = vmatpush.msra.mxu0 %v601
    %2320 = vmatpush.msra.mxu0 %v597
    %2321 = vmatpush.msra.mxu0 %v593
    %2322 = vmatpush.msra.mxu0 %v589
    %2323 = vmatpush.msra.mxu0 %v585
    %2324 = vmatpush.msra.mxu0 %v581
    %2325 = vmatpush.msra.mxu0 %v577
    %2326 = vmatpush.msra.mxu0 %v573
    %2327 = vmatpush.msra.mxu0 %v569
    %2328 = vmatpush.msra.mxu0 %v565
    %2329 = vmatpush.msra.mxu0 %v561
    %2330 = vmatpush.msra.mxu0 %v557
    %2331 = vmatpush.msra.mxu0 %v553
    %2332 = vmatmul.f32.gmra.mxu0 %v2199
    %v2333 = vpop.f32.mrf.mxu0
    %v2334 = vadd.f32 0.0, %v2333
    %2335 = vdwg.mxu0
    %2336 = vmatpush.msra.mxu0 %v614
    %2337 = vmatpush.msra.mxu0 %v610
    %2338 = vmatpush.msra.mxu0 %v606
    %2339 = vmatpush.msra.mxu0 %v602
    %2340 = vmatpush.msra.mxu0 %v598
    %2341 = vmatpush.msra.mxu0 %v594
    %2342 = vmatpush.msra.mxu0 %v590
    %2343 = vmatpush.msra.mxu0 %v586
    %2344 = vmatpush.msra.mxu0 %v582
    %2345 = vmatpush.msra.mxu0 %v578
    %2346 = vmatpush.msra.mxu0 %v574
    %2347 = vmatpush.msra.mxu0 %v570
    %2348 = vmatpush.msra.mxu0 %v566
    %2349 = vmatpush.msra.mxu0 %v562
    %2350 = vmatpush.msra.mxu0 %v558
    %2351 = vmatpush.msra.mxu0 %v554
    %2352 = vmatmul.f32.gmra.mxu0 %v2199
    %v2353 = vpop.f32.mrf.mxu0
    %v2354 = vadd.f32 0.0, %v2353
    %2355 = vdwg.mxu0
    %2356 = vmatpush.msra.mxu0 %v615
    %2357 = vmatpush.msra.mxu0 %v611
    %2358 = vmatpush.msra.mxu0 %v607
    %2359 = vmatpush.msra.mxu0 %v603
    %2360 = vmatpush.msra.mxu0 %v599
    %2361 = vmatpush.msra.mxu0 %v595
    %2362 = vmatpush.msra.mxu0 %v591
    %2363 = vmatpush.msra.mxu0 %v587
    %2364 = vmatpush.msra.mxu0 %v583
    %2365 = vmatpush.msra.mxu0 %v579
    %2366 = vmatpush.msra.mxu0 %v575
    %2367 = vmatpush.msra.mxu0 %v571
    %2368 = vmatpush.msra.mxu0 %v567
    %2369 = vmatpush.msra.mxu0 %v563
    %2370 = vmatpush.msra.mxu0 %v559
    %2371 = vmatpush.msra.mxu0 %v555
    %2372 = vmatmul.f32.gmra.mxu0 %v2199
    %v2373 = vpop.f32.mrf.mxu0
    %v2374 = vadd.f32 0.0, %v2373
    %2375 = vdwg.mxu0
    %v2380 = vrot.slane %v2314, 6
    %v2381 = vrot.slane %v2334, 6
    %v2382 = vrot.slane %v2354, 6
    %v2383 = vrot.slane %v2374, 6
    %v2388 = vadd.f32 %v417, %v2380
    %v2389 = vadd.f32 %v440, %v2381
    %v2390 = vadd.f32 %v463, %v2382
    %v2391 = vadd.f32 %v486, %v2383
    %v2392 = vxor.u32 %v2292, 2147483648
    %v2393 = vmul.f32 %v2392, 1.442695
    %v2394 = vpow.pop %v2393
    %v2395 = vadd.f32 %v2394, 1.0
    %v2396 = vrcp.pop %v2395
    %v2397 = vmul.f32 %v2395, %v2396
    %v2398 = vsub.f32 1.0, %v2397
    %v2399 = vmul.f32 %v2396, %v2398
    %v2400 = vadd.f32 %v2396, %v2399
    %vm2401 = vweird.f32 %v2395
    %vm2402 = vweird.f32 %v2396
    %vm2403 = vmor %vm2401, %vm2402
    %v2404 = vsel %vm2403, %v2396, %v2400
    %v2405 = vand.u32 2147483647, %v2395
    %vm2406 = vcmp.eq.f32.partialorder %v2405, 8.507059e+37
    %v2407 = vand.u32 %v2395, 2147483648
    %v2408 = vor.u32 1.1754944e-38, %v2407
    %v2409 = vsel %vm2406, %v2408, %v2404
    %v2410 = vmul.f32 1.0, %v2409
    %v2411 = vxor.u32 %v2293, 2147483648
    %v2412 = vmul.f32 %v2411, 1.442695
    %v2413 = vpow.pop %v2412
    %v2414 = vadd.f32 %v2413, 1.0
    %v2415 = vrcp.pop %v2414
    %v2416 = vmul.f32 %v2414, %v2415
    %v2417 = vsub.f32 1.0, %v2416
    %v2418 = vmul.f32 %v2415, %v2417
    %v2419 = vadd.f32 %v2415, %v2418
    %vm2420 = vweird.f32 %v2414
    %vm2421 = vweird.f32 %v2415
    %vm2422 = vmor %vm2420, %vm2421
    %v2423 = vsel %vm2422, %v2415, %v2419
    %v2424 = vand.u32 2147483647, %v2414
    %vm2425 = vcmp.eq.f32.partialorder %v2424, 8.507059e+37
    %v2426 = vand.u32 %v2414, 2147483648
    %v2427 = vor.u32 1.1754944e-38, %v2426
    %v2428 = vsel %vm2425, %v2427, %v2423
    %v2429 = vmul.f32 1.0, %v2428
    %v2430 = vtanh.pop %v2294
    %v2431 = vxor.u32 %v2295, 2147483648
    %v2432 = vmul.f32 %v2431, 1.442695
    %v2433 = vpow.pop %v2432
    %v2434 = vadd.f32 %v2433, 1.0
    %v2435 = vrcp.pop %v2434
    %v2436 = vmul.f32 %v2434, %v2435
    %v2437 = vsub.f32 1.0, %v2436
    %v2438 = vmul.f32 %v2435, %v2437
    %v2439 = vadd.f32 %v2435, %v2438
    %vm2440 = vweird.f32 %v2434
    %vm2441 = vweird.f32 %v2435
    %vm2442 = vmor %vm2440, %vm2441
    %v2443 = vsel %vm2442, %v2435, %v2439
    %v2444 = vand.u32 2147483647, %v2434
    %vm2445 = vcmp.eq.f32.partialorder %v2444, 8.507059e+37
    %v2446 = vand.u32 %v2434, 2147483648
    %v2447 = vor.u32 1.1754944e-38, %v2446
    %v2448 = vsel %vm2445, %v2447, %v2443
    %v2449 = vmul.f32 1.0, %v2448
    %v2451 = vrot.slane %v2131, 6
    %v2453 = vmul.f32 %v2429, %v2451
    %v2454 = vmul.f32 %v2410, %v2430
    %v2455 = vadd.f32 %v2453, %v2454
    %v2456 = vtanh.pop %v2455
    %v2457 = vmul.f32 %v2449, %v2456
    %v2458 = vxor.u32 %v2388, 2147483648
    %v2459 = vmul.f32 %v2458, 1.442695
    %v2460 = vpow.pop %v2459
    %v2461 = vadd.f32 %v2460, 1.0
    %v2462 = vrcp.pop %v2461
    %v2463 = vmul.f32 %v2461, %v2462
    %v2464 = vsub.f32 1.0, %v2463
    %v2465 = vmul.f32 %v2462, %v2464
    %v2466 = vadd.f32 %v2462, %v2465
    %vm2467 = vweird.f32 %v2461
    %vm2468 = vweird.f32 %v2462
    %vm2469 = vmor %vm2467, %vm2468
    %v2470 = vsel %vm2469, %v2462, %v2466
    %v2471 = vand.u32 2147483647, %v2461
    %vm2472 = vcmp.eq.f32.partialorder %v2471, 8.507059e+37
    %v2473 = vand.u32 %v2461, 2147483648
    %v2474 = vor.u32 1.1754944e-38, %v2473
    %v2475 = vsel %vm2472, %v2474, %v2470
    %v2476 = vmul.f32 1.0, %v2475
    %v2477 = vxor.u32 %v2389, 2147483648
    %v2478 = vmul.f32 %v2477, 1.442695
    %v2479 = vpow.pop %v2478
    %v2480 = vadd.f32 %v2479, 1.0
    %v2481 = vrcp.pop %v2480
    %v2482 = vmul.f32 %v2480, %v2481
    %v2483 = vsub.f32 1.0, %v2482
    %v2484 = vmul.f32 %v2481, %v2483
    %v2485 = vadd.f32 %v2481, %v2484
    %vm2486 = vweird.f32 %v2480
    %vm2487 = vweird.f32 %v2481
    %vm2488 = vmor %vm2486, %vm2487
    %v2489 = vsel %vm2488, %v2481, %v2485
    %v2490 = vand.u32 2147483647, %v2480
    %vm2491 = vcmp.eq.f32.partialorder %v2490, 8.507059e+37
    %v2492 = vand.u32 %v2480, 2147483648
    %v2493 = vor.u32 1.1754944e-38, %v2492
    %v2494 = vsel %vm2491, %v2493, %v2489
    %v2495 = vmul.f32 1.0, %v2494
    %v2496 = vtanh.pop %v2390
    %v2497 = vxor.u32 %v2391, 2147483648
    %v2498 = vmul.f32 %v2497, 1.442695
    %v2499 = vpow.pop %v2498
    %v2500 = vadd.f32 %v2499, 1.0
    %v2501 = vrcp.pop %v2500
    %v2502 = vmul.f32 %v2500, %v2501
    %v2503 = vsub.f32 1.0, %v2502
    %v2504 = vmul.f32 %v2501, %v2503
    %v2505 = vadd.f32 %v2501, %v2504
    %vm2506 = vweird.f32 %v2500
    %vm2507 = vweird.f32 %v2501
    %vm2508 = vmor %vm2506, %vm2507
    %v2509 = vsel %vm2508, %v2501, %v2505
    %v2510 = vand.u32 2147483647, %v2500
    %vm2511 = vcmp.eq.f32.partialorder %v2510, 8.507059e+37
    %v2512 = vand.u32 %v2500, 2147483648
    %v2513 = vor.u32 1.1754944e-38, %v2512
    %v2514 = vsel %vm2511, %v2513, %v2509
    %v2515 = vmul.f32 1.0, %v2514
    %v2517 = vrot.slane %v2197, 6
    %v2519 = vmul.f32 %v2495, %v2517
    %v2520 = vmul.f32 %v2476, %v2496
    %v2521 = vadd.f32 %v2519, %v2520
    %v2522 = vtanh.pop %v2521
    %v2523 = vmul.f32 %v2515, %v2522
    %v2525 = vrot.slane %v2457, 2
    %2527 = vmatpush.msra.mxu0 %v548
    %2528 = vmatpush.msra.mxu0 %v544
    %2529 = vmatpush.msra.mxu0 %v540
    %2530 = vmatpush.msra.mxu0 %v536
    %2531 = vmatpush.msra.mxu0 %v532
    %2532 = vmatpush.msra.mxu0 %v528
    %2533 = vmatpush.msra.mxu0 %v524
    %2534 = vmatpush.msra.mxu0 %v520
    %2535 = vmatpush.msra.mxu0 %v516
    %2536 = vmatpush.msra.mxu0 %v512
    %2537 = vmatpush.msra.mxu0 %v508
    %2538 = vmatpush.msra.mxu0 %v504
    %2539 = vmatpush.msra.mxu0 %v500
    %2540 = vmatpush.msra.mxu0 %v496
    %2541 = vmatpush.msra.mxu0 %v492
    %2542 = vmatpush.msra.mxu0 %v488
    %2543 = vmatmul.f32.gmra.mxu0 %v2525
    %v2544 = vpop.f32.mrf.mxu0
    %v2545 = vadd.f32 0.0, %v2544
    %2546 = vdwg.mxu0
    %2547 = vmatpush.msra.mxu0 %v549
    %2548 = vmatpush.msra.mxu0 %v545
    %2549 = vmatpush.msra.mxu0 %v541
    %2550 = vmatpush.msra.mxu0 %v537
    %2551 = vmatpush.msra.mxu0 %v533
    %2552 = vmatpush.msra.mxu0 %v529
    %2553 = vmatpush.msra.mxu0 %v525
    %2554 = vmatpush.msra.mxu0 %v521
    %2555 = vmatpush.msra.mxu0 %v517
    %2556 = vmatpush.msra.mxu0 %v513
    %2557 = vmatpush.msra.mxu0 %v509
    %2558 = vmatpush.msra.mxu0 %v505
    %2559 = vmatpush.msra.mxu0 %v501
    %2560 = vmatpush.msra.mxu0 %v497
    %2561 = vmatpush.msra.mxu0 %v493
    %2562 = vmatpush.msra.mxu0 %v489
    %2563 = vmatmul.f32.gmra.mxu0 %v2525
    %v2564 = vpop.f32.mrf.mxu0
    %v2565 = vadd.f32 0.0, %v2564
    %2566 = vdwg.mxu0
    %2567 = vmatpush.msra.mxu0 %v550
    %2568 = vmatpush.msra.mxu0 %v546
    %2569 = vmatpush.msra.mxu0 %v542
    %2570 = vmatpush.msra.mxu0 %v538
    %2571 = vmatpush.msra.mxu0 %v534
    %2572 = vmatpush.msra.mxu0 %v530
    %2573 = vmatpush.msra.mxu0 %v526
    %2574 = vmatpush.msra.mxu0 %v522
    %2575 = vmatpush.msra.mxu0 %v518
    %2576 = vmatpush.msra.mxu0 %v514
    %2577 = vmatpush.msra.mxu0 %v510
    %2578 = vmatpush.msra.mxu0 %v506
    %2579 = vmatpush.msra.mxu0 %v502
    %2580 = vmatpush.msra.mxu0 %v498
    %2581 = vmatpush.msra.mxu0 %v494
    %2582 = vmatpush.msra.mxu0 %v490
    %2583 = vmatmul.f32.gmra.mxu0 %v2525
    %v2584 = vpop.f32.mrf.mxu0
    %v2585 = vadd.f32 0.0, %v2584
    %2586 = vdwg.mxu0
    %2587 = vmatpush.msra.mxu0 %v551
    %2588 = vmatpush.msra.mxu0 %v547
    %2589 = vmatpush.msra.mxu0 %v543
    %2590 = vmatpush.msra.mxu0 %v539
    %2591 = vmatpush.msra.mxu0 %v535
    %2592 = vmatpush.msra.mxu0 %v531
    %2593 = vmatpush.msra.mxu0 %v527
    %2594 = vmatpush.msra.mxu0 %v523
    %2595 = vmatpush.msra.mxu0 %v519
    %2596 = vmatpush.msra.mxu0 %v515
    %2597 = vmatpush.msra.mxu0 %v511
    %2598 = vmatpush.msra.mxu0 %v507
    %2599 = vmatpush.msra.mxu0 %v503
    %2600 = vmatpush.msra.mxu0 %v499
    %2601 = vmatpush.msra.mxu0 %v495
    %2602 = vmatpush.msra.mxu0 %v491
    %2603 = vmatmul.f32.gmra.mxu0 %v2525
    %v2604 = vpop.f32.mrf.mxu0
    %v2605 = vadd.f32 0.0, %v2604
    %2606 = vdwg.mxu0
    %v2611 = vrot.slane %v2545, 4
    %v2612 = vrot.slane %v2565, 4
    %v2613 = vrot.slane %v2585, 4
    %v2614 = vrot.slane %v2605, 4
    %v2619 = vadd.f32 %v288, %v2611
    %v2620 = vadd.f32 %v311, %v2612
    %v2621 = vadd.f32 %v334, %v2613
    %v2622 = vadd.f32 %v357, %v2614
    %v2624 = vrot.slane %v2523, 2
    %2626 = vmatpush.msra.mxu0 %v612
    %2627 = vmatpush.msra.mxu0 %v608
    %2628 = vmatpush.msra.mxu0 %v604
    %2629 = vmatpush.msra.mxu0 %v600
    %2630 = vmatpush.msra.mxu0 %v596
    %2631 = vmatpush.msra.mxu0 %v592
    %2632 = vmatpush.msra.mxu0 %v588
    %2633 = vmatpush.msra.mxu0 %v584
    %2634 = vmatpush.msra.mxu0 %v580
    %2635 = vmatpush.msra.mxu0 %v576
    %2636 = vmatpush.msra.mxu0 %v572
    %2637 = vmatpush.msra.mxu0 %v568
    %2638 = vmatpush.msra.mxu0 %v564
    %2639 = vmatpush.msra.mxu0 %v560
    %2640 = vmatpush.msra.mxu0 %v556
    %2641 = vmatpush.msra.mxu0 %v552
    %2642 = vmatmul.f32.gmra.mxu0 %v2624
    %v2643 = vpop.f32.mrf.mxu0
    %v2644 = vadd.f32 0.0, %v2643
    %2645 = vdwg.mxu0
    %2646 = vmatpush.msra.mxu0 %v613
    %2647 = vmatpush.msra.mxu0 %v609
    %2648 = vmatpush.msra.mxu0 %v605
    %2649 = vmatpush.msra.mxu0 %v601
    %2650 = vmatpush.msra.mxu0 %v597
    %2651 = vmatpush.msra.mxu0 %v593
    %2652 = vmatpush.msra.mxu0 %v589
    %2653 = vmatpush.msra.mxu0 %v585
    %2654 = vmatpush.msra.mxu0 %v581
    %2655 = vmatpush.msra.mxu0 %v577
    %2656 = vmatpush.msra.mxu0 %v573
    %2657 = vmatpush.msra.mxu0 %v569
    %2658 = vmatpush.msra.mxu0 %v565
    %2659 = vmatpush.msra.mxu0 %v561
    %2660 = vmatpush.msra.mxu0 %v557
    %2661 = vmatpush.msra.mxu0 %v553
    %2662 = vmatmul.f32.gmra.mxu0 %v2624
    %v2663 = vpop.f32.mrf.mxu0
    %v2664 = vadd.f32 0.0, %v2663
    %2665 = vdwg.mxu0
    %2666 = vmatpush.msra.mxu0 %v614
    %2667 = vmatpush.msra.mxu0 %v610
    %2668 = vmatpush.msra.mxu0 %v606
    %2669 = vmatpush.msra.mxu0 %v602
    %2670 = vmatpush.msra.mxu0 %v598
    %2671 = vmatpush.msra.mxu0 %v594
    %2672 = vmatpush.msra.mxu0 %v590
    %2673 = vmatpush.msra.mxu0 %v586
    %2674 = vmatpush.msra.mxu0 %v582
    %2675 = vmatpush.msra.mxu0 %v578
    %2676 = vmatpush.msra.mxu0 %v574
    %2677 = vmatpush.msra.mxu0 %v570
    %2678 = vmatpush.msra.mxu0 %v566
    %2679 = vmatpush.msra.mxu0 %v562
    %2680 = vmatpush.msra.mxu0 %v558
    %2681 = vmatpush.msra.mxu0 %v554
    %2682 = vmatmul.f32.gmra.mxu0 %v2624
    %v2683 = vpop.f32.mrf.mxu0
    %v2684 = vadd.f32 0.0, %v2683
    %2685 = vdwg.mxu0
    %2686 = vmatpush.msra.mxu0 %v615
    %2687 = vmatpush.msra.mxu0 %v611
    %2688 = vmatpush.msra.mxu0 %v607
    %2689 = vmatpush.msra.mxu0 %v603
    %2690 = vmatpush.msra.mxu0 %v599
    %2691 = vmatpush.msra.mxu0 %v595
    %2692 = vmatpush.msra.mxu0 %v591
    %2693 = vmatpush.msra.mxu0 %v587
    %2694 = vmatpush.msra.mxu0 %v583
    %2695 = vmatpush.msra.mxu0 %v579
    %2696 = vmatpush.msra.mxu0 %v575
    %2697 = vmatpush.msra.mxu0 %v571
    %2698 = vmatpush.msra.mxu0 %v567
    %2699 = vmatpush.msra.mxu0 %v563
    %2700 = vmatpush.msra.mxu0 %v559
    %2701 = vmatpush.msra.mxu0 %v555
    %2702 = vmatmul.f32.gmra.mxu0 %v2624
    %v2703 = vpop.f32.mrf.mxu0
    %v2704 = vadd.f32 0.0, %v2703
    %2705 = vdwg.mxu0
    %v2710 = vrot.slane %v2644, 4
    %v2711 = vrot.slane %v2664, 4
    %v2712 = vrot.slane %v2684, 4
    %v2713 = vrot.slane %v2704, 4
    %v2718 = vadd.f32 %v417, %v2710
    %v2719 = vadd.f32 %v440, %v2711
    %v2720 = vadd.f32 %v463, %v2712
    %v2721 = vadd.f32 %v486, %v2713
    %v2722 = vxor.u32 %v2619, 2147483648
    %v2723 = vmul.f32 %v2722, 1.442695
    %v2724 = vpow.pop %v2723
    %v2725 = vadd.f32 %v2724, 1.0
    %v2726 = vrcp.pop %v2725
    %v2727 = vmul.f32 %v2725, %v2726
    %v2728 = vsub.f32 1.0, %v2727
    %v2729 = vmul.f32 %v2726, %v2728
    %v2730 = vadd.f32 %v2726, %v2729
    %vm2731 = vweird.f32 %v2725
    %vm2732 = vweird.f32 %v2726
    %vm2733 = vmor %vm2731, %vm2732
    %v2734 = vsel %vm2733, %v2726, %v2730
    %v2735 = vand.u32 2147483647, %v2725
    %vm2736 = vcmp.eq.f32.partialorder %v2735, 8.507059e+37
    %v2737 = vand.u32 %v2725, 2147483648
    %v2738 = vor.u32 1.1754944e-38, %v2737
    %v2739 = vsel %vm2736, %v2738, %v2734
    %v2740 = vmul.f32 1.0, %v2739
    %v2741 = vxor.u32 %v2620, 2147483648
    %v2742 = vmul.f32 %v2741, 1.442695
    %v2743 = vpow.pop %v2742
    %v2744 = vadd.f32 %v2743, 1.0
    %v2745 = vrcp.pop %v2744
    %v2746 = vmul.f32 %v2744, %v2745
    %v2747 = vsub.f32 1.0, %v2746
    %v2748 = vmul.f32 %v2745, %v2747
    %v2749 = vadd.f32 %v2745, %v2748
    %vm2750 = vweird.f32 %v2744
    %vm2751 = vweird.f32 %v2745
    %vm2752 = vmor %vm2750, %vm2751
    %v2753 = vsel %vm2752, %v2745, %v2749
    %v2754 = vand.u32 2147483647, %v2744
    %vm2755 = vcmp.eq.f32.partialorder %v2754, 8.507059e+37
    %v2756 = vand.u32 %v2744, 2147483648
    %v2757 = vor.u32 1.1754944e-38, %v2756
    %v2758 = vsel %vm2755, %v2757, %v2753
    %v2759 = vmul.f32 1.0, %v2758
    %v2760 = vtanh.pop %v2621
    %v2761 = vxor.u32 %v2622, 2147483648
    %v2762 = vmul.f32 %v2761, 1.442695
    %v2763 = vpow.pop %v2762
    %v2764 = vadd.f32 %v2763, 1.0
    %v2765 = vrcp.pop %v2764
    %v2766 = vmul.f32 %v2764, %v2765
    %v2767 = vsub.f32 1.0, %v2766
    %v2768 = vmul.f32 %v2765, %v2767
    %v2769 = vadd.f32 %v2765, %v2768
    %vm2770 = vweird.f32 %v2764
    %vm2771 = vweird.f32 %v2765
    %vm2772 = vmor %vm2770, %vm2771
    %v2773 = vsel %vm2772, %v2765, %v2769
    %v2774 = vand.u32 2147483647, %v2764
    %vm2775 = vcmp.eq.f32.partialorder %v2774, 8.507059e+37
    %v2776 = vand.u32 %v2764, 2147483648
    %v2777 = vor.u32 1.1754944e-38, %v2776
    %v2778 = vsel %vm2775, %v2777, %v2773
    %v2779 = vmul.f32 1.0, %v2778
    %v2781 = vrot.slane %v2455, 6
    %v2783 = vmul.f32 %v2759, %v2781
    %v2784 = vmul.f32 %v2740, %v2760
    %v2785 = vadd.f32 %v2783, %v2784
    %v2786 = vtanh.pop %v2785
    %v2787 = vmul.f32 %v2779, %v2786
    %v2788 = vxor.u32 %v2718, 2147483648
    %v2789 = vmul.f32 %v2788, 1.442695
    %v2790 = vpow.pop %v2789
    %v2791 = vadd.f32 %v2790, 1.0
    %v2792 = vrcp.pop %v2791
    %v2793 = vmul.f32 %v2791, %v2792
    %v2794 = vsub.f32 1.0, %v2793
    %v2795 = vmul.f32 %v2792, %v2794
    %v2796 = vadd.f32 %v2792, %v2795
    %vm2797 = vweird.f32 %v2791
    %vm2798 = vweird.f32 %v2792
    %vm2799 = vmor %vm2797, %vm2798
    %v2800 = vsel %vm2799, %v2792, %v2796
    %v2801 = vand.u32 2147483647, %v2791
    %vm2802 = vcmp.eq.f32.partialorder %v2801, 8.507059e+37
    %v2803 = vand.u32 %v2791, 2147483648
    %v2804 = vor.u32 1.1754944e-38, %v2803
    %v2805 = vsel %vm2802, %v2804, %v2800
    %v2806 = vmul.f32 1.0, %v2805
    %v2807 = vxor.u32 %v2719, 2147483648
    %v2808 = vmul.f32 %v2807, 1.442695
    %v2809 = vpow.pop %v2808
    %v2810 = vadd.f32 %v2809, 1.0
    %v2811 = vrcp.pop %v2810
    %v2812 = vmul.f32 %v2810, %v2811
    %v2813 = vsub.f32 1.0, %v2812
    %v2814 = vmul.f32 %v2811, %v2813
    %v2815 = vadd.f32 %v2811, %v2814
    %vm2816 = vweird.f32 %v2810
    %vm2817 = vweird.f32 %v2811
    %vm2818 = vmor %vm2816, %vm2817
    %v2819 = vsel %vm2818, %v2811, %v2815
    %v2820 = vand.u32 2147483647, %v2810
    %vm2821 = vcmp.eq.f32.partialorder %v2820, 8.507059e+37
    %v2822 = vand.u32 %v2810, 2147483648
    %v2823 = vor.u32 1.1754944e-38, %v2822
    %v2824 = vsel %vm2821, %v2823, %v2819
    %v2825 = vmul.f32 1.0, %v2824
    %v2826 = vtanh.pop %v2720
    %v2827 = vxor.u32 %v2721, 2147483648
    %v2828 = vmul.f32 %v2827, 1.442695
    %v2829 = vpow.pop %v2828
    %v2830 = vadd.f32 %v2829, 1.0
    %v2831 = vrcp.pop %v2830
    %v2832 = vmul.f32 %v2830, %v2831
    %v2833 = vsub.f32 1.0, %v2832
    %v2834 = vmul.f32 %v2831, %v2833
    %v2835 = vadd.f32 %v2831, %v2834
    %vm2836 = vweird.f32 %v2830
    %vm2837 = vweird.f32 %v2831
    %vm2838 = vmor %vm2836, %vm2837
    %v2839 = vsel %vm2838, %v2831, %v2835
    %v2840 = vand.u32 2147483647, %v2830
    %vm2841 = vcmp.eq.f32.partialorder %v2840, 8.507059e+37
    %v2842 = vand.u32 %v2830, 2147483648
    %v2843 = vor.u32 1.1754944e-38, %v2842
    %v2844 = vsel %vm2841, %v2843, %v2839
    %v2845 = vmul.f32 1.0, %v2844
    %v2847 = vrot.slane %v2521, 6
    %v2849 = vmul.f32 %v2825, %v2847
    %v2850 = vmul.f32 %v2806, %v2826
    %v2851 = vadd.f32 %v2849, %v2850
    %v2852 = vtanh.pop %v2851
    %v2853 = vmul.f32 %v2845, %v2852
    %v2855 = vrot.slane %v2787, 4
    %2857 = vmatpush.msra.mxu0 %v548
    %2858 = vmatpush.msra.mxu0 %v544
    %2859 = vmatpush.msra.mxu0 %v540
    %2860 = vmatpush.msra.mxu0 %v536
    %2861 = vmatpush.msra.mxu0 %v532
    %2862 = vmatpush.msra.mxu0 %v528
    %2863 = vmatpush.msra.mxu0 %v524
    %2864 = vmatpush.msra.mxu0 %v520
    %2865 = vmatpush.msra.mxu0 %v516
    %2866 = vmatpush.msra.mxu0 %v512
    %2867 = vmatpush.msra.mxu0 %v508
    %2868 = vmatpush.msra.mxu0 %v504
    %2869 = vmatpush.msra.mxu0 %v500
    %2870 = vmatpush.msra.mxu0 %v496
    %2871 = vmatpush.msra.mxu0 %v492
    %2872 = vmatpush.msra.mxu0 %v488
    %2873 = vmatmul.f32.gmra.mxu0 %v2855
    %v2874 = vpop.f32.mrf.mxu0
    %v2875 = vadd.f32 0.0, %v2874
    %2876 = vdwg.mxu0
    %2877 = vmatpush.msra.mxu0 %v549
    %2878 = vmatpush.msra.mxu0 %v545
    %2879 = vmatpush.msra.mxu0 %v541
    %2880 = vmatpush.msra.mxu0 %v537
    %2881 = vmatpush.msra.mxu0 %v533
    %2882 = vmatpush.msra.mxu0 %v529
    %2883 = vmatpush.msra.mxu0 %v525
    %2884 = vmatpush.msra.mxu0 %v521
    %2885 = vmatpush.msra.mxu0 %v517
    %2886 = vmatpush.msra.mxu0 %v513
    %2887 = vmatpush.msra.mxu0 %v509
    %2888 = vmatpush.msra.mxu0 %v505
    %2889 = vmatpush.msra.mxu0 %v501
    %2890 = vmatpush.msra.mxu0 %v497
    %2891 = vmatpush.msra.mxu0 %v493
    %2892 = vmatpush.msra.mxu0 %v489
    %2893 = vmatmul.f32.gmra.mxu0 %v2855
    %v2894 = vpop.f32.mrf.mxu0
    %v2895 = vadd.f32 0.0, %v2894
    %2896 = vdwg.mxu0
    %2897 = vmatpush.msra.mxu0 %v550
    %2898 = vmatpush.msra.mxu0 %v546
    %2899 = vmatpush.msra.mxu0 %v542
    %2900 = vmatpush.msra.mxu0 %v538
    %2901 = vmatpush.msra.mxu0 %v534
    %2902 = vmatpush.msra.mxu0 %v530
    %2903 = vmatpush.msra.mxu0 %v526
    %2904 = vmatpush.msra.mxu0 %v522
    %2905 = vmatpush.msra.mxu0 %v518
    %2906 = vmatpush.msra.mxu0 %v514
    %2907 = vmatpush.msra.mxu0 %v510
    %2908 = vmatpush.msra.mxu0 %v506
    %2909 = vmatpush.msra.mxu0 %v502
    %2910 = vmatpush.msra.mxu0 %v498
    %2911 = vmatpush.msra.mxu0 %v494
    %2912 = vmatpush.msra.mxu0 %v490
    %2913 = vmatmul.f32.gmra.mxu0 %v2855
    %v2914 = vpop.f32.mrf.mxu0
    %v2915 = vadd.f32 0.0, %v2914
    %2916 = vdwg.mxu0
    %2917 = vmatpush.msra.mxu0 %v551
    %2918 = vmatpush.msra.mxu0 %v547
    %2919 = vmatpush.msra.mxu0 %v543
    %2920 = vmatpush.msra.mxu0 %v539
    %2921 = vmatpush.msra.mxu0 %v535
    %2922 = vmatpush.msra.mxu0 %v531
    %2923 = vmatpush.msra.mxu0 %v527
    %2924 = vmatpush.msra.mxu0 %v523
    %2925 = vmatpush.msra.mxu0 %v519
    %2926 = vmatpush.msra.mxu0 %v515
    %2927 = vmatpush.msra.mxu0 %v511
    %2928 = vmatpush.msra.mxu0 %v507
    %2929 = vmatpush.msra.mxu0 %v503
    %2930 = vmatpush.msra.mxu0 %v499
    %2931 = vmatpush.msra.mxu0 %v495
    %2932 = vmatpush.msra.mxu0 %v491
    %2933 = vmatmul.f32.gmra.mxu0 %v2855
    %v2934 = vpop.f32.mrf.mxu0
    %v2935 = vadd.f32 0.0, %v2934
    %2936 = vdwg.mxu0
    %v2941 = vrot.slane %v2875, 2
    %v2942 = vrot.slane %v2895, 2
    %v2943 = vrot.slane %v2915, 2
    %v2944 = vrot.slane %v2935, 2
    %v2949 = vadd.f32 %v288, %v2941
    %v2950 = vadd.f32 %v311, %v2942
    %v2951 = vadd.f32 %v334, %v2943
    %v2952 = vadd.f32 %v357, %v2944
    %v2954 = vrot.slane %v2853, 4
    %2956 = vmatpush.msra.mxu0 %v612
    %2957 = vmatpush.msra.mxu0 %v608
    %2958 = vmatpush.msra.mxu0 %v604
    %2959 = vmatpush.msra.mxu0 %v600
    %2960 = vmatpush.msra.mxu0 %v596
    %2961 = vmatpush.msra.mxu0 %v592
    %2962 = vmatpush.msra.mxu0 %v588
    %2963 = vmatpush.msra.mxu0 %v584
    %2964 = vmatpush.msra.mxu0 %v580
    %2965 = vmatpush.msra.mxu0 %v576
    %2966 = vmatpush.msra.mxu0 %v572
    %2967 = vmatpush.msra.mxu0 %v568
    %2968 = vmatpush.msra.mxu0 %v564
    %2969 = vmatpush.msra.mxu0 %v560
    %2970 = vmatpush.msra.mxu0 %v556
    %2971 = vmatpush.msra.mxu0 %v552
    %2972 = vmatmul.f32.gmra.mxu0 %v2954
    %v2973 = vpop.f32.mrf.mxu0
    %v2974 = vadd.f32 0.0, %v2973
    %2975 = vdwg.mxu0
    %2976 = vmatpush.msra.mxu0 %v613
    %2977 = vmatpush.msra.mxu0 %v609
    %2978 = vmatpush.msra.mxu0 %v605
    %2979 = vmatpush.msra.mxu0 %v601
    %2980 = vmatpush.msra.mxu0 %v597
    %2981 = vmatpush.msra.mxu0 %v593
    %2982 = vmatpush.msra.mxu0 %v589
    %2983 = vmatpush.msra.mxu0 %v585
    %2984 = vmatpush.msra.mxu0 %v581
    %2985 = vmatpush.msra.mxu0 %v577
    %2986 = vmatpush.msra.mxu0 %v573
    %2987 = vmatpush.msra.mxu0 %v569
    %2988 = vmatpush.msra.mxu0 %v565
    %2989 = vmatpush.msra.mxu0 %v561
    %2990 = vmatpush.msra.mxu0 %v557
    %2991 = vmatpush.msra.mxu0 %v553
    %2992 = vmatmul.f32.gmra.mxu0 %v2954
    %v2993 = vpop.f32.mrf.mxu0
    %v2994 = vadd.f32 0.0, %v2993
    %2995 = vdwg.mxu0
    %2996 = vmatpush.msra.mxu0 %v614
    %2997 = vmatpush.msra.mxu0 %v610
    %2998 = vmatpush.msra.mxu0 %v606
    %2999 = vmatpush.msra.mxu0 %v602
    %3000 = vmatpush.msra.mxu0 %v598
    %3001 = vmatpush.msra.mxu0 %v594
    %3002 = vmatpush.msra.mxu0 %v590
    %3003 = vmatpush.msra.mxu0 %v586
    %3004 = vmatpush.msra.mxu0 %v582
    %3005 = vmatpush.msra.mxu0 %v578
    %3006 = vmatpush.msra.mxu0 %v574
    %3007 = vmatpush.msra.mxu0 %v570
    %3008 = vmatpush.msra.mxu0 %v566
    %3009 = vmatpush.msra.mxu0 %v562
    %3010 = vmatpush.msra.mxu0 %v558
    %3011 = vmatpush.msra.mxu0 %v554
    %3012 = vmatmul.f32.gmra.mxu0 %v2954
    %v3013 = vpop.f32.mrf.mxu0
    %v3014 = vadd.f32 0.0, %v3013
    %3015 = vdwg.mxu0
    %3016 = vmatpush.msra.mxu0 %v615
    %3017 = vmatpush.msra.mxu0 %v611
    %3018 = vmatpush.msra.mxu0 %v607
    %3019 = vmatpush.msra.mxu0 %v603
    %3020 = vmatpush.msra.mxu0 %v599
    %3021 = vmatpush.msra.mxu0 %v595
    %3022 = vmatpush.msra.mxu0 %v591
    %3023 = vmatpush.msra.mxu0 %v587
    %3024 = vmatpush.msra.mxu0 %v583
    %3025 = vmatpush.msra.mxu0 %v579
    %3026 = vmatpush.msra.mxu0 %v575
    %3027 = vmatpush.msra.mxu0 %v571
    %3028 = vmatpush.msra.mxu0 %v567
    %3029 = vmatpush.msra.mxu0 %v563
    %3030 = vmatpush.msra.mxu0 %v559
    %3031 = vmatpush.msra.mxu0 %v555
    %3032 = vmatmul.f32.gmra.mxu0 %v2954
    %v3033 = vpop.f32.mrf.mxu0
    %v3034 = vadd.f32 0.0, %v3033
    %3035 = vdwg.mxu0
    %v3040 = vrot.slane %v2974, 2
    %v3041 = vrot.slane %v2994, 2
    %v3042 = vrot.slane %v3014, 2
    %v3043 = vrot.slane %v3034, 2
    %v3048 = vadd.f32 %v417, %v3040
    %v3049 = vadd.f32 %v440, %v3041
    %v3050 = vadd.f32 %v463, %v3042
    %v3051 = vadd.f32 %v486, %v3043
    %v3052 = vxor.u32 %v2949, 2147483648
    %v3053 = vmul.f32 %v3052, 1.442695
    %v3054 = vpow.pop %v3053
    %v3055 = vadd.f32 %v3054, 1.0
    %v3056 = vrcp.pop %v3055
    %v3057 = vmul.f32 %v3055, %v3056
    %v3058 = vsub.f32 1.0, %v3057
    %v3059 = vmul.f32 %v3056, %v3058
    %v3060 = vadd.f32 %v3056, %v3059
    %vm3061 = vweird.f32 %v3055
    %vm3062 = vweird.f32 %v3056
    %vm3063 = vmor %vm3061, %vm3062
    %v3064 = vsel %vm3063, %v3056, %v3060
    %v3065 = vand.u32 2147483647, %v3055
    %vm3066 = vcmp.eq.f32.partialorder %v3065, 8.507059e+37
    %v3067 = vand.u32 %v3055, 2147483648
    %v3068 = vor.u32 1.1754944e-38, %v3067
    %v3069 = vsel %vm3066, %v3068, %v3064
    %v3070 = vmul.f32 1.0, %v3069
    %v3071 = vxor.u32 %v2950, 2147483648
    %v3072 = vmul.f32 %v3071, 1.442695
    %v3073 = vpow.pop %v3072
    %v3074 = vadd.f32 %v3073, 1.0
    %v3075 = vrcp.pop %v3074
    %v3076 = vmul.f32 %v3074, %v3075
    %v3077 = vsub.f32 1.0, %v3076
    %v3078 = vmul.f32 %v3075, %v3077
    %v3079 = vadd.f32 %v3075, %v3078
    %vm3080 = vweird.f32 %v3074
    %vm3081 = vweird.f32 %v3075
    %vm3082 = vmor %vm3080, %vm3081
    %v3083 = vsel %vm3082, %v3075, %v3079
    %v3084 = vand.u32 2147483647, %v3074
    %vm3085 = vcmp.eq.f32.partialorder %v3084, 8.507059e+37
    %v3086 = vand.u32 %v3074, 2147483648
    %v3087 = vor.u32 1.1754944e-38, %v3086
    %v3088 = vsel %vm3085, %v3087, %v3083
    %v3089 = vmul.f32 1.0, %v3088
    %v3090 = vtanh.pop %v2951
    %v3091 = vxor.u32 %v2952, 2147483648
    %v3092 = vmul.f32 %v3091, 1.442695
    %v3093 = vpow.pop %v3092
    %v3094 = vadd.f32 %v3093, 1.0
    %v3095 = vrcp.pop %v3094
    %v3096 = vmul.f32 %v3094, %v3095
    %v3097 = vsub.f32 1.0, %v3096
    %v3098 = vmul.f32 %v3095, %v3097
    %v3099 = vadd.f32 %v3095, %v3098
    %vm3100 = vweird.f32 %v3094
    %vm3101 = vweird.f32 %v3095
    %vm3102 = vmor %vm3100, %vm3101
    %v3103 = vsel %vm3102, %v3095, %v3099
    %v3104 = vand.u32 2147483647, %v3094
    %vm3105 = vcmp.eq.f32.partialorder %v3104, 8.507059e+37
    %v3106 = vand.u32 %v3094, 2147483648
    %v3107 = vor.u32 1.1754944e-38, %v3106
    %v3108 = vsel %vm3105, %v3107, %v3103
    %v3109 = vmul.f32 1.0, %v3108
    %v3111 = vrot.slane %v2785, 6
    %v3113 = vmul.f32 %v3089, %v3111
    %v3114 = vmul.f32 %v3070, %v3090
    %v3115 = vadd.f32 %v3113, %v3114
    %v3116 = vtanh.pop %v3115
    %v3117 = vmul.f32 %v3109, %v3116
    %v3118 = vxor.u32 %v3048, 2147483648
    %v3119 = vmul.f32 %v3118, 1.442695
    %v3120 = vpow.pop %v3119
    %v3121 = vadd.f32 %v3120, 1.0
    %v3122 = vrcp.pop %v3121
    %v3123 = vmul.f32 %v3121, %v3122
    %v3124 = vsub.f32 1.0, %v3123
    %v3125 = vmul.f32 %v3122, %v3124
    %v3126 = vadd.f32 %v3122, %v3125
    %vm3127 = vweird.f32 %v3121
    %vm3128 = vweird.f32 %v3122
    %vm3129 = vmor %vm3127, %vm3128
    %v3130 = vsel %vm3129, %v3122, %v3126
    %v3131 = vand.u32 2147483647, %v3121
    %vm3132 = vcmp.eq.f32.partialorder %v3131, 8.507059e+37
    %v3133 = vand.u32 %v3121, 2147483648
    %v3134 = vor.u32 1.1754944e-38, %v3133
    %v3135 = vsel %vm3132, %v3134, %v3130
    %v3136 = vmul.f32 1.0, %v3135
    %v3137 = vxor.u32 %v3049, 2147483648
    %v3138 = vmul.f32 %v3137, 1.442695
    %v3139 = vpow.pop %v3138
    %v3140 = vadd.f32 %v3139, 1.0
    %v3141 = vrcp.pop %v3140
    %v3142 = vmul.f32 %v3140, %v3141
    %v3143 = vsub.f32 1.0, %v3142
    %v3144 = vmul.f32 %v3141, %v3143
    %v3145 = vadd.f32 %v3141, %v3144
    %vm3146 = vweird.f32 %v3140
    %vm3147 = vweird.f32 %v3141
    %vm3148 = vmor %vm3146, %vm3147
    %v3149 = vsel %vm3148, %v3141, %v3145
    %v3150 = vand.u32 2147483647, %v3140
    %vm3151 = vcmp.eq.f32.partialorder %v3150, 8.507059e+37
    %v3152 = vand.u32 %v3140, 2147483648
    %v3153 = vor.u32 1.1754944e-38, %v3152
    %v3154 = vsel %vm3151, %v3153, %v3149
    %v3155 = vmul.f32 1.0, %v3154
    %v3156 = vtanh.pop %v3050
    %v3157 = vxor.u32 %v3051, 2147483648
    %v3158 = vmul.f32 %v3157, 1.442695
    %v3159 = vpow.pop %v3158
    %v3160 = vadd.f32 %v3159, 1.0
    %v3161 = vrcp.pop %v3160
    %v3162 = vmul.f32 %v3160, %v3161
    %v3163 = vsub.f32 1.0, %v3162
    %v3164 = vmul.f32 %v3161, %v3163
    %v3165 = vadd.f32 %v3161, %v3164
    %vm3166 = vweird.f32 %v3160
    %vm3167 = vweird.f32 %v3161
    %vm3168 = vmor %vm3166, %vm3167
    %v3169 = vsel %vm3168, %v3161, %v3165
    %v3170 = vand.u32 2147483647, %v3160
    %vm3171 = vcmp.eq.f32.partialorder %v3170, 8.507059e+37
    %v3172 = vand.u32 %v3160, 2147483648
    %v3173 = vor.u32 1.1754944e-38, %v3172
    %v3174 = vsel %vm3171, %v3173, %v3169
    %v3175 = vmul.f32 1.0, %v3174
    %v3177 = vrot.slane %v2851, 6
    %v3179 = vmul.f32 %v3155, %v3177
    %v3180 = vmul.f32 %v3136, %v3156
    %v3181 = vadd.f32 %v3179, %v3180
    %v3182 = vtanh.pop %v3181
    %v3183 = vmul.f32 %v3175, %v3182
    %v3184 = vld [vmem:[#allocation7] sm:$0xff]
    %v3185 = vld [vmem:[#allocation7 + $0x8] sm:$0xff]
    %v3186 = vld [vmem:[#allocation7 + $0x10] sm:$0xff]
    %v3187 = vld [vmem:[#allocation7 + $0x18] sm:$0xff]
    %v3188 = vld [vmem:[#allocation7 + $0x20] sm:$0xff]
    %v3189 = vld [vmem:[#allocation7 + $0x28] sm:$0xff]
    %v3190 = vld [vmem:[#allocation7 + $0x30] sm:$0xff]
    %v3191 = vld [vmem:[#allocation7 + $0x38] sm:$0xff]
    %v3192 = vld [vmem:[#allocation7 + $0x40] sm:$0xff]
    %v3193 = vld [vmem:[#allocation7 + $0x48] sm:$0xff]
    %v3194 = vld [vmem:[#allocation7 + $0x50] sm:$0xff]
    %v3195 = vld [vmem:[#allocation7 + $0x58] sm:$0xff]
    %v3196 = vld [vmem:[#allocation7 + $0x60] sm:$0xff]
    %v3197 = vld [vmem:[#allocation7 + $0x68] sm:$0xff]
    %v3198 = vld [vmem:[#allocation7 + $0x70] sm:$0xff]
    %v3199 = vld [vmem:[#allocation7 + $0x78] sm:$0xff]
    %v3200 = vld [vmem:[%s9] sm:$0x1]
    %v3202 = vperm.slane %v3200, 0
    %v3205 = vrot.slane %v3117, 6
    %3207 = vmatpush.msra.mxu0 %v3199
    %3208 = vmatpush.msra.mxu0 %v3198
    %3209 = vmatpush.msra.mxu0 %v3197
    %3210 = vmatpush.msra.mxu0 %v3196
    %3211 = vmatpush.msra.mxu0 %v3195
    %3212 = vmatpush.msra.mxu0 %v3194
    %3213 = vmatpush.msra.mxu0 %v3193
    %3214 = vmatpush.msra.mxu0 %v3192
    %3215 = vmatpush.msra.mxu0 %v3191
    %3216 = vmatpush.msra.mxu0 %v3190
    %3217 = vmatpush.msra.mxu0 %v3189
    %3218 = vmatpush.msra.mxu0 %v3188
    %3219 = vmatpush.msra.mxu0 %v3187
    %3220 = vmatpush.msra.mxu0 %v3186
    %3221 = vmatpush.msra.mxu0 %v3185
    %3222 = vmatpush.msra.mxu0 %v3184
    %3223 = vmatmul.f32.gmra.mxu0 %v3205
    %v3224 = vpop.f32.mrf.mxu0
    %v3225 = vadd.f32 %v3202, %v3224
    %3226 = vdwg.mxu0
    %v3227 = vmax.f32 %v3225, 0.0
    %v3228 = vld [vmem:[#allocation8] sm:$0xff]
    %v3229 = vld [vmem:[#allocation8 + $0x8] sm:$0xff]
    %v3230 = vld [vmem:[#allocation8 + $0x10] sm:$0xff]
    %v3231 = vld [vmem:[#allocation8 + $0x18] sm:$0xff]
    %v3232 = vld [vmem:[#allocation8 + $0x20] sm:$0xff]
    %v3233 = vld [vmem:[#allocation8 + $0x28] sm:$0xff]
    %v3234 = vld [vmem:[#allocation8 + $0x30] sm:$0xff]
    %v3235 = vld [vmem:[#allocation8 + $0x38] sm:$0xff]
    %v3236 = vld [vmem:[#allocation8 + $0x40] sm:$0xff]
    %v3237 = vld [vmem:[#allocation8 + $0x48] sm:$0xff]
    %v3238 = vld [vmem:[#allocation8 + $0x50] sm:$0xff]
    %v3239 = vld [vmem:[#allocation8 + $0x58] sm:$0xff]
    %v3240 = vld [vmem:[#allocation8 + $0x60] sm:$0xff]
    %v3241 = vld [vmem:[#allocation8 + $0x68] sm:$0xff]
    %v3242 = vld [vmem:[#allocation8 + $0x70] sm:$0xff]
    %v3243 = vld [vmem:[#allocation8 + $0x78] sm:$0xff]
    %v3244 = vld [vmem:[#allocation10] sm:$0x1]
    %v3246 = vperm.slane %v3244, 0
    %3248 = vmatpush.msra.mxu0 %v3243
    %3249 = vmatpush.msra.mxu0 %v3242
    %3250 = vmatpush.msra.mxu0 %v3241
    %3251 = vmatpush.msra.mxu0 %v3240
    %3252 = vmatpush.msra.mxu0 %v3239
    %3253 = vmatpush.msra.mxu0 %v3238
    %3254 = vmatpush.msra.mxu0 %v3237
    %3255 = vmatpush.msra.mxu0 %v3236
    %3256 = vmatpush.msra.mxu0 %v3235
    %3257 = vmatpush.msra.mxu0 %v3234
    %3258 = vmatpush.msra.mxu0 %v3233
    %3259 = vmatpush.msra.mxu0 %v3232
    %3260 = vmatpush.msra.mxu0 %v3231
    %3261 = vmatpush.msra.mxu0 %v3230
    %3262 = vmatpush.msra.mxu0 %v3229
    %3263 = vmatpush.msra.mxu0 %v3228
    %3264 = vmatmul.f32.gmra.mxu0 %v3227
    %v3265 = vpop.f32.mrf.mxu0
    %v3266 = vadd.f32 %v3246, %v3265
    %3267 = vdwg.mxu0
    %v3268 = vmax.f32 %v3266, 0.0
    %v3269 = vld [vmem:[#allocation11] sm:$0xff]
    %v3270 = vld [vmem:[#allocation11 + $0x8] sm:$0xff]
    %v3271 = vld [vmem:[#allocation11 + $0x10] sm:$0xff]
    %v3272 = vld [vmem:[#allocation11 + $0x18] sm:$0xff]
    %v3273 = vld [vmem:[#allocation11 + $0x20] sm:$0xff]
    %v3274 = vld [vmem:[#allocation11 + $0x28] sm:$0xff]
    %v3275 = vld [vmem:[#allocation11 + $0x30] sm:$0xff]
    %v3276 = vld [vmem:[#allocation11 + $0x38] sm:$0xff]
    %v3277 = vld [vmem:[#allocation11 + $0x40] sm:$0xff]
    %v3278 = vld [vmem:[#allocation11 + $0x48] sm:$0xff]
    %v3279 = vld [vmem:[#allocation11 + $0x50] sm:$0xff]
    %v3280 = vld [vmem:[#allocation11 + $0x58] sm:$0xff]
    %v3281 = vld [vmem:[#allocation11 + $0x60] sm:$0xff]
    %v3282 = vld [vmem:[#allocation11 + $0x68] sm:$0xff]
    %v3283 = vld [vmem:[#allocation11 + $0x70] sm:$0xff]
    %v3284 = vld [vmem:[#allocation11 + $0x78] sm:$0xff]
    %v3285 = vld [vmem:[#allocation13] sm:$0x1]
    %v3287 = vperm.slane %v3285, 0
    %3289 = vmatpush.msra.mxu0 %v3284
    %3290 = vmatpush.msra.mxu0 %v3283
    %3291 = vmatpush.msra.mxu0 %v3282
    %3292 = vmatpush.msra.mxu0 %v3281
    %3293 = vmatpush.msra.mxu0 %v3280
    %3294 = vmatpush.msra.mxu0 %v3279
    %3295 = vmatpush.msra.mxu0 %v3278
    %3296 = vmatpush.msra.mxu0 %v3277
    %3297 = vmatpush.msra.mxu0 %v3276
    %3298 = vmatpush.msra.mxu0 %v3275
    %3299 = vmatpush.msra.mxu0 %v3274
    %3300 = vmatpush.msra.mxu0 %v3273
    %3301 = vmatpush.msra.mxu0 %v3272
    %3302 = vmatpush.msra.mxu0 %v3271
    %3303 = vmatpush.msra.mxu0 %v3270
    %3304 = vmatpush.msra.mxu0 %v3269
    %3305 = vmatmul.f32.gmra.mxu0 %v3268
    %v3306 = vpop.f32.mrf.mxu0
    %v3307 = vadd.f32 %v3287, %v3306
    %3308 = vdwg.mxu0
    %v3309 = vmax.f32 %v3307, 0.0
    %v3310 = vld [vmem:[%s14] sm:$0xff]
    %v3311 = vld [vmem:[%s14 + $0x8] sm:$0xff]
    %v3312 = vld [vmem:[%s14 + $0x10] sm:$0xff]
    %v3313 = vld [vmem:[%s14 + $0x18] sm:$0xff]
    %v3314 = vld [vmem:[%s14 + $0x20] sm:$0xff]
    %v3315 = vld [vmem:[%s14 + $0x28] sm:$0xff]
    %v3316 = vld [vmem:[%s14 + $0x30] sm:$0xff]
    %v3317 = vld [vmem:[%s14 + $0x38] sm:$0xff]
    %v3318 = vld [vmem:[%s14 + $0x40] sm:$0xff]
    %v3319 = vld [vmem:[%s14 + $0x48] sm:$0xff]
    %v3320 = vld [vmem:[%s14 + $0x50] sm:$0xff]
    %v3321 = vld [vmem:[%s14 + $0x58] sm:$0xff]
    %v3322 = vld [vmem:[%s14 + $0x60] sm:$0xff]
    %v3323 = vld [vmem:[%s14 + $0x68] sm:$0xff]
    %v3324 = vld [vmem:[%s14 + $0x70] sm:$0xff]
    %v3325 = vld [vmem:[%s14 + $0x78] sm:$0xff]
    %v3326 = vld [vmem:[%s14 + $0x80] sm:$0xff]
    %v3327 = vld [vmem:[%s14 + $0x88] sm:$0xff]
    %v3328 = vld [vmem:[%s14 + $0x90] sm:$0xff]
    %v3329 = vld [vmem:[%s14 + $0x98] sm:$0xff]
    %v3330 = vld [vmem:[%s14 + $0xa0] sm:$0xff]
    %v3331 = vld [vmem:[%s14 + $0xa8] sm:$0xff]
    %v3332 = vld [vmem:[%s14 + $0xb0] sm:$0xff]
    %v3333 = vld [vmem:[%s14 + $0xb8] sm:$0xff]
    %v3334 = vld [vmem:[%s14 + $0xc0] sm:$0xff]
    %v3335 = vld [vmem:[%s14 + $0xc8] sm:$0xff]
    %v3336 = vld [vmem:[%s14 + $0xd0] sm:$0xff]
    %v3337 = vld [vmem:[%s14 + $0xd8] sm:$0xff]
    %v3338 = vld [vmem:[%s14 + $0xe0] sm:$0xff]
    %v3339 = vld [vmem:[%s14 + $0xe8] sm:$0xff]
    %v3340 = vld [vmem:[%s14 + $0xf0] sm:$0xff]
    %v3341 = vld [vmem:[%s14 + $0xf8] sm:$0xff]
    %v3342 = vld [vmem:[#allocation14] sm:$0xff]
    %v3343 = vld [vmem:[#allocation14 + $0x8] sm:$0xff]
    %v3344 = vld [vmem:[#allocation14 + $0x10] sm:$0xff]
    %v3345 = vld [vmem:[#allocation14 + $0x18] sm:$0xff]
    %v3346 = vld [vmem:[#allocation14 + $0x20] sm:$0xff]
    %v3347 = vld [vmem:[#allocation14 + $0x28] sm:$0xff]
    %v3348 = vld [vmem:[#allocation14 + $0x30] sm:$0xff]
    %v3349 = vld [vmem:[#allocation14 + $0x38] sm:$0xff]
    %v3350 = vld [vmem:[#allocation14 + $0x40] sm:$0xff]
    %v3351 = vld [vmem:[#allocation14 + $0x48] sm:$0xff]
    %v3352 = vld [vmem:[#allocation14 + $0x50] sm:$0xff]
    %v3353 = vld [vmem:[#allocation14 + $0x58] sm:$0xff]
    %v3354 = vld [vmem:[#allocation14 + $0x60] sm:$0xff]
    %v3355 = vld [vmem:[#allocation14 + $0x68] sm:$0xff]
    %v3356 = vld [vmem:[#allocation14 + $0x70] sm:$0xff]
    %v3357 = vld [vmem:[#allocation14 + $0x78] sm:$0xff]
    %v3358 = vld [vmem:[#allocation14 + $0x80] sm:$0xff]
    %v3359 = vld [vmem:[#allocation14 + $0x88] sm:$0xff]
    %v3360 = vld [vmem:[#allocation14 + $0x90] sm:$0xff]
    %v3361 = vld [vmem:[#allocation14 + $0x98] sm:$0xff]
    %v3362 = vld [vmem:[#allocation14 + $0xa0] sm:$0xff]
    %v3363 = vld [vmem:[#allocation14 + $0xa8] sm:$0xff]
    %v3364 = vld [vmem:[#allocation14 + $0xb0] sm:$0xff]
    %v3365 = vld [vmem:[#allocation14 + $0xb8] sm:$0xff]
    %v3366 = vld [vmem:[#allocation14 + $0xc0] sm:$0xff]
    %v3367 = vld [vmem:[#allocation14 + $0xc8] sm:$0xff]
    %v3368 = vld [vmem:[#allocation14 + $0xd0] sm:$0xff]
    %v3369 = vld [vmem:[#allocation14 + $0xd8] sm:$0xff]
    %v3370 = vld [vmem:[#allocation14 + $0xe0] sm:$0xff]
    %v3371 = vld [vmem:[#allocation14 + $0xe8] sm:$0xff]
    %v3372 = vld [vmem:[#allocation14 + $0xf0] sm:$0xff]
    %v3373 = vld [vmem:[#allocation14 + $0xf8] sm:$0xff]
    %v3375 = vrot.slane %v3183, 6
    %3377 = vmatpush.msra.mxu0 %v3372
    %3378 = vmatpush.msra.mxu0 %v3370
    %3379 = vmatpush.msra.mxu0 %v3368
    %3380 = vmatpush.msra.mxu0 %v3366
    %3381 = vmatpush.msra.mxu0 %v3364
    %3382 = vmatpush.msra.mxu0 %v3362
    %3383 = vmatpush.msra.mxu0 %v3360
    %3384 = vmatpush.msra.mxu0 %v3358
    %3385 = vmatpush.msra.mxu0 %v3356
    %3386 = vmatpush.msra.mxu0 %v3354
    %3387 = vmatpush.msra.mxu0 %v3352
    %3388 = vmatpush.msra.mxu0 %v3350
    %3389 = vmatpush.msra.mxu0 %v3348
    %3390 = vmatpush.msra.mxu0 %v3346
    %3391 = vmatpush.msra.mxu0 %v3344
    %3392 = vmatpush.msra.mxu0 %v3342
    %3393 = vmatmul.f32.gmra.mxu0 %v3375
    %v3394 = vpop.f32.mrf.mxu0
    %v3395 = vadd.f32 0.0, %v3394
    %3396 = vdwg.mxu0
    %3397 = vmatpush.msra.mxu0 %v3373
    %3398 = vmatpush.msra.mxu0 %v3371
    %3399 = vmatpush.msra.mxu0 %v3369
    %3400 = vmatpush.msra.mxu0 %v3367
    %3401 = vmatpush.msra.mxu0 %v3365
    %3402 = vmatpush.msra.mxu0 %v3363
    %3403 = vmatpush.msra.mxu0 %v3361
    %3404 = vmatpush.msra.mxu0 %v3359
    %3405 = vmatpush.msra.mxu0 %v3357
    %3406 = vmatpush.msra.mxu0 %v3355
    %3407 = vmatpush.msra.mxu0 %v3353
    %3408 = vmatpush.msra.mxu0 %v3351
    %3409 = vmatpush.msra.mxu0 %v3349
    %3410 = vmatpush.msra.mxu0 %v3347
    %3411 = vmatpush.msra.mxu0 %v3345
    %3412 = vmatpush.msra.mxu0 %v3343
    %3413 = vmatmul.f32.gmra.mxu0 %v3375
    %v3414 = vpop.f32.mrf.mxu0
    %v3415 = vadd.f32 0.0, %v3414
    %3416 = vdwg.mxu0
    %3417 = vmatpush.msra.mxu0 %v3340
    %3418 = vmatpush.msra.mxu0 %v3338
    %3419 = vmatpush.msra.mxu0 %v3336
    %3420 = vmatpush.msra.mxu0 %v3334
    %3421 = vmatpush.msra.mxu0 %v3332
    %3422 = vmatpush.msra.mxu0 %v3330
    %3423 = vmatpush.msra.mxu0 %v3328
    %3424 = vmatpush.msra.mxu0 %v3326
    %3425 = vmatpush.msra.mxu0 %v3324
    %3426 = vmatpush.msra.mxu0 %v3322
    %3427 = vmatpush.msra.mxu0 %v3320
    %3428 = vmatpush.msra.mxu0 %v3318
    %3429 = vmatpush.msra.mxu0 %v3316
    %3430 = vmatpush.msra.mxu0 %v3314
    %3431 = vmatpush.msra.mxu0 %v3312
    %3432 = vmatpush.msra.mxu0 %v3310
    %3433 = vmatmul.f32.gmra.mxu0 %v3309
    %v3434 = vpop.f32.mrf.mxu0
    %v3435 = vadd.f32 %v3395, %v3434
    %3436 = vdwg.mxu0
    %3437 = vmatpush.msra.mxu0 %v3341
    %3438 = vmatpush.msra.mxu0 %v3339
    %3439 = vmatpush.msra.mxu0 %v3337
    %3440 = vmatpush.msra.mxu0 %v3335
    %3441 = vmatpush.msra.mxu0 %v3333
    %3442 = vmatpush.msra.mxu0 %v3331
    %3443 = vmatpush.msra.mxu0 %v3329
    %3444 = vmatpush.msra.mxu0 %v3327
    %3445 = vmatpush.msra.mxu0 %v3325
    %3446 = vmatpush.msra.mxu0 %v3323
    %3447 = vmatpush.msra.mxu0 %v3321
    %3448 = vmatpush.msra.mxu0 %v3319
    %3449 = vmatpush.msra.mxu0 %v3317
    %3450 = vmatpush.msra.mxu0 %v3315
    %3451 = vmatpush.msra.mxu0 %v3313
    %3452 = vmatpush.msra.mxu0 %v3311
    %3453 = vmatmul.f32.gmra.mxu0 %v3309
    %v3454 = vpop.f32.mrf.mxu0
    %v3455 = vadd.f32 %v3415, %v3454
    %3456 = vdwg.mxu0
    %v3457 = vld [vmem:[%s16] sm:$0x3]
    %v3459 = vperm.slane %v3457, 0
    %v3460 = vperm.slane %v3457, 1
    %v3463 = vadd.f32 %v3435, %v3459
    %v3464 = vadd.f32 %v3455, %v3460
    %v3465 = vmax.f32 %v3463, 0.0
    %v3466 = vmax.f32 %v3464, 0.0
    %v3467 = vld [vmem:[#allocation16] sm:$0xff]
    %v3468 = vld [vmem:[#allocation16 + $0x8] sm:$0xff]
    %v3469 = vld [vmem:[#allocation16 + $0x10] sm:$0xff]
    %v3470 = vld [vmem:[#allocation16 + $0x18] sm:$0xff]
    %v3471 = vld [vmem:[#allocation16 + $0x20] sm:$0xff]
    %v3472 = vld [vmem:[#allocation16 + $0x28] sm:$0xff]
    %v3473 = vld [vmem:[#allocation16 + $0x30] sm:$0xff]
    %v3474 = vld [vmem:[#allocation16 + $0x38] sm:$0xff]
    %v3475 = vld [vmem:[#allocation16 + $0x40] sm:$0xff]
    %v3476 = vld [vmem:[#allocation16 + $0x48] sm:$0xff]
    %v3477 = vld [vmem:[#allocation16 + $0x50] sm:$0xff]
    %v3478 = vld [vmem:[#allocation16 + $0x58] sm:$0xff]
    %v3479 = vld [vmem:[#allocation16 + $0x60] sm:$0xff]
    %v3480 = vld [vmem:[#allocation16 + $0x68] sm:$0xff]
    %v3481 = vld [vmem:[#allocation16 + $0x70] sm:$0xff]
    %v3482 = vld [vmem:[#allocation16 + $0x78] sm:$0xff]
    %v3483 = vld [vmem:[#allocation16 + $0x80] sm:$0xff]
    %v3484 = vld [vmem:[#allocation16 + $0x88] sm:$0xff]
    %v3485 = vld [vmem:[#allocation16 + $0x90] sm:$0xff]
    %v3486 = vld [vmem:[#allocation16 + $0x98] sm:$0xff]
    %v3487 = vld [vmem:[#allocation16 + $0xa0] sm:$0xff]
    %v3488 = vld [vmem:[#allocation16 + $0xa8] sm:$0xff]
    %v3489 = vld [vmem:[#allocation16 + $0xb0] sm:$0xff]
    %v3490 = vld [vmem:[#allocation16 + $0xb8] sm:$0xff]
    %v3491 = vld [vmem:[#allocation16 + $0xc0] sm:$0xff]
    %v3492 = vld [vmem:[#allocation16 + $0xc8] sm:$0xff]
    %v3493 = vld [vmem:[#allocation16 + $0xd0] sm:$0xff]
    %v3494 = vld [vmem:[#allocation16 + $0xd8] sm:$0xff]
    %v3495 = vld [vmem:[#allocation16 + $0xe0] sm:$0xff]
    %v3496 = vld [vmem:[#allocation16 + $0xe8] sm:$0xff]
    %v3497 = vld [vmem:[#allocation16 + $0xf0] sm:$0xff]
    %v3498 = vld [vmem:[#allocation16 + $0xf8] sm:$0xff]
    %v3499 = vld [vmem:[#allocation16 + $0x100] sm:$0xff]
    %v3500 = vld [vmem:[#allocation16 + $0x108] sm:$0xff]
    %v3501 = vld [vmem:[#allocation16 + $0x110] sm:$0xff]
    %v3502 = vld [vmem:[#allocation16 + $0x118] sm:$0xff]
    %v3503 = vld [vmem:[#allocation16 + $0x120] sm:$0xff]
    %v3504 = vld [vmem:[#allocation16 + $0x128] sm:$0xff]
    %v3505 = vld [vmem:[#allocation16 + $0x130] sm:$0xff]
    %v3506 = vld [vmem:[#allocation16 + $0x138] sm:$0xff]
    %v3507 = vld [vmem:[#allocation16 + $0x140] sm:$0xff]
    %v3508 = vld [vmem:[#allocation16 + $0x148] sm:$0xff]
    %v3509 = vld [vmem:[#allocation16 + $0x150] sm:$0xff]
    %v3510 = vld [vmem:[#allocation16 + $0x158] sm:$0xff]
    %v3511 = vld [vmem:[#allocation16 + $0x160] sm:$0xff]
    %v3512 = vld [vmem:[#allocation16 + $0x168] sm:$0xff]
    %v3513 = vld [vmem:[#allocation16 + $0x170] sm:$0xff]
    %v3514 = vld [vmem:[#allocation16 + $0x178] sm:$0xff]
    %v3515 = vld [vmem:[#allocation16 + $0x180] sm:$0xff]
    %v3516 = vld [vmem:[#allocation16 + $0x188] sm:$0xff]
    %v3517 = vld [vmem:[#allocation16 + $0x190] sm:$0xff]
    %v3518 = vld [vmem:[#allocation16 + $0x198] sm:$0xff]
    %v3519 = vld [vmem:[#allocation16 + $0x1a0] sm:$0xff]
    %v3520 = vld [vmem:[#allocation16 + $0x1a8] sm:$0xff]
    %v3521 = vld [vmem:[#allocation16 + $0x1b0] sm:$0xff]
    %v3522 = vld [vmem:[#allocation16 + $0x1b8] sm:$0xff]
    %v3523 = vld [vmem:[#allocation16 + $0x1c0] sm:$0xff]
    %v3524 = vld [vmem:[#allocation16 + $0x1c8] sm:$0xff]
    %v3525 = vld [vmem:[#allocation16 + $0x1d0] sm:$0xff]
    %v3526 = vld [vmem:[#allocation16 + $0x1d8] sm:$0xff]
    %v3527 = vld [vmem:[#allocation16 + $0x1e0] sm:$0xff]
    %v3528 = vld [vmem:[#allocation16 + $0x1e8] sm:$0xff]
    %v3529 = vld [vmem:[#allocation16 + $0x1f0] sm:$0xff]
    %v3530 = vld [vmem:[#allocation16 + $0x1f8] sm:$0xff]
    %v3531 = vld [vmem:[%s18] sm:$0x3]
    %v3533 = vperm.slane %v3531, 0
    %v3534 = vperm.slane %v3531, 1
    %3537 = vmatpush.msra.mxu0 %v3497
    %3538 = vmatpush.msra.mxu0 %v3495
    %3539 = vmatpush.msra.mxu0 %v3493
    %3540 = vmatpush.msra.mxu0 %v3491
    %3541 = vmatpush.msra.mxu0 %v3489
    %3542 = vmatpush.msra.mxu0 %v3487
    %3543 = vmatpush.msra.mxu0 %v3485
    %3544 = vmatpush.msra.mxu0 %v3483
    %3545 = vmatpush.msra.mxu0 %v3481
    %3546 = vmatpush.msra.mxu0 %v3479
    %3547 = vmatpush.msra.mxu0 %v3477
    %3548 = vmatpush.msra.mxu0 %v3475
    %3549 = vmatpush.msra.mxu0 %v3473
    %3550 = vmatpush.msra.mxu0 %v3471
    %3551 = vmatpush.msra.mxu0 %v3469
    %3552 = vmatpush.msra.mxu0 %v3467
    %3553 = vmatmul.f32.gmra.mxu0 %v3465
    %v3554 = vpop.f32.mrf.mxu0
    %v3555 = vadd.f32 %v3533, %v3554
    %3556 = vdwg.mxu0
    %3557 = vmatpush.msra.mxu0 %v3529
    %3558 = vmatpush.msra.mxu0 %v3527
    %3559 = vmatpush.msra.mxu0 %v3525
    %3560 = vmatpush.msra.mxu0 %v3523
    %3561 = vmatpush.msra.mxu0 %v3521
    %3562 = vmatpush.msra.mxu0 %v3519
    %3563 = vmatpush.msra.mxu0 %v3517
    %3564 = vmatpush.msra.mxu0 %v3515
    %3565 = vmatpush.msra.mxu0 %v3513
    %3566 = vmatpush.msra.mxu0 %v3511
    %3567 = vmatpush.msra.mxu0 %v3509
    %3568 = vmatpush.msra.mxu0 %v3507
    %3569 = vmatpush.msra.mxu0 %v3505
    %3570 = vmatpush.msra.mxu0 %v3503
    %3571 = vmatpush.msra.mxu0 %v3501
    %3572 = vmatpush.msra.mxu0 %v3499
    %3573 = vmatmul.f32.gmra.mxu0 %v3466
    %v3574 = vpop.f32.mrf.mxu0
    %v3575 = vadd.f32 %v3555, %v3574
    %3576 = vdwg.mxu0
    %3577 = vmatpush.msra.mxu0 %v3498
    %3578 = vmatpush.msra.mxu0 %v3496
    %3579 = vmatpush.msra.mxu0 %v3494
    %3580 = vmatpush.msra.mxu0 %v3492
    %3581 = vmatpush.msra.mxu0 %v3490
    %3582 = vmatpush.msra.mxu0 %v3488
    %3583 = vmatpush.msra.mxu0 %v3486
    %3584 = vmatpush.msra.mxu0 %v3484
    %3585 = vmatpush.msra.mxu0 %v3482
    %3586 = vmatpush.msra.mxu0 %v3480
    %3587 = vmatpush.msra.mxu0 %v3478
    %3588 = vmatpush.msra.mxu0 %v3476
    %3589 = vmatpush.msra.mxu0 %v3474
    %3590 = vmatpush.msra.mxu0 %v3472
    %3591 = vmatpush.msra.mxu0 %v3470
    %3592 = vmatpush.msra.mxu0 %v3468
    %3593 = vmatmul.f32.gmra.mxu0 %v3465
    %v3594 = vpop.f32.mrf.mxu0
    %v3595 = vadd.f32 %v3534, %v3594
    %3596 = vdwg.mxu0
    %3597 = vmatpush.msra.mxu0 %v3530
    %3598 = vmatpush.msra.mxu0 %v3528
    %3599 = vmatpush.msra.mxu0 %v3526
    %3600 = vmatpush.msra.mxu0 %v3524
    %3601 = vmatpush.msra.mxu0 %v3522
    %3602 = vmatpush.msra.mxu0 %v3520
    %3603 = vmatpush.msra.mxu0 %v3518
    %3604 = vmatpush.msra.mxu0 %v3516
    %3605 = vmatpush.msra.mxu0 %v3514
    %3606 = vmatpush.msra.mxu0 %v3512
    %3607 = vmatpush.msra.mxu0 %v3510
    %3608 = vmatpush.msra.mxu0 %v3508
    %3609 = vmatpush.msra.mxu0 %v3506
    %3610 = vmatpush.msra.mxu0 %v3504
    %3611 = vmatpush.msra.mxu0 %v3502
    %3612 = vmatpush.msra.mxu0 %v3500
    %3613 = vmatmul.f32.gmra.mxu0 %v3466
    %v3614 = vpop.f32.mrf.mxu0
    %v3615 = vadd.f32 %v3595, %v3614
    %3616 = vdwg.mxu0
    %v3617 = vmax.f32 %v3575, 0.0
    %v3618 = vmax.f32 %v3615, 0.0
    %v3619 = vld [vmem:[#allocation17] sm:$0xff]
    %v3620 = vld [vmem:[#allocation17 + $0x8] sm:$0xff]
    %v3621 = vld [vmem:[#allocation17 + $0x10] sm:$0xff]
    %v3622 = vld [vmem:[#allocation17 + $0x18] sm:$0xff]
    %v3623 = vld [vmem:[#allocation17 + $0x20] sm:$0xff]
    %v3624 = vld [vmem:[#allocation17 + $0x28] sm:$0xff]
    %v3625 = vld [vmem:[#allocation17 + $0x30] sm:$0xff]
    %v3626 = vld [vmem:[#allocation17 + $0x38] sm:$0xff]
    %v3627 = vld [vmem:[#allocation17 + $0x40] sm:$0xff]
    %v3628 = vld [vmem:[#allocation17 + $0x48] sm:$0xff]
    %v3629 = vld [vmem:[#allocation17 + $0x50] sm:$0xff]
    %v3630 = vld [vmem:[#allocation17 + $0x58] sm:$0xff]
    %v3631 = vld [vmem:[#allocation17 + $0x60] sm:$0xff]
    %v3632 = vld [vmem:[#allocation17 + $0x68] sm:$0xff]
    %v3633 = vld [vmem:[#allocation17 + $0x70] sm:$0xff]
    %v3634 = vld [vmem:[#allocation17 + $0x78] sm:$0xff]
    %v3635 = vld [vmem:[#allocation17 + $0x80] sm:$0xff]
    %v3636 = vld [vmem:[#allocation17 + $0x88] sm:$0xff]
    %v3637 = vld [vmem:[#allocation17 + $0x90] sm:$0xff]
    %v3638 = vld [vmem:[#allocation17 + $0x98] sm:$0xff]
    %v3639 = vld [vmem:[#allocation17 + $0xa0] sm:$0xff]
    %v3640 = vld [vmem:[#allocation17 + $0xa8] sm:$0xff]
    %v3641 = vld [vmem:[#allocation17 + $0xb0] sm:$0xff]
    %v3642 = vld [vmem:[#allocation17 + $0xb8] sm:$0xff]
    %v3643 = vld [vmem:[#allocation17 + $0xc0] sm:$0xff]
    %v3644 = vld [vmem:[#allocation17 + $0xc8] sm:$0xff]
    %v3645 = vld [vmem:[#allocation17 + $0xd0] sm:$0xff]
    %v3646 = vld [vmem:[#allocation17 + $0xd8] sm:$0xff]
    %v3647 = vld [vmem:[#allocation17 + $0xe0] sm:$0xff]
    %v3648 = vld [vmem:[#allocation17 + $0xe8] sm:$0xff]
    %v3649 = vld [vmem:[#allocation17 + $0xf0] sm:$0xff]
    %v3650 = vld [vmem:[#allocation17 + $0xf8] sm:$0xff]
    %v3651 = vld [vmem:[#allocation17 + $0x100] sm:$0xff]
    %v3652 = vld [vmem:[#allocation17 + $0x108] sm:$0xff]
    %v3653 = vld [vmem:[#allocation17 + $0x110] sm:$0xff]
    %v3654 = vld [vmem:[#allocation17 + $0x118] sm:$0xff]
    %v3655 = vld [vmem:[#allocation17 + $0x120] sm:$0xff]
    %v3656 = vld [vmem:[#allocation17 + $0x128] sm:$0xff]
    %v3657 = vld [vmem:[#allocation17 + $0x130] sm:$0xff]
    %v3658 = vld [vmem:[#allocation17 + $0x138] sm:$0xff]
    %v3659 = vld [vmem:[#allocation17 + $0x140] sm:$0xff]
    %v3660 = vld [vmem:[#allocation17 + $0x148] sm:$0xff]
    %v3661 = vld [vmem:[#allocation17 + $0x150] sm:$0xff]
    %v3662 = vld [vmem:[#allocation17 + $0x158] sm:$0xff]
    %v3663 = vld [vmem:[#allocation17 + $0x160] sm:$0xff]
    %v3664 = vld [vmem:[#allocation17 + $0x168] sm:$0xff]
    %v3665 = vld [vmem:[#allocation17 + $0x170] sm:$0xff]
    %v3666 = vld [vmem:[#allocation17 + $0x178] sm:$0xff]
    %v3667 = vld [vmem:[#allocation17 + $0x180] sm:$0xff]
    %v3668 = vld [vmem:[#allocation17 + $0x188] sm:$0xff]
    %v3669 = vld [vmem:[#allocation17 + $0x190] sm:$0xff]
    %v3670 = vld [vmem:[#allocation17 + $0x198] sm:$0xff]
    %v3671 = vld [vmem:[#allocation17 + $0x1a0] sm:$0xff]
    %v3672 = vld [vmem:[#allocation17 + $0x1a8] sm:$0xff]
    %v3673 = vld [vmem:[#allocation17 + $0x1b0] sm:$0xff]
    %v3674 = vld [vmem:[#allocation17 + $0x1b8] sm:$0xff]
    %v3675 = vld [vmem:[#allocation17 + $0x1c0] sm:$0xff]
    %v3676 = vld [vmem:[#allocation17 + $0x1c8] sm:$0xff]
    %v3677 = vld [vmem:[#allocation17 + $0x1d0] sm:$0xff]
    %v3678 = vld [vmem:[#allocation17 + $0x1d8] sm:$0xff]
    %v3679 = vld [vmem:[#allocation17 + $0x1e0] sm:$0xff]
    %v3680 = vld [vmem:[#allocation17 + $0x1e8] sm:$0xff]
    %v3681 = vld [vmem:[#allocation17 + $0x1f0] sm:$0xff]
    %v3682 = vld [vmem:[#allocation17 + $0x1f8] sm:$0xff]
    %v3683 = vld [vmem:[%s20] sm:$0x3]
    %v3685 = vperm.slane %v3683, 0
    %v3686 = vperm.slane %v3683, 1
    %3689 = vmatpush.msra.mxu0 %v3649
    %3690 = vmatpush.msra.mxu0 %v3647
    %3691 = vmatpush.msra.mxu0 %v3645
    %3692 = vmatpush.msra.mxu0 %v3643
    %3693 = vmatpush.msra.mxu0 %v3641
    %3694 = vmatpush.msra.mxu0 %v3639
    %3695 = vmatpush.msra.mxu0 %v3637
    %3696 = vmatpush.msra.mxu0 %v3635
    %3697 = vmatpush.msra.mxu0 %v3633
    %3698 = vmatpush.msra.mxu0 %v3631
    %3699 = vmatpush.msra.mxu0 %v3629
    %3700 = vmatpush.msra.mxu0 %v3627
    %3701 = vmatpush.msra.mxu0 %v3625
    %3702 = vmatpush.msra.mxu0 %v3623
    %3703 = vmatpush.msra.mxu0 %v3621
    %3704 = vmatpush.msra.mxu0 %v3619
    %3705 = vmatmul.f32.gmra.mxu0 %v3617
    %v3706 = vpop.f32.mrf.mxu0
    %v3707 = vadd.f32 %v3685, %v3706
    %3708 = vdwg.mxu0
    %3709 = vmatpush.msra.mxu0 %v3681
    %3710 = vmatpush.msra.mxu0 %v3679
    %3711 = vmatpush.msra.mxu0 %v3677
    %3712 = vmatpush.msra.mxu0 %v3675
    %3713 = vmatpush.msra.mxu0 %v3673
    %3714 = vmatpush.msra.mxu0 %v3671
    %3715 = vmatpush.msra.mxu0 %v3669
    %3716 = vmatpush.msra.mxu0 %v3667
    %3717 = vmatpush.msra.mxu0 %v3665
    %3718 = vmatpush.msra.mxu0 %v3663
    %3719 = vmatpush.msra.mxu0 %v3661
    %3720 = vmatpush.msra.mxu0 %v3659
    %3721 = vmatpush.msra.mxu0 %v3657
    %3722 = vmatpush.msra.mxu0 %v3655
    %3723 = vmatpush.msra.mxu0 %v3653
    %3724 = vmatpush.msra.mxu0 %v3651
    %3725 = vmatmul.f32.gmra.mxu0 %v3618
    %v3726 = vpop.f32.mrf.mxu0
    %v3727 = vadd.f32 %v3707, %v3726
    %3728 = vdwg.mxu0
    %3729 = vmatpush.msra.mxu0 %v3650
    %3730 = vmatpush.msra.mxu0 %v3648
    %3731 = vmatpush.msra.mxu0 %v3646
    %3732 = vmatpush.msra.mxu0 %v3644
    %3733 = vmatpush.msra.mxu0 %v3642
    %3734 = vmatpush.msra.mxu0 %v3640
    %3735 = vmatpush.msra.mxu0 %v3638
    %3736 = vmatpush.msra.mxu0 %v3636
    %3737 = vmatpush.msra.mxu0 %v3634
    %3738 = vmatpush.msra.mxu0 %v3632
    %3739 = vmatpush.msra.mxu0 %v3630
    %3740 = vmatpush.msra.mxu0 %v3628
    %3741 = vmatpush.msra.mxu0 %v3626
    %3742 = vmatpush.msra.mxu0 %v3624
    %3743 = vmatpush.msra.mxu0 %v3622
    %3744 = vmatpush.msra.mxu0 %v3620
    %3745 = vmatmul.f32.gmra.mxu0 %v3617
    %v3746 = vpop.f32.mrf.mxu0
    %v3747 = vadd.f32 %v3686, %v3746
    %3748 = vdwg.mxu0
    %3749 = vmatpush.msra.mxu0 %v3682
    %3750 = vmatpush.msra.mxu0 %v3680
    %3751 = vmatpush.msra.mxu0 %v3678
    %3752 = vmatpush.msra.mxu0 %v3676
    %3753 = vmatpush.msra.mxu0 %v3674
    %3754 = vmatpush.msra.mxu0 %v3672
    %3755 = vmatpush.msra.mxu0 %v3670
    %3756 = vmatpush.msra.mxu0 %v3668
    %3757 = vmatpush.msra.mxu0 %v3666
    %3758 = vmatpush.msra.mxu0 %v3664
    %3759 = vmatpush.msra.mxu0 %v3662
    %3760 = vmatpush.msra.mxu0 %v3660
    %3761 = vmatpush.msra.mxu0 %v3658
    %3762 = vmatpush.msra.mxu0 %v3656
    %3763 = vmatpush.msra.mxu0 %v3654
    %3764 = vmatpush.msra.mxu0 %v3652
    %3765 = vmatmul.f32.gmra.mxu0 %v3618
    %v3766 = vpop.f32.mrf.mxu0
    %v3767 = vadd.f32 %v3747, %v3766
    %3768 = vdwg.mxu0
    %v3769 = vmax.f32 %v3727, 0.0
    %v3770 = vmax.f32 %v3767, 0.0
    %v3771 = vld [vmem:[%s21] sm:$0xff]
    %v3772 = vld [vmem:[%s21 + $0x8] sm:$0xff]
    %v3773 = vld [vmem:[%s21 + $0x10] sm:$0xff]
    %v3774 = vld [vmem:[%s21 + $0x18] sm:$0xff]
    %v3775 = vld [vmem:[%s21 + $0x20] sm:$0xff]
    %v3776 = vld [vmem:[%s21 + $0x28] sm:$0xff]
    %v3777 = vld [vmem:[%s21 + $0x30] sm:$0xff]
    %v3778 = vld [vmem:[%s21 + $0x38] sm:$0xff]
    %v3779 = vld [vmem:[%s21 + $0x40] sm:$0xff]
    %v3780 = vld [vmem:[%s21 + $0x48] sm:$0xff]
    %v3781 = vld [vmem:[%s21 + $0x50] sm:$0xff]
    %v3782 = vld [vmem:[%s21 + $0x58] sm:$0xff]
    %v3783 = vld [vmem:[%s21 + $0x60] sm:$0xff]
    %v3784 = vld [vmem:[%s21 + $0x68] sm:$0xff]
    %v3785 = vld [vmem:[%s21 + $0x70] sm:$0xff]
    %v3786 = vld [vmem:[%s21 + $0x78] sm:$0xff]
    %v3787 = vld [vmem:[%s21 + $0x80] sm:$0xff]
    %v3788 = vld [vmem:[%s21 + $0x88] sm:$0xff]
    %v3789 = vld [vmem:[%s21 + $0x90] sm:$0xff]
    %v3790 = vld [vmem:[%s21 + $0x98] sm:$0xff]
    %v3791 = vld [vmem:[%s21 + $0xa0] sm:$0xff]
    %v3792 = vld [vmem:[%s21 + $0xa8] sm:$0xff]
    %v3793 = vld [vmem:[%s21 + $0xb0] sm:$0xff]
    %v3794 = vld [vmem:[%s21 + $0xb8] sm:$0xff]
    %v3795 = vld [vmem:[%s21 + $0xc0] sm:$0xff]
    %v3796 = vld [vmem:[%s21 + $0xc8] sm:$0xff]
    %v3797 = vld [vmem:[%s21 + $0xd0] sm:$0xff]
    %v3798 = vld [vmem:[%s21 + $0xd8] sm:$0xff]
    %v3799 = vld [vmem:[%s21 + $0xe0] sm:$0xff]
    %v3800 = vld [vmem:[%s21 + $0xe8] sm:$0xff]
    %v3801 = vld [vmem:[%s21 + $0xf0] sm:$0xff]
    %v3802 = vld [vmem:[%s21 + $0xf8] sm:$0xff]
    %v3803 = vld [vmem:[#allocation2] sm:$0x1]
    %v3805 = vperm.slane %v3803, 0
    %3807 = vmatpush.msra.mxu0 %v3786
    %3808 = vmatpush.msra.mxu0 %v3785
    %3809 = vmatpush.msra.mxu0 %v3784
    %3810 = vmatpush.msra.mxu0 %v3783
    %3811 = vmatpush.msra.mxu0 %v3782
    %3812 = vmatpush.msra.mxu0 %v3781
    %3813 = vmatpush.msra.mxu0 %v3780
    %3814 = vmatpush.msra.mxu0 %v3779
    %3815 = vmatpush.msra.mxu0 %v3778
    %3816 = vmatpush.msra.mxu0 %v3777
    %3817 = vmatpush.msra.mxu0 %v3776
    %3818 = vmatpush.msra.mxu0 %v3775
    %3819 = vmatpush.msra.mxu0 %v3774
    %3820 = vmatpush.msra.mxu0 %v3773
    %3821 = vmatpush.msra.mxu0 %v3772
    %3822 = vmatpush.msra.mxu0 %v3771
    %3823 = vmatmul.f32.gmra.mxu0 %v3769
    %v3824 = vpop.f32.mrf.mxu0
    %v3825 = vadd.f32 %v3805, %v3824
    %3826 = vdwg.mxu0
    %3827 = vmatpush.msra.mxu0 %v3802
    %3828 = vmatpush.msra.mxu0 %v3801
    %3829 = vmatpush.msra.mxu0 %v3800
    %3830 = vmatpush.msra.mxu0 %v3799
    %3831 = vmatpush.msra.mxu0 %v3798
    %3832 = vmatpush.msra.mxu0 %v3797
    %3833 = vmatpush.msra.mxu0 %v3796
    %3834 = vmatpush.msra.mxu0 %v3795
    %3835 = vmatpush.msra.mxu0 %v3794
    %3836 = vmatpush.msra.mxu0 %v3793
    %3837 = vmatpush.msra.mxu0 %v3792
    %3838 = vmatpush.msra.mxu0 %v3791
    %3839 = vmatpush.msra.mxu0 %v3790
    %3840 = vmatpush.msra.mxu0 %v3789
    %3841 = vmatpush.msra.mxu0 %v3788
    %3842 = vmatpush.msra.mxu0 %v3787
    %3843 = vmatmul.f32.gmra.mxu0 %v3770
    %v3844 = vpop.f32.mrf.mxu0
    %v3845 = vadd.f32 %v3825, %v3844
    %3846 = vdwg.mxu0
    %v3847 = vxor.u32 %v3845, 2147483648
    %v3848 = vmul.f32 %v3847, 1.442695
    %v3849 = vpow.pop %v3848
    %v3850 = vadd.f32 %v3849, 1.0
    %v3851 = vrcp.pop %v3850
    %v3852 = vmul.f32 %v3850, %v3851
    %v3853 = vsub.f32 1.0, %v3852
    %v3854 = vmul.f32 %v3851, %v3853
    %v3855 = vadd.f32 %v3851, %v3854
    %vm3856 = vweird.f32 %v3850
    %vm3857 = vweird.f32 %v3851
    %vm3858 = vmor %vm3856, %vm3857
    %v3859 = vsel %vm3858, %v3851, %v3855
    %v3860 = vand.u32 2147483647, %v3850
    %vm3861 = vcmp.eq.f32.partialorder %v3860, 8.507059e+37
    %v3862 = vand.u32 %v3850, 2147483648
    %v3863 = vor.u32 1.1754944e-38, %v3862
    %v3864 = vsel %vm3861, %v3863, %v3859
    %v3865 = vmul.f32 1.0, %v3864
    %vm3866 = vcmask 1024
    %3867 = vst.msk [vmem:[%s23] sm:$0x3] %vm3866, %v3865
    // Predicated region
    $region134: #{tpu_custom_call.1} parent=1 // pred_check
      _
    $region135: #{tpu_custom_call.1} parent=1 // pred_check_branch
      %3869 = sbr.rel (0) target = $region137
    $region136: #{tpu_custom_call.1} parent=1 // pred_region
      _
    $region137: #{tpu_custom_call.1} parent=1 // pred_fallthru
      _
    // Predicated region
    $region138: #{tpu_custom_call.1} parent=1 // pred_check
      _
    $region139: #{tpu_custom_call.1} parent=1 // pred_check_branch
      %3871 = sbr.rel (0) target = $region141
    $region140: #{tpu_custom_call.1} parent=1 // pred_region
      _
    $region141: #{tpu_custom_call.1} parent=1 // pred_fallthru
      _
    %3872 = vsyncpa [#allocation4], 1
    %3873 = vsyncpa [#allocation6], 1
    %3874 = vsyncpa [#allocation9], 1
    %3875 = vsyncpa [#allocation12], 1
    %3876 = vsyncpa [#allocation15], 1
    %3877 = vsyncpa [#allocation18], 1

</llo_original>
